<compile_context>
chip_gen: v6e
topology: v6e:2x2x1
jax: 0.10.0
libtpu: 0.0.40
codegen_flags: <defaults>
</compile_context>

<pallas_src>
import functools

import jax
import jax.numpy as jnp
from jax.experimental import pallas as pl
from jax.experimental.pallas import tpu as pltpu


# ---------------------------------------------------------------------------
# Device / VMEM planning helpers
# ---------------------------------------------------------------------------
def _device_vmem_plan():
    """Returns (vmem_budget_bytes, vmem_limit_bytes, min_grid_steps)."""
    cap = None
    try:
        cap = getattr(pltpu.get_tpu_info(), "vmem_capacity_bytes", None)
    except Exception:
        cap = None
    if cap is not None and cap >= (100 << 20):
        # v5e / v6e: 128 MiB physical VMEM, one TensorCore -> big tiles,
        # no minimum grid-step requirement.
        return 64 << 20, 96 << 20, 1
    # v7x-class (64 MiB physical) or unknown: conservative budget; prefer >=4
    # grid steps so each of the two TensorCores keeps >=2 pipelined steps.
    return 24 << 20, 40 << 20, 4


def _roundup(x, m):
    return -(-x // m) * m


def _tile_bytes(rows, cols, dtype):
    """VMEM footprint of one (rows, cols) tile incl. sublane/lane padding."""
    dt = jnp.dtype(dtype)
    sub = max(8, 32 // dt.itemsize)           # 8 sublanes (f32) / 16 (bf16)
    return _roundup(max(rows, 1), sub) * _roundup(max(cols, 1), 128) * dt.itemsize


def _pick_nkd(cin, s, cout, wdtype, budget):
    """Split the flattened weight into n_kd kd-groups (1 == fully resident)."""
    n_total = s ** 3 * cout
    for n_kd in (1, s):
        if 2 * _tile_bytes(cin, n_total // n_kd, wdtype) <= budget // 3:
            return n_kd
    # TODO(synk): add finer N-tiling (over kh/kw/cout) for very large embed_dim.
    return s


_MAX_UNROLL = 256   # cap on the unrolled (dd, kd, kh, h) store loop per step


def _pick_dblk(BD, H, W, cin, s, cout, n_kd, in_dtype, out_dtype, budget, min_steps):
    """Largest d-block per grid step that fits the VMEM budget (double-buffered,
    lane-padded), keeps the x block 8-row aligned, bounds the unrolled store
    loop, and (if possible) keeps >= min_steps total grid steps."""
    kd_per = s // n_kd
    gN = kd_per * s * s * cout
    L = s * cout
    w_foot = 2 * _tile_bytes(cin, gN, in_dtype)
    b_foot = 2 * _tile_bytes(1, gN, jnp.float32)

    def fits(dblk):
        rows = dblk * H * W
        x_foot = 2 * _tile_bytes(rows, cin, in_dtype)
        o_foot = 2 * dblk * kd_per * H * s * _tile_bytes(W, L, out_dtype)
        acc_foot = _tile_bytes(rows, gN, jnp.float32)     # f32 accumulator value
        return w_foot + b_foot + x_foot + o_foot + acc_foot <= budget

    divs = [d for d in range(BD, 0, -1) if BD % d == 0]
    aligned = [d for d in divs
               if ((d * H * W) % 8 == 0 or d == BD)
               and d * kd_per * s * H <= _MAX_UNROLL]
    if not aligned:
        aligned = [d for d in divs if (d * H * W) % 8 == 0 or d == BD] or [BD]
    good = [d for d in aligned if fits(d)]
    if not good:
        good = [min(aligned)]
    preferred = [d for d in good if n_kd * (BD // d) >= min_steps]
    return max(preferred) if preferred else max(good)


# ---------------------------------------------------------------------------
# Pallas kernel: GEMM + bias (+ReLU) with the 3D pixel-shuffle fused into the
# output-block stores.  One grid step handles `dblk` depth slices and one
# kd-group of the (kd, kh, kw, co)-flattened weight.
# ---------------------------------------------------------------------------
def _upconv_kernel(x_ref, w_ref, b_ref, o_ref, *, relu, dblk, kd_per, H, W, s, cout):
    # x_ref: (dblk*H*W, Cin)          activation rows (voxels)
    # w_ref: (1, Cin, kd_per*s*s*cout) weight kd-group, (kd,kh,kw,co) minor order
    # b_ref: (1, 1, kd_per*s*s*cout)   bias (f32)
    # o_ref: (dblk, kd_per, H, s, W, s*cout)
    acc = jnp.dot(x_ref[...], w_ref[0], preferred_element_type=jnp.float32)
    acc = acc + b_ref[0]                     # bias in the f32 accumulator
    if relu:
        acc = jnp.maximum(acc, 0.0)          # ReLU in f32 (v5e VPU has no bf16 ALU)
    L = s * cout
    # Fused pixel-shuffle: only static lane/sublane slices + ref stores; the
    # lane (cout / kw*cout) axis never moves.
    for dd in range(dblk):
        for kdl in range(kd_per):
            for kh in range(s):
                col = (kdl * s + kh) * L
                for hh in range(H):
                    row = (dd * H + hh) * W
                    o_ref[dd, kdl, hh, kh, :, :] = (
                        acc[row:row + W, col:col + L].astype(o_ref.dtype))


def _upconv3d(h, lyr, relu, out_dtype, budget, vmem_limit, min_steps):
    """Channels-last ConvTranspose3d with kernel_size == stride, shuffle fused.

    h: (B, D, H, W, Cin)  ->  (B, D*s, H*s, W*s, Cout)
    """
    B, D, H, W, cin = h.shape
    s, cout, n_kd = lyr["s"], lyr["cout"], lyr["n_kd"]
    BD = B * D
    kd_per = s // n_kd
    groupN = kd_per * s * s * cout
    L = s * cout

    dblk = _pick_dblk(BD, H, W, cin, s, cout, n_kd, h.dtype, out_dtype,
                      budget, min_steps)
    rows = dblk * H * W
    n_steps = BD // dblk

    x2 = h.reshape(BD * H * W, cin)          # free reshape (leading dims only)
    M = BD * H * W
    n_total = s ** 3 * cout
    cost = pl.CostEstimate(
        flops=2 * M * cin * n_total,
        transcendentals=0,
        bytes_accessed=(n_kd * M * cin * x2.dtype.itemsize
                        + cin * n_total * lyr["w_grp"].dtype.itemsize
                        + n_total * 4
                        + M * n_total * jnp.dtype(out_dtype).itemsize),
    )

    kernel = functools.partial(_upconv_kernel, relu=relu, dblk=dblk,
                               kd_per=kd_per, H=H, W=W, s=s, cout=cout)
    out6 = pl.pallas_call(
        kernel,
        out_shape=jax.ShapeDtypeStruct((BD, s, H, s, W, L), out_dtype),
        grid_spec=pltpu.PrefetchScalarGridSpec(
            num_scalar_prefetch=0,
            grid=(n_kd, n_steps),            # weight group outer -> stays resident
            in_specs=[
                pl.BlockSpec((rows, cin), lambda g, i: (i, 0)),
                pl.BlockSpec((1, cin, groupN), lambda g, i: (g, 0, 0)),
                pl.BlockSpec((1, 1, groupN), lambda g, i: (g, 0, 0)),
            ],
            out_specs=pl.BlockSpec((dblk, kd_per, H, s, W, L),
                                   lambda g, i: (i, g, 0, 0, 0, 0)),
        ),
        compiler_params=pltpu.CompilerParams(
            dimension_semantics=("parallel", "parallel"),
            vmem_limit_bytes=vmem_limit,
        ),
        cost_estimate=cost,
    )(x2, lyr["w_grp"], lyr["bias_grp"])
    # (BD, kd, H, kh, W, kw*cout) -> (B, D*s, H*s, W*s, cout): free reshape,
    # only adjacent axes are merged/split, the lane (cout) axis never moves.
    return out6.reshape(B, D * s, H * s, W * s, cout)


# ---------------------------------------------------------------------------
# Module
# ---------------------------------------------------------------------------
class Transpose3dPallas:
    """JAX/Pallas equivalent of the PyTorch Transpose3d module."""

    def __init__(self, embed_dim, patch_size, in_channel, img_size, key,
                 compute_dtype=jnp.bfloat16):
        self.embed_dim = embed_dim
        self.patch_size = patch_size
        self.compute_dtype = compute_dtype
        self.num_patches_ls = [sz // patch_size for sz in img_size]
        self.vmem_budget, self.vmem_limit, self.min_steps = _device_vmem_plan()
        self.params = []
        for i, ch in enumerate(in_channel):
            if img_size[i] == 32:
                cfg = [(embed_dim, embed_dim, 4), (embed_dim, ch, 2), (ch, ch, 2)]
            elif img_size[i] == 16:
                cfg = [(embed_dim, embed_dim, 2), (embed_dim, ch, 2), (ch, ch, 2)]
            else:
                raise ValueError("img_size must be 32 or 16 (as in the reference)")
            layers = []
            for (cin, cout, s) in cfg:
                key, wk, bk = jax.random.split(key, 3)
                bound = 1.0 / float(jnp.sqrt(cin * s ** 3))
                w = jax.random.uniform(wk, (cin, cout, s, s, s), jnp.float32,
                                       -bound, bound)
                b = jax.random.uniform(bk, (cout,), jnp.float32, -bound, bound)
                # (Cin,Cout,kd,kh,kw) -> (Cin,kd,kh,kw,Cout) -> (Cin, s^3*Cout)
                w_flat = jnp.transpose(w, (0, 2, 3, 4, 1)).reshape(
                    cin, s ** 3 * cout).astype(compute_dtype)
                bias_flat = jnp.tile(b, s ** 3).astype(jnp.float32)
                n_kd = _pick_nkd(cin, s, cout, compute_dtype, self.vmem_budget)
                groupN = (s ** 3 // n_kd) * cout
                w_grp = jnp.transpose(w_flat.reshape(cin, n_kd, groupN), (1, 0, 2))
                bias_grp = bias_flat.reshape(n_kd, 1, groupN)
                layers.append(dict(w_flat=w_flat, bias_flat=bias_flat,
                                   w_grp=w_grp, bias_grp=bias_grp,
                                   s=s, cin=cin, cout=cout, n_kd=n_kd))
            self.params.append(layers)

    def __call__(self, num, x):
        # x: (B, num_patches^3, embed_dim) -- matches the PyTorch forward.
        B = x.shape[0]
        P = self.num_patches_ls[num]
        h = x.reshape(B, P, P, P, self.embed_dim).astype(self.compute_dtype)
        layers = self.params[num]
        n = len(layers)
        for idx, lyr in enumerate(layers):
            relu = idx < n - 1               # ReLU between convs, none after last
            h = _upconv3d(h, lyr, relu, self.compute_dtype,
                          self.vmem_budget, self.vmem_limit, self.min_steps)
        # Single NDHWC -> NCDHW pass, fused with the bf16 -> f32 upcast.
        # TODO(synk): fuse this relayout into the last layer's stores as well.
        return jnp.transpose(h, (0, 4, 1, 2, 3)).astype(jnp.float32)


# ---------------------------------------------------------------------------
# Pure-JAX (XLA) reference with identical dtype policy, for correctness check.
# ---------------------------------------------------------------------------
def _reference(model, num, x):
    B = x.shape[0]
    P = model.num_patches_ls[num]
    h = x.reshape(B, P, P, P, model.embed_dim).astype(model.compute_dtype)
    layers = model.params[num]
    n = len(layers)
    for idx, lyr in enumerate(layers):
        Bn, D, H, Wd, cin = h.shape
        s, cout = lyr["s"], lyr["cout"]
        acc = jnp.dot(h.reshape(-1, cin), lyr["w_flat"],
                      preferred_element_type=jnp.float32) + lyr["bias_flat"]
        if idx < n - 1:
            acc = jnp.maximum(acc, 0.0)
        y = acc.astype(model.compute_dtype)
        y = y.reshape(Bn, D, H, Wd, s, s, s, cout)
        h = jnp.transpose(y, (0, 1, 4, 2, 5, 3, 6, 7)).reshape(
            Bn, D * s, H * s, Wd * s, cout)
    return jnp.transpose(h, (0, 4, 1, 2, 3)).astype(jnp.float32)


if __name__ == "__main__":
    key = jax.random.PRNGKey(0)
    # Small synthetic configuration (channels shrunk for speed).
    embed_dim = 32
    patch_size = 8
    in_channel = [16, 16, 8, 8]
    img_size = [32, 32, 16, 16]
    B = 2

    key, pkey = jax.random.split(key)
    model = Transpose3dPallas(embed_dim, patch_size, in_channel, img_size, pkey)

    ok = True
    for num in (0, 2):  # exercise both the img_size==32 and img_size==16 branches
        P = img_size[num] // patch_size
        key, xkey = jax.random.split(key)
        x = jax.random.normal(xkey, (B, P ** 3, embed_dim), jnp.float32)

        out = jax.block_until_ready(model(num, x))

        total_up = 1
        for lyr in model.params[num]:
            total_up *= lyr["s"]
        sp = P * total_up
        expect_shape = (B, in_channel[num], sp, sp, sp)
        if out.shape != expect_shape or out.dtype != jnp.float32:
            ok = False
            print("shape/dtype mismatch:", out.shape, out.dtype, "vs", expect_shape)

        ref = jax.block_until_ready(_reference(model, num, x))
        if not jnp.allclose(out, ref, atol=1e-2, rtol=1e-2):
            ok = False
            print("numerical mismatch for num =", num,
                  "max abs err =", float(jnp.max(jnp.abs(out - ref))))

    if ok:
        print("KERNEL_OK")
</pallas_src>

<mosaic_0001>
module attributes {stable_mosaic.version = 11 : i64} {
  func.func @_upconv_kernel(%arg0: i32, %arg1: i32, %arg2: memref<32x32xbf16, #tpu.memory_space<vmem>>, %arg3: memref<1x32x2048xbf16, #tpu.memory_space<vmem>>, %arg4: memref<1x1x2048xf32, #tpu.memory_space<vmem>>, %arg5: memref<2x4x4x4x4x128xbf16, #tpu.memory_space<vmem>>) attributes {dimension_semantics = [#tpu.dimension_semantics<parallel>, #tpu.dimension_semantics<parallel>], iteration_bounds = array<i64: 1, 4>, scalar_prefetch = 0 : i64, scratch_operands = 0 : i64, tpu.core_type = #tpu.core_type<tc>, window_params = [{transform_indices = @transform_0, window_bounds = array<i64: 32, 32>}, {transform_indices = @transform_1, window_bounds = array<i64: 1, 32, 2048>}, {transform_indices = @transform_2, window_bounds = array<i64: 1, 1, 2048>}, {transform_indices = @transform_3, window_bounds = array<i64: 2, 4, 4, 4, 4, 128>}]} {
    %c0 = arith.constant 0 : index
    %c0_0 = arith.constant 0 : index
    %0 = vector.load %arg2[%c0, %c0_0] : memref<32x32xbf16, #tpu.memory_space<vmem>>, vector<32x32xbf16>
    %c0_1 = arith.constant 0 : index
    %c0_2 = arith.constant 0 : index
    %c0_3 = arith.constant 0 : index
    %1 = vector.load %arg3[%c0_1, %c0_2, %c0_3] : memref<1x32x2048xbf16, #tpu.memory_space<vmem>>, vector<1x32x2048xbf16>
    %2 = vector.shape_cast %1 : vector<1x32x2048xbf16> to vector<32x2048xbf16>
    %cst = arith.constant dense<0.000000e+00> : vector<32x2048xf32>
    %3 = tpu.matmul %0, %2, %cst {dimension_numbers = #tpu.dot_dimension_numbers<[1], [0], [0], [1], [0, 0, 1, 1], [], []>} : vector<32x32xbf16>, vector<32x2048xbf16>, vector<32x2048xf32> -> vector<32x2048xf32>
    %c0_4 = arith.constant 0 : index
    %c0_5 = arith.constant 0 : index
    %c0_6 = arith.constant 0 : index
    %4 = vector.load %arg4[%c0_4, %c0_5, %c0_6] : memref<1x1x2048xf32, #tpu.memory_space<vmem>>, vector<1x1x2048xf32>
    %5 = vector.shape_cast %4 : vector<1x1x2048xf32> to vector<1x2048xf32>
    %6 = vector.broadcast %5 : vector<1x2048xf32> to vector<32x2048xf32>
    %7 = arith.addf %3, %6 : vector<32x2048xf32>
    %cst_7 = arith.constant 0.000000e+00 : f32
    %8 = vector.broadcast %cst_7 : f32 to vector<32x2048xf32>
    %9 = arith.maximumf %7, %8 : vector<32x2048xf32>
    %10 = vector.extract_strided_slice %9 {offsets = [0, 0], sizes = [4, 128], strides = [1, 1]} : vector<32x2048xf32> to vector<4x128xf32>
    %11 = arith.truncf %10 : vector<4x128xf32> to vector<4x128xbf16>
    %c0_8 = arith.constant 0 : index
    %c0_9 = arith.constant 0 : index
    %c0_10 = arith.constant 0 : index
    %c0_11 = arith.constant 0 : index
    %c0_12 = arith.constant 0 : index
    %c0_13 = arith.constant 0 : index
    %12 = vector.load %arg5[%c0_8, %c0_9, %c0_10, %c0_11, %c0_12, %c0_13] : memref<2x4x4x4x4x128xbf16, #tpu.memory_space<vmem>>, vector<1x1x1x1x4x128xbf16>
    %13 = vector.shape_cast %12 : vector<1x1x1x1x4x128xbf16> to vector<4x128xbf16>
    %14 = vector.shape_cast %11 : vector<4x128xbf16> to vector<1x1x1x1x4x128xbf16>
    tpu.vector_store %arg5[%c0_8, %c0_9, %c0_10, %c0_11, %c0_12, %c0_13], %14 {strides = array<i32>} : memref<2x4x4x4x4x128xbf16, #tpu.memory_space<vmem>>, vector<1x1x1x1x4x128xbf16>,
    %15 = vector.extract_strided_slice %9 {offsets = [4, 0], sizes = [4, 128], strides = [1, 1]} : vector<32x2048xf32> to vector<4x128xf32>
    %16 = arith.truncf %15 : vector<4x128xf32> to vector<4x128xbf16>
    %c0_14 = arith.constant 0 : index
    %c0_15 = arith.constant 0 : index
    %c1 = arith.constant 1 : index
    %c0_16 = arith.constant 0 : index
    %c0_17 = arith.constant 0 : index
    %c0_18 = arith.constant 0 : index
    %17 = vector.load %arg5[%c0_14, %c0_15, %c1, %c0_16, %c0_17, %c0_18] : memref<2x4x4x4x4x128xbf16, #tpu.memory_space<vmem>>, vector<1x1x1x1x4x128xbf16>
    %18 = vector.shape_cast %17 : vector<1x1x1x1x4x128xbf16> to vector<4x128xbf16>
    %19 = vector.shape_cast %16 : vector<4x128xbf16> to vector<1x1x1x1x4x128xbf16>
    tpu.vector_store %arg5[%c0_14, %c0_15, %c1, %c0_16, %c0_17, %c0_18], %19 {strides = array<i32>} : memref<2x4x4x4x4x128xbf16, #tpu.memory_space<vmem>>, vector<1x1x1x1x4x128xbf16>,
    %20 = vector.extract_strided_slice %9 {offsets = [8, 0], sizes = [4, 128], strides = [1, 1]} : vector<32x2048xf32> to vector<4x128xf32>
    %21 = arith.truncf %20 : vector<4x128xf32> to vector<4x128xbf16>
    %c0_19 = arith.constant 0 : index
    %c0_20 = arith.constant 0 : index
    %c2 = arith.constant 2 : index
    %c0_21 = arith.constant 0 : index
    %c0_22 = arith.constant 0 : index
    %c0_23 = arith.constant 0 : index
    %22 = vector.load %arg5[%c0_19, %c0_20, %c2, %c0_21, %c0_22, %c0_23] : memref<2x4x4x4x4x128xbf16, #tpu.memory_space<vmem>>, vector<1x1x1x1x4x128xbf16>
    %23 = vector.shape_cast %22 : vector<1x1x1x1x4x128xbf16> to vector<4x128xbf16>
    %24 = vector.shape_cast %21 : vector<4x128xbf16> to vector<1x1x1x1x4x128xbf16>
    tpu.vector_store %arg5[%c0_19, %c0_20, %c2, %c0_21, %c0_22, %c0_23], %24 {strides = array<i32>} : memref<2x4x4x4x4x128xbf16, #tpu.memory_space<vmem>>, vector<1x1x1x1x4x128xbf16>,
    %25 = vector.extract_strided_slice %9 {offsets = [12, 0], sizes = [4, 128], strides = [1, 1]} : vector<32x2048xf32> to vector<4x128xf32>
    %26 = arith.truncf %25 : vector<4x128xf32> to vector<4x128xbf16>
    %c0_24 = arith.constant 0 : index
    %c0_25 = arith.constant 0 : index
    %c3 = arith.constant 3 : index
    %c0_26 = arith.constant 0 : index
    %c0_27 = arith.constant 0 : index
    %c0_28 = arith.constant 0 : index
    %27 = vector.load %arg5[%c0_24, %c0_25, %c3, %c0_26, %c0_27, %c0_28] : memref<2x4x4x4x4x128xbf16, #tpu.memory_space<vmem>>, vector<1x1x1x1x4x128xbf16>
    %28 = vector.shape_cast %27 : vector<1x1x1x1x4x128xbf16> to vector<4x128xbf16>
    %29 = vector.shape_cast %26 : vector<4x128xbf16> to vector<1x1x1x1x4x128xbf16>
    tpu.vector_store %arg5[%c0_24, %c0_25, %c3, %c0_26, %c0_27, %c0_28], %29 {strides = array<i32>} : memref<2x4x4x4x4x128xbf16, #tpu.memory_space<vmem>>, vector<1x1x1x1x4x128xbf16>,
    %30 = vector.extract_strided_slice %9 {offsets = [0, 128], sizes = [4, 128], strides = [1, 1]} : vector<32x2048xf32> to vector<4x128xf32>
    %31 = arith.truncf %30 : vector<4x128xf32> to vector<4x128xbf16>
    %c0_29 = arith.constant 0 : index
    %c0_30 = arith.constant 0 : index
    %c0_31 = arith.constant 0 : index
    %c1_32 = arith.constant 1 : index
    %c0_33 = arith.constant 0 : index
    %c0_34 = arith.constant 0 : index
    %32 = vector.load %arg5[%c0_29, %c0_30, %c0_31, %c1_32, %c0_33, %c0_34] : memref<2x4x4x4x4x128xbf16, #tpu.memory_space<vmem>>, vector<1x1x1x1x4x128xbf16>
    %33 = vector.shape_cast %32 : vector<1x1x1x1x4x128xbf16> to vector<4x128xbf16>
    %34 = vector.shape_cast %31 : vector<4x128xbf16> to vector<1x1x1x1x4x128xbf16>
    tpu.vector_store %arg5[%c0_29, %c0_30, %c0_31, %c1_32, %c0_33, %c0_34], %34 {strides = array<i32>} : memref<2x4x4x4x4x128xbf16, #tpu.memory_space<vmem>>, vector<1x1x1x1x4x128xbf16>,
    %35 = vector.extract_strided_slice %9 {offsets = [4, 128], sizes = [4, 128], strides = [1, 1]} : vector<32x2048xf32> to vector<4x128xf32>
    %36 = arith.truncf %35 : vector<4x128xf32> to vector<4x128xbf16>
    %c0_35 = arith.constant 0 : index
    %c0_36 = arith.constant 0 : index
    %c1_37 = arith.constant 1 : index
    %c1_38 = arith.constant 1 : index
    %c0_39 = arith.constant 0 : index
    %c0_40 = arith.constant 0 : index
    %37 = vector.load %arg5[%c0_35, %c0_36, %c1_37, %c1_38, %c0_39, %c0_40] : memref<2x4x4x4x4x128xbf16, #tpu.memory_space<vmem>>, vector<1x1x1x1x4x128xbf16>
    %38 = vector.shape_cast %37 : vector<1x1x1x1x4x128xbf16> to vector<4x128xbf16>
    %39 = vector.shape_cast %36 : vector<4x128xbf16> to vector<1x1x1x1x4x128xbf16>
    tpu.vector_store %arg5[%c0_35, %c0_36, %c1_37, %c1_38, %c0_39, %c0_40], %39 {strides = array<i32>} : memref<2x4x4x4x4x128xbf16, #tpu.memory_space<vmem>>, vector<1x1x1x1x4x128xbf16>,
    %40 = vector.extract_strided_slice %9 {offsets = [8, 128], sizes = [4, 128], strides = [1, 1]} : vector<32x2048xf32> to vector<4x128xf32>
    %41 = arith.truncf %40 : vector<4x128xf32> to vector<4x128xbf16>
    %c0_41 = arith.constant 0 : index
    %c0_42 = arith.constant 0 : index
    %c2_43 = arith.constant 2 : index
    %c1_44 = arith.constant 1 : index
    %c0_45 = arith.constant 0 : index
    %c0_46 = arith.constant 0 : index
    %42 = vector.load %arg5[%c0_41, %c0_42, %c2_43, %c1_44, %c0_45, %c0_46] : memref<2x4x4x4x4x128xbf16, #tpu.memory_space<vmem>>, vector<1x1x1x1x4x128xbf16>
    %43 = vector.shape_cast %42 : vector<1x1x1x1x4x128xbf16> to vector<4x128xbf16>
    %44 = vector.shape_cast %41 : vector<4x128xbf16> to vector<1x1x1x1x4x128xbf16>
    tpu.vector_store %arg5[%c0_41, %c0_42, %c2_43, %c1_44, %c0_45, %c0_46], %44 {strides = array<i32>} : memref<2x4x4x4x4x128xbf16, #tpu.memory_space<vmem>>, vector<1x1x1x1x4x128xbf16>,
    %45 = vector.extract_strided_slice %9 {offsets = [12, 128], sizes = [4, 128], strides = [1, 1]} : vector<32x2048xf32> to vector<4x128xf32>
    %46 = arith.truncf %45 : vector<4x128xf32> to vector<4x128xbf16>
    %c0_47 = arith.constant 0 : index
    %c0_48 = arith.constant 0 : index
    %c3_49 = arith.constant 3 : index
    %c1_50 = arith.constant 1 : index
    %c0_51 = arith.constant 0 : index
    %c0_52 = arith.constant 0 : index
    %47 = vector.load %arg5[%c0_47, %c0_48, %c3_49, %c1_50, %c0_51, %c0_52] : memref<2x4x4x4x4x128xbf16, #tpu.memory_space<vmem>>, vector<1x1x1x1x4x128xbf16>
    %48 = vector.shape_cast %47 : vector<1x1x1x1x4x128xbf16> to vector<4x128xbf16>
    %49 = vector.shape_cast %46 : vector<4x128xbf16> to vector<1x1x1x1x4x128xbf16>
    tpu.vector_store %arg5[%c0_47, %c0_48, %c3_49, %c1_50, %c0_51, %c0_52], %49 {strides = array<i32>} : memref<2x4x4x4x4x128xbf16, #tpu.memory_space<vmem>>, vector<1x1x1x1x4x128xbf16>,
    %50 = vector.extract_strided_slice %9 {offsets = [0, 256], sizes = [4, 128], strides = [1, 1]} : vector<32x2048xf32> to vector<4x128xf32>
    %51 = arith.truncf %50 : vector<4x128xf32> to vector<4x128xbf16>
    %c0_53 = arith.constant 0 : index
    %c0_54 = arith.constant 0 : index
    %c0_55 = arith.constant 0 : index
    %c2_56 = arith.constant 2 : index
    %c0_57 = arith.constant 0 : index
    %c0_58 = arith.constant 0 : index
    %52 = vector.load %arg5[%c0_53, %c0_54, %c0_55, %c2_56, %c0_57, %c0_58] : memref<2x4x4x4x4x128xbf16, #tpu.memory_space<vmem>>, vector<1x1x1x1x4x128xbf16>
    %53 = vector.shape_cast %52 : vector<1x1x1x1x4x128xbf16> to vector<4x128xbf16>
    %54 = vector.shape_cast %51 : vector<4x128xbf16> to vector<1x1x1x1x4x128xbf16>
    tpu.vector_store %arg5[%c0_53, %c0_54, %c0_55, %c2_56, %c0_57, %c0_58], %54 {strides = array<i32>} : memref<2x4x4x4x4x128xbf16, #tpu.memory_space<vmem>>, vector<1x1x1x1x4x128xbf16>,
    %55 = vector.extract_strided_slice %9 {offsets = [4, 256], sizes = [4, 128], strides = [1, 1]} : vector<32x2048xf32> to vector<4x128xf32>
    %56 = arith.truncf %55 : vector<4x128xf32> to vector<4x128xbf16>
    %c0_59 = arith.constant 0 : index
    %c0_60 = arith.constant 0 : index
    %c1_61 = arith.constant 1 : index
    %c2_62 = arith.constant 2 : index
    %c0_63 = arith.constant 0 : index
    %c0_64 = arith.constant 0 : index
    %57 = vector.load %arg5[%c0_59, %c0_60, %c1_61, %c2_62, %c0_63, %c0_64] : memref<2x4x4x4x4x128xbf16, #tpu.memory_space<vmem>>, vector<1x1x1x1x4x128xbf16>
    %58 = vector.shape_cast %57 : vector<1x1x1x1x4x128xbf16> to vector<4x128xbf16>
    %59 = vector.shape_cast %56 : vector<4x128xbf16> to vector<1x1x1x1x4x128xbf16>
    tpu.vector_store %arg5[%c0_59, %c0_60, %c1_61, %c2_62, %c0_63, %c0_64], %59 {strides = array<i32>} : memref<2x4x4x4x4x128xbf16, #tpu.memory_space<vmem>>, vector<1x1x1x1x4x128xbf16>,
    %60 = vector.extract_strided_slice %9 {offsets = [8, 256], sizes = [4, 128], strides = [1, 1]} : vector<32x2048xf32> to vector<4x128xf32>
    %61 = arith.truncf %60 : vector<4x128xf32> to vector<4x128xbf16>
    %c0_65 = arith.constant 0 : index
    %c0_66 = arith.constant 0 : index
    %c2_67 = arith.constant 2 : index
    %c2_68 = arith.constant 2 : index
    %c0_69 = arith.constant 0 : index
    %c0_70 = arith.constant 0 : index
    %62 = vector.load %arg5[%c0_65, %c0_66, %c2_67, %c2_68, %c0_69, %c0_70] : memref<2x4x4x4x4x128xbf16, #tpu.memory_space<vmem>>, vector<1x1x1x1x4x128xbf16>
    %63 = vector.shape_cast %62 : vector<1x1x1x1x4x128xbf16> to vector<4x128xbf16>
    %64 = vector.shape_cast %61 : vector<4x128xbf16> to vector<1x1x1x1x4x128xbf16>
    tpu.vector_store %arg5[%c0_65, %c0_66, %c2_67, %c2_68, %c0_69, %c0_70], %64 {strides = array<i32>} : memref<2x4x4x4x4x128xbf16, #tpu.memory_space<vmem>>, vector<1x1x1x1x4x128xbf16>,
    %65 = vector.extract_strided_slice %9 {offsets = [12, 256], sizes = [4, 128], strides = [1, 1]} : vector<32x2048xf32> to vector<4x128xf32>
    %66 = arith.truncf %65 : vector<4x128xf32> to vector<4x128xbf16>
    %c0_71 = arith.constant 0 : index
    %c0_72 = arith.constant 0 : index
    %c3_73 = arith.constant 3 : index
    %c2_74 = arith.constant 2 : index
    %c0_75 = arith.constant 0 : index
    %c0_76 = arith.constant 0 : index
    %67 = vector.load %arg5[%c0_71, %c0_72, %c3_73, %c2_74, %c0_75, %c0_76] : memref<2x4x4x4x4x128xbf16, #tpu.memory_space<vmem>>, vector<1x1x1x1x4x128xbf16>
    %68 = vector.shape_cast %67 : vector<1x1x1x1x4x128xbf16> to vector<4x128xbf16>
    %69 = vector.shape_cast %66 : vector<4x128xbf16> to vector<1x1x1x1x4x128xbf16>
    tpu.vector_store %arg5[%c0_71, %c0_72, %c3_73, %c2_74, %c0_75, %c0_76], %69 {strides = array<i32>} : memref<2x4x4x4x4x128xbf16, #tpu.memory_space<vmem>>, vector<1x1x1x1x4x128xbf16>,
    %70 = vector.extract_strided_slice %9 {offsets = [0, 384], sizes = [4, 128], strides = [1, 1]} : vector<32x2048xf32> to vector<4x128xf32>
    %71 = arith.truncf %70 : vector<4x128xf32> to vector<4x128xbf16>
    %c0_77 = arith.constant 0 : index
    %c0_78 = arith.constant 0 : index
    %c0_79 = arith.constant 0 : index
    %c3_80 = arith.constant 3 : index
    %c0_81 = arith.constant 0 : index
    %c0_82 = arith.constant 0 : index
    %72 = vector.load %arg5[%c0_77, %c0_78, %c0_79, %c3_80, %c0_81, %c0_82] : memref<2x4x4x4x4x128xbf16, #tpu.memory_space<vmem>>, vector<1x1x1x1x4x128xbf16>
    %73 = vector.shape_cast %72 : vector<1x1x1x1x4x128xbf16> to vector<4x128xbf16>
    %74 = vector.shape_cast %71 : vector<4x128xbf16> to vector<1x1x1x1x4x128xbf16>
    tpu.vector_store %arg5[%c0_77, %c0_78, %c0_79, %c3_80, %c0_81, %c0_82], %74 {strides = array<i32>} : memref<2x4x4x4x4x128xbf16, #tpu.memory_space<vmem>>, vector<1x1x1x1x4x128xbf16>,
    %75 = vector.extract_strided_slice %9 {offsets = [4, 384], sizes = [4, 128], strides = [1, 1]} : vector<32x2048xf32> to vector<4x128xf32>
    %76 = arith.truncf %75 : vector<4x128xf32> to vector<4x128xbf16>
    %c0_83 = arith.constant 0 : index
    %c0_84 = arith.constant 0 : index
    %c1_85 = arith.constant 1 : index
    %c3_86 = arith.constant 3 : index
    %c0_87 = arith.constant 0 : index
    %c0_88 = arith.constant 0 : index
    %77 = vector.load %arg5[%c0_83, %c0_84, %c1_85, %c3_86, %c0_87, %c0_88] : memref<2x4x4x4x4x128xbf16, #tpu.memory_space<vmem>>, vector<1x1x1x1x4x128xbf16>
    %78 = vector.shape_cast %77 : vector<1x1x1x1x4x128xbf16> to vector<4x128xbf16>
    %79 = vector.shape_cast %76 : vector<4x128xbf16> to vector<1x1x1x1x4x128xbf16>
    tpu.vector_store %arg5[%c0_83, %c0_84, %c1_85, %c3_86, %c0_87, %c0_88], %79 {strides = array<i32>} : memref<2x4x4x4x4x128xbf16, #tpu.memory_space<vmem>>, vector<1x1x1x1x4x128xbf16>,
    %80 = vector.extract_strided_slice %9 {offsets = [8, 384], sizes = [4, 128], strides = [1, 1]} : vector<32x2048xf32> to vector<4x128xf32>
    %81 = arith.truncf %80 : vector<4x128xf32> to vector<4x128xbf16>
    %c0_89 = arith.constant 0 : index
    %c0_90 = arith.constant 0 : index
    %c2_91 = arith.constant 2 : index
    %c3_92 = arith.constant 3 : index
    %c0_93 = arith.constant 0 : index
    %c0_94 = arith.constant 0 : index
    %82 = vector.load %arg5[%c0_89, %c0_90, %c2_91, %c3_92, %c0_93, %c0_94] : memref<2x4x4x4x4x128xbf16, #tpu.memory_space<vmem>>, vector<1x1x1x1x4x128xbf16>
    %83 = vector.shape_cast %82 : vector<1x1x1x1x4x128xbf16> to vector<4x128xbf16>
    %84 = vector.shape_cast %81 : vector<4x128xbf16> to vector<1x1x1x1x4x128xbf16>
    tpu.vector_store %arg5[%c0_89, %c0_90, %c2_91, %c3_92, %c0_93, %c0_94], %84 {strides = array<i32>} : memref<2x4x4x4x4x128xbf16, #tpu.memory_space<vmem>>, vector<1x1x1x1x4x128xbf16>,
    %85 = vector.extract_strided_slice %9 {offsets = [12, 384], sizes = [4, 128], strides = [1, 1]} : vector<32x2048xf32> to vector<4x128xf32>
    %86 = arith.truncf %85 : vector<4x128xf32> to vector<4x128xbf16>
    %c0_95 = arith.constant 0 : index
    %c0_96 = arith.constant 0 : index
    %c3_97 = arith.constant 3 : index
    %c3_98 = arith.constant 3 : index
    %c0_99 = arith.constant 0 : index
    %c0_100 = arith.constant 0 : index
    %87 = vector.load %arg5[%c0_95, %c0_96, %c3_97, %c3_98, %c0_99, %c0_100] : memref<2x4x4x4x4x128xbf16, #tpu.memory_space<vmem>>, vector<1x1x1x1x4x128xbf16>
    %88 = vector.shape_cast %87 : vector<1x1x1x1x4x128xbf16> to vector<4x128xbf16>
    %89 = vector.shape_cast %86 : vector<4x128xbf16> to vector<1x1x1x1x4x128xbf16>
    tpu.vector_store %arg5[%c0_95, %c0_96, %c3_97, %c3_98, %c0_99, %c0_100], %89 {strides = array<i32>} : memref<2x4x4x4x4x128xbf16, #tpu.memory_space<vmem>>, vector<1x1x1x1x4x128xbf16>,
    %90 = vector.extract_strided_slice %9 {offsets = [0, 512], sizes = [4, 128], strides = [1, 1]} : vector<32x2048xf32> to vector<4x128xf32>
    %91 = arith.truncf %90 : vector<4x128xf32> to vector<4x128xbf16>
    %c0_101 = arith.constant 0 : index
    %c1_102 = arith.constant 1 : index
    %c0_103 = arith.constant 0 : index
    %c0_104 = arith.constant 0 : index
    %c0_105 = arith.constant 0 : index
    %c0_106 = arith.constant 0 : index
    %92 = vector.load %arg5[%c0_101, %c1_102, %c0_103, %c0_104, %c0_105, %c0_106] : memref<2x4x4x4x4x128xbf16, #tpu.memory_space<vmem>>, vector<1x1x1x1x4x128xbf16>
    %93 = vector.shape_cast %92 : vector<1x1x1x1x4x128xbf16> to vector<4x128xbf16>
    %94 = vector.shape_cast %91 : vector<4x128xbf16> to vector<1x1x1x1x4x128xbf16>
    tpu.vector_store %arg5[%c0_101, %c1_102, %c0_103, %c0_104, %c0_105, %c0_106], %94 {strides = array<i32>} : memref<2x4x4x4x4x128xbf16, #tpu.memory_space<vmem>>, vector<1x1x1x1x4x128xbf16>,
    %95 = vector.extract_strided_slice %9 {offsets = [4, 512], sizes = [4, 128], strides = [1, 1]} : vector<32x2048xf32> to vector<4x128xf32>
    %96 = arith.truncf %95 : vector<4x128xf32> to vector<4x128xbf16>
    %c0_107 = arith.constant 0 : index
    %c1_108 = arith.constant 1 : index
    %c1_109 = arith.constant 1 : index
    %c0_110 = arith.constant 0 : index
    %c0_111 = arith.constant 0 : index
    %c0_112 = arith.constant 0 : index
    %97 = vector.load %arg5[%c0_107, %c1_108, %c1_109, %c0_110, %c0_111, %c0_112] : memref<2x4x4x4x4x128xbf16, #tpu.memory_space<vmem>>, vector<1x1x1x1x4x128xbf16>
    %98 = vector.shape_cast %97 : vector<1x1x1x1x4x128xbf16> to vector<4x128xbf16>
    %99 = vector.shape_cast %96 : vector<4x128xbf16> to vector<1x1x1x1x4x128xbf16>
    tpu.vector_store %arg5[%c0_107, %c1_108, %c1_109, %c0_110, %c0_111, %c0_112], %99 {strides = array<i32>} : memref<2x4x4x4x4x128xbf16, #tpu.memory_space<vmem>>, vector<1x1x1x1x4x128xbf16>,
    %100 = vector.extract_strided_slice %9 {offsets = [8, 512], sizes = [4, 128], strides = [1, 1]} : vector<32x2048xf32> to vector<4x128xf32>
    %101 = arith.truncf %100 : vector<4x128xf32> to vector<4x128xbf16>
    %c0_113 = arith.constant 0 : index
    %c1_114 = arith.constant 1 : index
    %c2_115 = arith.constant 2 : index
    %c0_116 = arith.constant 0 : index
    %c0_117 = arith.constant 0 : index
    %c0_118 = arith.constant 0 : index
    %102 = vector.load %arg5[%c0_113, %c1_114, %c2_115, %c0_116, %c0_117, %c0_118] : memref<2x4x4x4x4x128xbf16, #tpu.memory_space<vmem>>, vector<1x1x1x1x4x128xbf16>
    %103 = vector.shape_cast %102 : vector<1x1x1x1x4x128xbf16> to vector<4x128xbf16>
    %104 = vector.shape_cast %101 : vector<4x128xbf16> to vector<1x1x1x1x4x128xbf16>
    tpu.vector_store %arg5[%c0_113, %c1_114, %c2_115, %c0_116, %c0_117, %c0_118], %104 {strides = array<i32>} : memref<2x4x4x4x4x128xbf16, #tpu.memory_space<vmem>>, vector<1x1x1x1x4x128xbf16>,
    %105 = vector.extract_strided_slice %9 {offsets = [12, 512], sizes = [4, 128], strides = [1, 1]} : vector<32x2048xf32> to vector<4x128xf32>
    %106 = arith.truncf %105 : vector<4x128xf32> to vector<4x128xbf16>
    %c0_119 = arith.constant 0 : index
    %c1_120 = arith.constant 1 : index
    %c3_121 = arith.constant 3 : index
    %c0_122 = arith.constant 0 : index
    %c0_123 = arith.constant 0 : index
    %c0_124 = arith.constant 0 : index
    %107 = vector.load %arg5[%c0_119, %c1_120, %c3_121, %c0_122, %c0_123, %c0_124] : memref<2x4x4x4x4x128xbf16, #tpu.memory_space<vmem>>, vector<1x1x1x1x4x128xbf16>
    %108 = vector.shape_cast %107 : vector<1x1x1x1x4x128xbf16> to vector<4x128xbf16>
    %109 = vector.shape_cast %106 : vector<4x128xbf16> to vector<1x1x1x1x4x128xbf16>
    tpu.vector_store %arg5[%c0_119, %c1_120, %c3_121, %c0_122, %c0_123, %c0_124], %109 {strides = array<i32>} : memref<2x4x4x4x4x128xbf16, #tpu.memory_space<vmem>>, vector<1x1x1x1x4x128xbf16>,
    %110 = vector.extract_strided_slice %9 {offsets = [0, 640], sizes = [4, 128], strides = [1, 1]} : vector<32x2048xf32> to vector<4x128xf32>
    %111 = arith.truncf %110 : vector<4x128xf32> to vector<4x128xbf16>
    %c0_125 = arith.constant 0 : index
    %c1_126 = arith.constant 1 : index
    %c0_127 = arith.constant 0 : index
    %c1_128 = arith.constant 1 : index
    %c0_129 = arith.constant 0 : index
    %c0_130 = arith.constant 0 : index
    %112 = vector.load %arg5[%c0_125, %c1_126, %c0_127, %c1_128, %c0_129, %c0_130] : memref<2x4x4x4x4x128xbf16, #tpu.memory_space<vmem>>, vector<1x1x1x1x4x128xbf16>
    %113 = vector.shape_cast %112 : vector<1x1x1x1x4x128xbf16> to vector<4x128xbf16>
    %114 = vector.shape_cast %111 : vector<4x128xbf16> to vector<1x1x1x1x4x128xbf16>
    tpu.vector_store %arg5[%c0_125, %c1_126, %c0_127, %c1_128, %c0_129, %c0_130], %114 {strides = array<i32>} : memref<2x4x4x4x4x128xbf16, #tpu.memory_space<vmem>>, vector<1x1x1x1x4x128xbf16>,
    %115 = vector.extract_strided_slice %9 {offsets = [4, 640], sizes = [4, 128], strides = [1, 1]} : vector<32x2048xf32> to vector<4x128xf32>
    %116 = arith.truncf %115 : vector<4x128xf32> to vector<4x128xbf16>
    %c0_131 = arith.constant 0 : index
    %c1_132 = arith.constant 1 : index
    %c1_133 = arith.constant 1 : index
    %c1_134 = arith.constant 1 : index
    %c0_135 = arith.constant 0 : index
    %c0_136 = arith.constant 0 : index
    %117 = vector.load %arg5[%c0_131, %c1_132, %c1_133, %c1_134, %c0_135, %c0_136] : memref<2x4x4x4x4x128xbf16, #tpu.memory_space<vmem>>, vector<1x1x1x1x4x128xbf16>
    %118 = vector.shape_cast %117 : vector<1x1x1x1x4x128xbf16> to vector<4x128xbf16>
    %119 = vector.shape_cast %116 : vector<4x128xbf16> to vector<1x1x1x1x4x128xbf16>
    tpu.vector_store %arg5[%c0_131, %c1_132, %c1_133, %c1_134, %c0_135, %c0_136], %119 {strides = array<i32>} : memref<2x4x4x4x4x128xbf16, #tpu.memory_space<vmem>>, vector<1x1x1x1x4x128xbf16>,
    %120 = vector.extract_strided_slice %9 {offsets = [8, 640], sizes = [4, 128], strides = [1, 1]} : vector<32x2048xf32> to vector<4x128xf32>
    %121 = arith.truncf %120 : vector<4x128xf32> to vector<4x128xbf16>
    %c0_137 = arith.constant 0 : index
    %c1_138 = arith.constant 1 : index
    %c2_139 = arith.constant 2 : index
    %c1_140 = arith.constant 1 : index
    %c0_141 = arith.constant 0 : index
    %c0_142 = arith.constant 0 : index
    %122 = vector.load %arg5[%c0_137, %c1_138, %c2_139, %c1_140, %c0_141, %c0_142] : memref<2x4x4x4x4x128xbf16, #tpu.memory_space<vmem>>, vector<1x1x1x1x4x128xbf16>
    %123 = vector.shape_cast %122 : vector<1x1x1x1x4x128xbf16> to vector<4x128xbf16>
    %124 = vector.shape_cast %121 : vector<4x128xbf16> to vector<1x1x1x1x4x128xbf16>
    tpu.vector_store %arg5[%c0_137, %c1_138, %c2_139, %c1_140, %c0_141, %c0_142], %124 {strides = array<i32>} : memref<2x4x4x4x4x128xbf16, #tpu.memory_space<vmem>>, vector<1x1x1x1x4x128xbf16>,
    %125 = vector.extract_strided_slice %9 {offsets = [12, 640], sizes = [4, 128], strides = [1, 1]} : vector<32x2048xf32> to vector<4x128xf32>
    %126 = arith.truncf %125 : vector<4x128xf32> to vector<4x128xbf16>
    %c0_143 = arith.constant 0 : index
    %c1_144 = arith.constant 1 : index
    %c3_145 = arith.constant 3 : index
    %c1_146 = arith.constant 1 : index
    %c0_147 = arith.constant 0 : index
    %c0_148 = arith.constant 0 : index
    %127 = vector.load %arg5[%c0_143, %c1_144, %c3_145, %c1_146, %c0_147, %c0_148] : memref<2x4x4x4x4x128xbf16, #tpu.memory_space<vmem>>, vector<1x1x1x1x4x128xbf16>
    %128 = vector.shape_cast %127 : vector<1x1x1x1x4x128xbf16> to vector<4x128xbf16>
    %129 = vector.shape_cast %126 : vector<4x128xbf16> to vector<1x1x1x1x4x128xbf16>
    tpu.vector_store %arg5[%c0_143, %c1_144, %c3_145, %c1_146, %c0_147, %c0_148], %129 {strides = array<i32>} : memref<2x4x4x4x4x128xbf16, #tpu.memory_space<vmem>>, vector<1x1x1x1x4x128xbf16>,
    %130 = vector.extract_strided_slice %9 {offsets = [0, 768], sizes = [4, 128], strides = [1, 1]} : vector<32x2048xf32> to vector<4x128xf32>
    %131 = arith.truncf %130 : vector<4x128xf32> to vector<4x128xbf16>
    %c0_149 = arith.constant 0 : index
    %c1_150 = arith.constant 1 : index
    %c0_151 = arith.constant 0 : index
    %c2_152 = arith.constant 2 : index
    %c0_153 = arith.constant 0 : index
    %c0_154 = arith.constant 0 : index
    %132 = vector.load %arg5[%c0_149, %c1_150, %c0_151, %c2_152, %c0_153, %c0_154] : memref<2x4x4x4x4x128xbf16, #tpu.memory_space<vmem>>, vector<1x1x1x1x4x128xbf16>
    %133 = vector.shape_cast %132 : vector<1x1x1x1x4x128xbf16> to vector<4x128xbf16>
    %134 = vector.shape_cast %131 : vector<4x128xbf16> to vector<1x1x1x1x4x128xbf16>
    tpu.vector_store %arg5[%c0_149, %c1_150, %c0_151, %c2_152, %c0_153, %c0_154], %134 {strides = array<i32>} : memref<2x4x4x4x4x128xbf16, #tpu.memory_space<vmem>>, vector<1x1x1x1x4x128xbf16>,
    %135 = vector.extract_strided_slice %9 {offsets = [4, 768], sizes = [4, 128], strides = [1, 1]} : vector<32x2048xf32> to vector<4x128xf32>
    %136 = arith.truncf %135 : vector<4x128xf32> to vector<4x128xbf16>
    %c0_155 = arith.constant 0 : index
    %c1_156 = arith.constant 1 : index
    %c1_157 = arith.constant 1 : index
    %c2_158 = arith.constant 2 : index
    %c0_159 = arith.constant 0 : index
    %c0_160 = arith.constant 0 : index
    %137 = vector.load %arg5[%c0_155, %c1_156, %c1_157, %c2_158, %c0_159, %c0_160] : memref<2x4x4x4x4x128xbf16, #tpu.memory_space<vmem>>, vector<1x1x1x1x4x128xbf16>
    %138 = vector.shape_cast %137 : vector<1x1x1x1x4x128xbf16> to vector<4x128xbf16>
    %139 = vector.shape_cast %136 : vector<4x128xbf16> to vector<1x1x1x1x4x128xbf16>
    tpu.vector_store %arg5[%c0_155, %c1_156, %c1_157, %c2_158, %c0_159, %c0_160], %139 {strides = array<i32>} : memref<2x4x4x4x4x128xbf16, #tpu.memory_space<vmem>>, vector<1x1x1x1x4x128xbf16>,
    %140 = vector.extract_strided_slice %9 {offsets = [8, 768], sizes = [4, 128], strides = [1, 1]} : vector<32x2048xf32> to vector<4x128xf32>
    %141 = arith.truncf %140 : vector<4x128xf32> to vector<4x128xbf16>
    %c0_161 = arith.constant 0 : index
    %c1_162 = arith.constant 1 : index
    %c2_163 = arith.constant 2 : index
    %c2_164 = arith.constant 2 : index
    %c0_165 = arith.constant 0 : index
    %c0_166 = arith.constant 0 : index
    %142 = vector.load %arg5[%c0_161, %c1_162, %c2_163, %c2_164, %c0_165, %c0_166] : memref<2x4x4x4x4x128xbf16, #tpu.memory_space<vmem>>, vector<1x1x1x1x4x128xbf16>
    %143 = vector.shape_cast %142 : vector<1x1x1x1x4x128xbf16> to vector<4x128xbf16>
    %144 = vector.shape_cast %141 : vector<4x128xbf16> to vector<1x1x1x1x4x128xbf16>
    tpu.vector_store %arg5[%c0_161, %c1_162, %c2_163, %c2_164, %c0_165, %c0_166], %144 {strides = array<i32>} : memref<2x4x4x4x4x128xbf16, #tpu.memory_space<vmem>>, vector<1x1x1x1x4x128xbf16>,
    %145 = vector.extract_strided_slice %9 {offsets = [12, 768], sizes = [4, 128], strides = [1, 1]} : vector<32x2048xf32> to vector<4x128xf32>
    %146 = arith.truncf %145 : vector<4x128xf32> to vector<4x128xbf16>
    %c0_167 = arith.constant 0 : index
    %c1_168 = arith.constant 1 : index
    %c3_169 = arith.constant 3 : index
    %c2_170 = arith.constant 2 : index
    %c0_171 = arith.constant 0 : index
    %c0_172 = arith.constant 0 : index
    %147 = vector.load %arg5[%c0_167, %c1_168, %c3_169, %c2_170, %c0_171, %c0_172] : memref<2x4x4x4x4x128xbf16, #tpu.memory_space<vmem>>, vector<1x1x1x1x4x128xbf16>
    %148 = vector.shape_cast %147 : vector<1x1x1x1x4x128xbf16> to vector<4x128xbf16>
    %149 = vector.shape_cast %146 : vector<4x128xbf16> to vector<1x1x1x1x4x128xbf16>
    tpu.vector_store %arg5[%c0_167, %c1_168, %c3_169, %c2_170, %c0_171, %c0_172], %149 {strides = array<i32>} : memref<2x4x4x4x4x128xbf16, #tpu.memory_space<vmem>>, vector<1x1x1x1x4x128xbf16>,
    %150 = vector.extract_strided_slice %9 {offsets = [0, 896], sizes = [4, 128], strides = [1, 1]} : vector<32x2048xf32> to vector<4x128xf32>
    %151 = arith.truncf %150 : vector<4x128xf32> to vector<4x128xbf16>
    %c0_173 = arith.constant 0 : index
    %c1_174 = arith.constant 1 : index
    %c0_175 = arith.constant 0 : index
    %c3_176 = arith.constant 3 : index
    %c0_177 = arith.constant 0 : index
    %c0_178 = arith.constant 0 : index
    %152 = vector.load %arg5[%c0_173, %c1_174, %c0_175, %c3_176, %c0_177, %c0_178] : memref<2x4x4x4x4x128xbf16, #tpu.memory_space<vmem>>, vector<1x1x1x1x4x128xbf16>
    %153 = vector.shape_cast %152 : vector<1x1x1x1x4x128xbf16> to vector<4x128xbf16>
    %154 = vector.shape_cast %151 : vector<4x128xbf16> to vector<1x1x1x1x4x128xbf16>
    tpu.vector_store %arg5[%c0_173, %c1_174, %c0_175, %c3_176, %c0_177, %c0_178], %154 {strides = array<i32>} : memref<2x4x4x4x4x128xbf16, #tpu.memory_space<vmem>>, vector<1x1x1x1x4x128xbf16>,
    %155 = vector.extract_strided_slice %9 {offsets = [4, 896], sizes = [4, 128], strides = [1, 1]} : vector<32x2048xf32> to vector<4x128xf32>
    %156 = arith.truncf %155 : vector<4x128xf32> to vector<4x128xbf16>
    %c0_179 = arith.constant 0 : index
    %c1_180 = arith.constant 1 : index
    %c1_181 = arith.constant 1 : index
    %c3_182 = arith.constant 3 : index
    %c0_183 = arith.constant 0 : index
    %c0_184 = arith.constant 0 : index
    %157 = vector.load %arg5[%c0_179, %c1_180, %c1_181, %c3_182, %c0_183, %c0_184] : memref<2x4x4x4x4x128xbf16, #tpu.memory_space<vmem>>, vector<1x1x1x1x4x128xbf16>
    %158 = vector.shape_cast %157 : vector<1x1x1x1x4x128xbf16> to vector<4x128xbf16>
    %159 = vector.shape_cast %156 : vector<4x128xbf16> to vector<1x1x1x1x4x128xbf16>
    tpu.vector_store %arg5[%c0_179, %c1_180, %c1_181, %c3_182, %c0_183, %c0_184], %159 {strides = array<i32>} : memref<2x4x4x4x4x128xbf16, #tpu.memory_space<vmem>>, vector<1x1x1x1x4x128xbf16>,
    %160 = vector.extract_strided_slice %9 {offsets = [8, 896], sizes = [4, 128], strides = [1, 1]} : vector<32x2048xf32> to vector<4x128xf32>
    %161 = arith.truncf %160 : vector<4x128xf32> to vector<4x128xbf16>
    %c0_185 = arith.constant 0 : index
    %c1_186 = arith.constant 1 : index
    %c2_187 = arith.constant 2 : index
    %c3_188 = arith.constant 3 : index
    %c0_189 = arith.constant 0 : index
    %c0_190 = arith.constant 0 : index
    %162 = vector.load %arg5[%c0_185, %c1_186, %c2_187, %c3_188, %c0_189, %c0_190] : memref<2x4x4x4x4x128xbf16, #tpu.memory_space<vmem>>, vector<1x1x1x1x4x128xbf16>
    %163 = vector.shape_cast %162 : vector<1x1x1x1x4x128xbf16> to vector<4x128xbf16>
    %164 = vector.shape_cast %161 : vector<4x128xbf16> to vector<1x1x1x1x4x128xbf16>
    tpu.vector_store %arg5[%c0_185, %c1_186, %c2_187, %c3_188, %c0_189, %c0_190], %164 {strides = array<i32>} : memref<2x4x4x4x4x128xbf16, #tpu.memory_space<vmem>>, vector<1x1x1x1x4x128xbf16>,
    %165 = vector.extract_strided_slice %9 {offsets = [12, 896], sizes = [4, 128], strides = [1, 1]} : vector<32x2048xf32> to vector<4x128xf32>
    %166 = arith.truncf %165 : vector<4x128xf32> to vector<4x128xbf16>
    %c0_191 = arith.constant 0 : index
    %c1_192 = arith.constant 1 : index
    %c3_193 = arith.constant 3 : index
    %c3_194 = arith.constant 3 : index
    %c0_195 = arith.constant 0 : index
    %c0_196 = arith.constant 0 : index
    %167 = vector.load %arg5[%c0_191, %c1_192, %c3_193, %c3_194, %c0_195, %c0_196] : memref<2x4x4x4x4x128xbf16, #tpu.memory_space<vmem>>, vector<1x1x1x1x4x128xbf16>
    %168 = vector.shape_cast %167 : vector<1x1x1x1x4x128xbf16> to vector<4x128xbf16>
    %169 = vector.shape_cast %166 : vector<4x128xbf16> to vector<1x1x1x1x4x128xbf16>
    tpu.vector_store %arg5[%c0_191, %c1_192, %c3_193, %c3_194, %c0_195, %c0_196], %169 {strides = array<i32>} : memref<2x4x4x4x4x128xbf16, #tpu.memory_space<vmem>>, vector<1x1x1x1x4x128xbf16>,
    %170 = vector.extract_strided_slice %9 {offsets = [0, 1024], sizes = [4, 128], strides = [1, 1]} : vector<32x2048xf32> to vector<4x128xf32>
    %171 = arith.truncf %170 : vector<4x128xf32> to vector<4x128xbf16>
    %c0_197 = arith.constant 0 : index
    %c2_198 = arith.constant 2 : index
    %c0_199 = arith.constant 0 : index
    %c0_200 = arith.constant 0 : index
    %c0_201 = arith.constant 0 : index
    %c0_202 = arith.constant 0 : index
    %172 = vector.load %arg5[%c0_197, %c2_198, %c0_199, %c0_200, %c0_201, %c0_202] : memref<2x4x4x4x4x128xbf16, #tpu.memory_space<vmem>>, vector<1x1x1x1x4x128xbf16>
    %173 = vector.shape_cast %172 : vector<1x1x1x1x4x128xbf16> to vector<4x128xbf16>
    %174 = vector.shape_cast %171 : vector<4x128xbf16> to vector<1x1x1x1x4x128xbf16>
    tpu.vector_store %arg5[%c0_197, %c2_198, %c0_199, %c0_200, %c0_201, %c0_202], %174 {strides = array<i32>} : memref<2x4x4x4x4x128xbf16, #tpu.memory_space<vmem>>, vector<1x1x1x1x4x128xbf16>,
    %175 = vector.extract_strided_slice %9 {offsets = [4, 1024], sizes = [4, 128], strides = [1, 1]} : vector<32x2048xf32> to vector<4x128xf32>
    %176 = arith.truncf %175 : vector<4x128xf32> to vector<4x128xbf16>
    %c0_203 = arith.constant 0 : index
    %c2_204 = arith.constant 2 : index
    %c1_205 = arith.constant 1 : index
    %c0_206 = arith.constant 0 : index
    %c0_207 = arith.constant 0 : index
    %c0_208 = arith.constant 0 : index
    %177 = vector.load %arg5[%c0_203, %c2_204, %c1_205, %c0_206, %c0_207, %c0_208] : memref<2x4x4x4x4x128xbf16, #tpu.memory_space<vmem>>, vector<1x1x1x1x4x128xbf16>
    %178 = vector.shape_cast %177 : vector<1x1x1x1x4x128xbf16> to vector<4x128xbf16>
    %179 = vector.shape_cast %176 : vector<4x128xbf16> to vector<1x1x1x1x4x128xbf16>
    tpu.vector_store %arg5[%c0_203, %c2_204, %c1_205, %c0_206, %c0_207, %c0_208], %179 {strides = array<i32>} : memref<2x4x4x4x4x128xbf16, #tpu.memory_space<vmem>>, vector<1x1x1x1x4x128xbf16>,
    %180 = vector.extract_strided_slice %9 {offsets = [8, 1024], sizes = [4, 128], strides = [1, 1]} : vector<32x2048xf32> to vector<4x128xf32>
    %181 = arith.truncf %180 : vector<4x128xf32> to vector<4x128xbf16>
    %c0_209 = arith.constant 0 : index
    %c2_210 = arith.constant 2 : index
    %c2_211 = arith.constant 2 : index
    %c0_212 = arith.constant 0 : index
    %c0_213 = arith.constant 0 : index
    %c0_214 = arith.constant 0 : index
    %182 = vector.load %arg5[%c0_209, %c2_210, %c2_211, %c0_212, %c0_213, %c0_214] : memref<2x4x4x4x4x128xbf16, #tpu.memory_space<vmem>>, vector<1x1x1x1x4x128xbf16>
    %183 = vector.shape_cast %182 : vector<1x1x1x1x4x128xbf16> to vector<4x128xbf16>
    %184 = vector.shape_cast %181 : vector<4x128xbf16> to vector<1x1x1x1x4x128xbf16>
    tpu.vector_store %arg5[%c0_209, %c2_210, %c2_211, %c0_212, %c0_213, %c0_214], %184 {strides = array<i32>} : memref<2x4x4x4x4x128xbf16, #tpu.memory_space<vmem>>, vector<1x1x1x1x4x128xbf16>,
    %185 = vector.extract_strided_slice %9 {offsets = [12, 1024], sizes = [4, 128], strides = [1, 1]} : vector<32x2048xf32> to vector<4x128xf32>
    %186 = arith.truncf %185 : vector<4x128xf32> to vector<4x128xbf16>
    %c0_215 = arith.constant 0 : index
    %c2_216 = arith.constant 2 : index
    %c3_217 = arith.constant 3 : index
    %c0_218 = arith.constant 0 : index
    %c0_219 = arith.constant 0 : index
    %c0_220 = arith.constant 0 : index
    %187 = vector.load %arg5[%c0_215, %c2_216, %c3_217, %c0_218, %c0_219, %c0_220] : memref<2x4x4x4x4x128xbf16, #tpu.memory_space<vmem>>, vector<1x1x1x1x4x128xbf16>
    %188 = vector.shape_cast %187 : vector<1x1x1x1x4x128xbf16> to vector<4x128xbf16>
    %189 = vector.shape_cast %186 : vector<4x128xbf16> to vector<1x1x1x1x4x128xbf16>
    tpu.vector_store %arg5[%c0_215, %c2_216, %c3_217, %c0_218, %c0_219, %c0_220], %189 {strides = array<i32>} : memref<2x4x4x4x4x128xbf16, #tpu.memory_space<vmem>>, vector<1x1x1x1x4x128xbf16>,
    %190 = vector.extract_strided_slice %9 {offsets = [0, 1152], sizes = [4, 128], strides = [1, 1]} : vector<32x2048xf32> to vector<4x128xf32>
    %191 = arith.truncf %190 : vector<4x128xf32> to vector<4x128xbf16>
    %c0_221 = arith.constant 0 : index
    %c2_222 = arith.constant 2 : index
    %c0_223 = arith.constant 0 : index
    %c1_224 = arith.constant 1 : index
    %c0_225 = arith.constant 0 : index
    %c0_226 = arith.constant 0 : index
    %192 = vector.load %arg5[%c0_221, %c2_222, %c0_223, %c1_224, %c0_225, %c0_226] : memref<2x4x4x4x4x128xbf16, #tpu.memory_space<vmem>>, vector<1x1x1x1x4x128xbf16>
    %193 = vector.shape_cast %192 : vector<1x1x1x1x4x128xbf16> to vector<4x128xbf16>
    %194 = vector.shape_cast %191 : vector<4x128xbf16> to vector<1x1x1x1x4x128xbf16>
    tpu.vector_store %arg5[%c0_221, %c2_222, %c0_223, %c1_224, %c0_225, %c0_226], %194 {strides = array<i32>} : memref<2x4x4x4x4x128xbf16, #tpu.memory_space<vmem>>, vector<1x1x1x1x4x128xbf16>,
    %195 = vector.extract_strided_slice %9 {offsets = [4, 1152], sizes = [4, 128], strides = [1, 1]} : vector<32x2048xf32> to vector<4x128xf32>
    %196 = arith.truncf %195 : vector<4x128xf32> to vector<4x128xbf16>
    %c0_227 = arith.constant 0 : index
    %c2_228 = arith.constant 2 : index
    %c1_229 = arith.constant 1 : index
    %c1_230 = arith.constant 1 : index
    %c0_231 = arith.constant 0 : index
    %c0_232 = arith.constant 0 : index
    %197 = vector.load %arg5[%c0_227, %c2_228, %c1_229, %c1_230, %c0_231, %c0_232] : memref<2x4x4x4x4x128xbf16, #tpu.memory_space<vmem>>, vector<1x1x1x1x4x128xbf16>
    %198 = vector.shape_cast %197 : vector<1x1x1x1x4x128xbf16> to vector<4x128xbf16>
    %199 = vector.shape_cast %196 : vector<4x128xbf16> to vector<1x1x1x1x4x128xbf16>
    tpu.vector_store %arg5[%c0_227, %c2_228, %c1_229, %c1_230, %c0_231, %c0_232], %199 {strides = array<i32>} : memref<2x4x4x4x4x128xbf16, #tpu.memory_space<vmem>>, vector<1x1x1x1x4x128xbf16>,
    %200 = vector.extract_strided_slice %9 {offsets = [8, 1152], sizes = [4, 128], strides = [1, 1]} : vector<32x2048xf32> to vector<4x128xf32>
    %201 = arith.truncf %200 : vector<4x128xf32> to vector<4x128xbf16>
    %c0_233 = arith.constant 0 : index
    %c2_234 = arith.constant 2 : index
    %c2_235 = arith.constant 2 : index
    %c1_236 = arith.constant 1 : index
    %c0_237 = arith.constant 0 : index
    %c0_238 = arith.constant 0 : index
    %202 = vector.load %arg5[%c0_233, %c2_234, %c2_235, %c1_236, %c0_237, %c0_238] : memref<2x4x4x4x4x128xbf16, #tpu.memory_space<vmem>>, vector<1x1x1x1x4x128xbf16>
    %203 = vector.shape_cast %202 : vector<1x1x1x1x4x128xbf16> to vector<4x128xbf16>
    %204 = vector.shape_cast %201 : vector<4x128xbf16> to vector<1x1x1x1x4x128xbf16>
    tpu.vector_store %arg5[%c0_233, %c2_234, %c2_235, %c1_236, %c0_237, %c0_238], %204 {strides = array<i32>} : memref<2x4x4x4x4x128xbf16, #tpu.memory_space<vmem>>, vector<1x1x1x1x4x128xbf16>,
    %205 = vector.extract_strided_slice %9 {offsets = [12, 1152], sizes = [4, 128], strides = [1, 1]} : vector<32x2048xf32> to vector<4x128xf32>
    %206 = arith.truncf %205 : vector<4x128xf32> to vector<4x128xbf16>
    %c0_239 = arith.constant 0 : index
    %c2_240 = arith.constant 2 : index
    %c3_241 = arith.constant 3 : index
    %c1_242 = arith.constant 1 : index
    %c0_243 = arith.constant 0 : index
    %c0_244 = arith.constant 0 : index
    %207 = vector.load %arg5[%c0_239, %c2_240, %c3_241, %c1_242, %c0_243, %c0_244] : memref<2x4x4x4x4x128xbf16, #tpu.memory_space<vmem>>, vector<1x1x1x1x4x128xbf16>
    %208 = vector.shape_cast %207 : vector<1x1x1x1x4x128xbf16> to vector<4x128xbf16>
    %209 = vector.shape_cast %206 : vector<4x128xbf16> to vector<1x1x1x1x4x128xbf16>
    tpu.vector_store %arg5[%c0_239, %c2_240, %c3_241, %c1_242, %c0_243, %c0_244], %209 {strides = array<i32>} : memref<2x4x4x4x4x128xbf16, #tpu.memory_space<vmem>>, vector<1x1x1x1x4x128xbf16>,
    %210 = vector.extract_strided_slice %9 {offsets = [0, 1280], sizes = [4, 128], strides = [1, 1]} : vector<32x2048xf32> to vector<4x128xf32>
    %211 = arith.truncf %210 : vector<4x128xf32> to vector<4x128xbf16>
    %c0_245 = arith.constant 0 : index
    %c2_246 = arith.constant 2 : index
    %c0_247 = arith.constant 0 : index
    %c2_248 = arith.constant 2 : index
    %c0_249 = arith.constant 0 : index
    %c0_250 = arith.constant 0 : index
    %212 = vector.load %arg5[%c0_245, %c2_246, %c0_247, %c2_248, %c0_249, %c0_250] : memref<2x4x4x4x4x128xbf16, #tpu.memory_space<vmem>>, vector<1x1x1x1x4x128xbf16>
    %213 = vector.shape_cast %212 : vector<1x1x1x1x4x128xbf16> to vector<4x128xbf16>
    %214 = vector.shape_cast %211 : vector<4x128xbf16> to vector<1x1x1x1x4x128xbf16>
    tpu.vector_store %arg5[%c0_245, %c2_246, %c0_247, %c2_248, %c0_249, %c0_250], %214 {strides = array<i32>} : memref<2x4x4x4x4x128xbf16, #tpu.memory_space<vmem>>, vector<1x1x1x1x4x128xbf16>,
    %215 = vector.extract_strided_slice %9 {offsets = [4, 1280], sizes = [4, 128], strides = [1, 1]} : vector<32x2048xf32> to vector<4x128xf32>
    %216 = arith.truncf %215 : vector<4x128xf32> to vector<4x128xbf16>
    %c0_251 = arith.constant 0 : index
    %c2_252 = arith.constant 2 : index
    %c1_253 = arith.constant 1 : index
    %c2_254 = arith.constant 2 : index
    %c0_255 = arith.constant 0 : index
    %c0_256 = arith.constant 0 : index
    %217 = vector.load %arg5[%c0_251, %c2_252, %c1_253, %c2_254, %c0_255, %c0_256] : memref<2x4x4x4x4x128xbf16, #tpu.memory_space<vmem>>, vector<1x1x1x1x4x128xbf16>
    %218 = vector.shape_cast %217 : vector<1x1x1x1x4x128xbf16> to vector<4x128xbf16>
    %219 = vector.shape_cast %216 : vector<4x128xbf16> to vector<1x1x1x1x4x128xbf16>
    tpu.vector_store %arg5[%c0_251, %c2_252, %c1_253, %c2_254, %c0_255, %c0_256], %219 {strides = array<i32>} : memref<2x4x4x4x4x128xbf16, #tpu.memory_space<vmem>>, vector<1x1x1x1x4x128xbf16>,
    %220 = vector.extract_strided_slice %9 {offsets = [8, 1280], sizes = [4, 128], strides = [1, 1]} : vector<32x2048xf32> to vector<4x128xf32>
    %221 = arith.truncf %220 : vector<4x128xf32> to vector<4x128xbf16>
    %c0_257 = arith.constant 0 : index
    %c2_258 = arith.constant 2 : index
    %c2_259 = arith.constant 2 : index
    %c2_260 = arith.constant 2 : index
    %c0_261 = arith.constant 0 : index
    %c0_262 = arith.constant 0 : index
    %222 = vector.load %arg5[%c0_257, %c2_258, %c2_259, %c2_260, %c0_261, %c0_262] : memref<2x4x4x4x4x128xbf16, #tpu.memory_space<vmem>>, vector<1x1x1x1x4x128xbf16>
    %223 = vector.shape_cast %222 : vector<1x1x1x1x4x128xbf16> to vector<4x128xbf16>
    %224 = vector.shape_cast %221 : vector<4x128xbf16> to vector<1x1x1x1x4x128xbf16>
    tpu.vector_store %arg5[%c0_257, %c2_258, %c2_259, %c2_260, %c0_261, %c0_262], %224 {strides = array<i32>} : memref<2x4x4x4x4x128xbf16, #tpu.memory_space<vmem>>, vector<1x1x1x1x4x128xbf16>,
    %225 = vector.extract_strided_slice %9 {offsets = [12, 1280], sizes = [4, 128], strides = [1, 1]} : vector<32x2048xf32> to vector<4x128xf32>
    %226 = arith.truncf %225 : vector<4x128xf32> to vector<4x128xbf16>
    %c0_263 = arith.constant 0 : index
    %c2_264 = arith.constant 2 : index
    %c3_265 = arith.constant 3 : index
    %c2_266 = arith.constant 2 : index
    %c0_267 = arith.constant 0 : index
    %c0_268 = arith.constant 0 : index
    %227 = vector.load %arg5[%c0_263, %c2_264, %c3_265, %c2_266, %c0_267, %c0_268] : memref<2x4x4x4x4x128xbf16, #tpu.memory_space<vmem>>, vector<1x1x1x1x4x128xbf16>
    %228 = vector.shape_cast %227 : vector<1x1x1x1x4x128xbf16> to vector<4x128xbf16>
    %229 = vector.shape_cast %226 : vector<4x128xbf16> to vector<1x1x1x1x4x128xbf16>
    tpu.vector_store %arg5[%c0_263, %c2_264, %c3_265, %c2_266, %c0_267, %c0_268], %229 {strides = array<i32>} : memref<2x4x4x4x4x128xbf16, #tpu.memory_space<vmem>>, vector<1x1x1x1x4x128xbf16>,
    %230 = vector.extract_strided_slice %9 {offsets = [0, 1408], sizes = [4, 128], strides = [1, 1]} : vector<32x2048xf32> to vector<4x128xf32>
    %231 = arith.truncf %230 : vector<4x128xf32> to vector<4x128xbf16>
    %c0_269 = arith.constant 0 : index
    %c2_270 = arith.constant 2 : index
    %c0_271 = arith.constant 0 : index
    %c3_272 = arith.constant 3 : index
    %c0_273 = arith.constant 0 : index
    %c0_274 = arith.constant 0 : index
    %232 = vector.load %arg5[%c0_269, %c2_270, %c0_271, %c3_272, %c0_273, %c0_274] : memref<2x4x4x4x4x128xbf16, #tpu.memory_space<vmem>>, vector<1x1x1x1x4x128xbf16>
    %233 = vector.shape_cast %232 : vector<1x1x1x1x4x128xbf16> to vector<4x128xbf16>
    %234 = vector.shape_cast %231 : vector<4x128xbf16> to vector<1x1x1x1x4x128xbf16>
    tpu.vector_store %arg5[%c0_269, %c2_270, %c0_271, %c3_272, %c0_273, %c0_274], %234 {strides = array<i32>} : memref<2x4x4x4x4x128xbf16, #tpu.memory_space<vmem>>, vector<1x1x1x1x4x128xbf16>,
    %235 = vector.extract_strided_slice %9 {offsets = [4, 1408], sizes = [4, 128], strides = [1, 1]} : vector<32x2048xf32> to vector<4x128xf32>
    %236 = arith.truncf %235 : vector<4x128xf32> to vector<4x128xbf16>
    %c0_275 = arith.constant 0 : index
    %c2_276 = arith.constant 2 : index
    %c1_277 = arith.constant 1 : index
    %c3_278 = arith.constant 3 : index
    %c0_279 = arith.constant 0 : index
    %c0_280 = arith.constant 0 : index
    %237 = vector.load %arg5[%c0_275, %c2_276, %c1_277, %c3_278, %c0_279, %c0_280] : memref<2x4x4x4x4x128xbf16, #tpu.memory_space<vmem>>, vector<1x1x1x1x4x128xbf16>
    %238 = vector.shape_cast %237 : vector<1x1x1x1x4x128xbf16> to vector<4x128xbf16>
    %239 = vector.shape_cast %236 : vector<4x128xbf16> to vector<1x1x1x1x4x128xbf16>
    tpu.vector_store %arg5[%c0_275, %c2_276, %c1_277, %c3_278, %c0_279, %c0_280], %239 {strides = array<i32>} : memref<2x4x4x4x4x128xbf16, #tpu.memory_space<vmem>>, vector<1x1x1x1x4x128xbf16>,
    %240 = vector.extract_strided_slice %9 {offsets = [8, 1408], sizes = [4, 128], strides = [1, 1]} : vector<32x2048xf32> to vector<4x128xf32>
    %241 = arith.truncf %240 : vector<4x128xf32> to vector<4x128xbf16>
    %c0_281 = arith.constant 0 : index
    %c2_282 = arith.constant 2 : index
    %c2_283 = arith.constant 2 : index
    %c3_284 = arith.constant 3 : index
    %c0_285 = arith.constant 0 : index
    %c0_286 = arith.constant 0 : index
    %242 = vector.load %arg5[%c0_281, %c2_282, %c2_283, %c3_284, %c0_285, %c0_286] : memref<2x4x4x4x4x128xbf16, #tpu.memory_space<vmem>>, vector<1x1x1x1x4x128xbf16>
    %243 = vector.shape_cast %242 : vector<1x1x1x1x4x128xbf16> to vector<4x128xbf16>
    %244 = vector.shape_cast %241 : vector<4x128xbf16> to vector<1x1x1x1x4x128xbf16>
    tpu.vector_store %arg5[%c0_281, %c2_282, %c2_283, %c3_284, %c0_285, %c0_286], %244 {strides = array<i32>} : memref<2x4x4x4x4x128xbf16, #tpu.memory_space<vmem>>, vector<1x1x1x1x4x128xbf16>,
    %245 = vector.extract_strided_slice %9 {offsets = [12, 1408], sizes = [4, 128], strides = [1, 1]} : vector<32x2048xf32> to vector<4x128xf32>
    %246 = arith.truncf %245 : vector<4x128xf32> to vector<4x128xbf16>
    %c0_287 = arith.constant 0 : index
    %c2_288 = arith.constant 2 : index
    %c3_289 = arith.constant 3 : index
    %c3_290 = arith.constant 3 : index
    %c0_291 = arith.constant 0 : index
    %c0_292 = arith.constant 0 : index
    %247 = vector.load %arg5[%c0_287, %c2_288, %c3_289, %c3_290, %c0_291, %c0_292] : memref<2x4x4x4x4x128xbf16, #tpu.memory_space<vmem>>, vector<1x1x1x1x4x128xbf16>
    %248 = vector.shape_cast %247 : vector<1x1x1x1x4x128xbf16> to vector<4x128xbf16>
    %249 = vector.shape_cast %246 : vector<4x128xbf16> to vector<1x1x1x1x4x128xbf16>
    tpu.vector_store %arg5[%c0_287, %c2_288, %c3_289, %c3_290, %c0_291, %c0_292], %249 {strides = array<i32>} : memref<2x4x4x4x4x128xbf16, #tpu.memory_space<vmem>>, vector<1x1x1x1x4x128xbf16>,
    %250 = vector.extract_strided_slice %9 {offsets = [0, 1536], sizes = [4, 128], strides = [1, 1]} : vector<32x2048xf32> to vector<4x128xf32>
    %251 = arith.truncf %250 : vector<4x128xf32> to vector<4x128xbf16>
    %c0_293 = arith.constant 0 : index
    %c3_294 = arith.constant 3 : index
    %c0_295 = arith.constant 0 : index
    %c0_296 = arith.constant 0 : index
    %c0_297 = arith.constant 0 : index
    %c0_298 = arith.constant 0 : index
    %252 = vector.load %arg5[%c0_293, %c3_294, %c0_295, %c0_296, %c0_297, %c0_298] : memref<2x4x4x4x4x128xbf16, #tpu.memory_space<vmem>>, vector<1x1x1x1x4x128xbf16>
    %253 = vector.shape_cast %252 : vector<1x1x1x1x4x128xbf16> to vector<4x128xbf16>
    %254 = vector.shape_cast %251 : vector<4x128xbf16> to vector<1x1x1x1x4x128xbf16>
    tpu.vector_store %arg5[%c0_293, %c3_294, %c0_295, %c0_296, %c0_297, %c0_298], %254 {strides = array<i32>} : memref<2x4x4x4x4x128xbf16, #tpu.memory_space<vmem>>, vector<1x1x1x1x4x128xbf16>,
    %255 = vector.extract_strided_slice %9 {offsets = [4, 1536], sizes = [4, 128], strides = [1, 1]} : vector<32x2048xf32> to vector<4x128xf32>
    %256 = arith.truncf %255 : vector<4x128xf32> to vector<4x128xbf16>
    %c0_299 = arith.constant 0 : index
    %c3_300 = arith.constant 3 : index
    %c1_301 = arith.constant 1 : index
    %c0_302 = arith.constant 0 : index
    %c0_303 = arith.constant 0 : index
    %c0_304 = arith.constant 0 : index
    %257 = vector.load %arg5[%c0_299, %c3_300, %c1_301, %c0_302, %c0_303, %c0_304] : memref<2x4x4x4x4x128xbf16, #tpu.memory_space<vmem>>, vector<1x1x1x1x4x128xbf16>
    %258 = vector.shape_cast %257 : vector<1x1x1x1x4x128xbf16> to vector<4x128xbf16>
    %259 = vector.shape_cast %256 : vector<4x128xbf16> to vector<1x1x1x1x4x128xbf16>
    tpu.vector_store %arg5[%c0_299, %c3_300, %c1_301, %c0_302, %c0_303, %c0_304], %259 {strides = array<i32>} : memref<2x4x4x4x4x128xbf16, #tpu.memory_space<vmem>>, vector<1x1x1x1x4x128xbf16>,
    %260 = vector.extract_strided_slice %9 {offsets = [8, 1536], sizes = [4, 128], strides = [1, 1]} : vector<32x2048xf32> to vector<4x128xf32>
    %261 = arith.truncf %260 : vector<4x128xf32> to vector<4x128xbf16>
    %c0_305 = arith.constant 0 : index
    %c3_306 = arith.constant 3 : index
    %c2_307 = arith.constant 2 : index
    %c0_308 = arith.constant 0 : index
    %c0_309 = arith.constant 0 : index
    %c0_310 = arith.constant 0 : index
    %262 = vector.load %arg5[%c0_305, %c3_306, %c2_307, %c0_308, %c0_309, %c0_310] : memref<2x4x4x4x4x128xbf16, #tpu.memory_space<vmem>>, vector<1x1x1x1x4x128xbf16>
    %263 = vector.shape_cast %262 : vector<1x1x1x1x4x128xbf16> to vector<4x128xbf16>
    %264 = vector.shape_cast %261 : vector<4x128xbf16> to vector<1x1x1x1x4x128xbf16>
    tpu.vector_store %arg5[%c0_305, %c3_306, %c2_307, %c0_308, %c0_309, %c0_310], %264 {strides = array<i32>} : memref<2x4x4x4x4x128xbf16, #tpu.memory_space<vmem>>, vector<1x1x1x1x4x128xbf16>,
    %265 = vector.extract_strided_slice %9 {offsets = [12, 1536], sizes = [4, 128], strides = [1, 1]} : vector<32x2048xf32> to vector<4x128xf32>
    %266 = arith.truncf %265 : vector<4x128xf32> to vector<4x128xbf16>
    %c0_311 = arith.constant 0 : index
    %c3_312 = arith.constant 3 : index
    %c3_313 = arith.constant 3 : index
    %c0_314 = arith.constant 0 : index
    %c0_315 = arith.constant 0 : index
    %c0_316 = arith.constant 0 : index
    %267 = vector.load %arg5[%c0_311, %c3_312, %c3_313, %c0_314, %c0_315, %c0_316] : memref<2x4x4x4x4x128xbf16, #tpu.memory_space<vmem>>, vector<1x1x1x1x4x128xbf16>
    %268 = vector.shape_cast %267 : vector<1x1x1x1x4x128xbf16> to vector<4x128xbf16>
    %269 = vector.shape_cast %266 : vector<4x128xbf16> to vector<1x1x1x1x4x128xbf16>
    tpu.vector_store %arg5[%c0_311, %c3_312, %c3_313, %c0_314, %c0_315, %c0_316], %269 {strides = array<i32>} : memref<2x4x4x4x4x128xbf16, #tpu.memory_space<vmem>>, vector<1x1x1x1x4x128xbf16>,
    %270 = vector.extract_strided_slice %9 {offsets = [0, 1664], sizes = [4, 128], strides = [1, 1]} : vector<32x2048xf32> to vector<4x128xf32>
    %271 = arith.truncf %270 : vector<4x128xf32> to vector<4x128xbf16>
    %c0_317 = arith.constant 0 : index
    %c3_318 = arith.constant 3 : index
    %c0_319 = arith.constant 0 : index
    %c1_320 = arith.constant 1 : index
    %c0_321 = arith.constant 0 : index
    %c0_322 = arith.constant 0 : index
    %272 = vector.load %arg5[%c0_317, %c3_318, %c0_319, %c1_320, %c0_321, %c0_322] : memref<2x4x4x4x4x128xbf16, #tpu.memory_space<vmem>>, vector<1x1x1x1x4x128xbf16>
    %273 = vector.shape_cast %272 : vector<1x1x1x1x4x128xbf16> to vector<4x128xbf16>
    %274 = vector.shape_cast %271 : vector<4x128xbf16> to vector<1x1x1x1x4x128xbf16>
    tpu.vector_store %arg5[%c0_317, %c3_318, %c0_319, %c1_320, %c0_321, %c0_322], %274 {strides = array<i32>} : memref<2x4x4x4x4x128xbf16, #tpu.memory_space<vmem>>, vector<1x1x1x1x4x128xbf16>,
    %275 = vector.extract_strided_slice %9 {offsets = [4, 1664], sizes = [4, 128], strides = [1, 1]} : vector<32x2048xf32> to vector<4x128xf32>
    %276 = arith.truncf %275 : vector<4x128xf32> to vector<4x128xbf16>
    %c0_323 = arith.constant 0 : index
    %c3_324 = arith.constant 3 : index
    %c1_325 = arith.constant 1 : index
    %c1_326 = arith.constant 1 : index
    %c0_327 = arith.constant 0 : index
    %c0_328 = arith.constant 0 : index
    %277 = vector.load %arg5[%c0_323, %c3_324, %c1_325, %c1_326, %c0_327, %c0_328] : memref<2x4x4x4x4x128xbf16, #tpu.memory_space<vmem>>, vector<1x1x1x1x4x128xbf16>
    %278 = vector.shape_cast %277 : vector<1x1x1x1x4x128xbf16> to vector<4x128xbf16>
    %279 = vector.shape_cast %276 : vector<4x128xbf16> to vector<1x1x1x1x4x128xbf16>
    tpu.vector_store %arg5[%c0_323, %c3_324, %c1_325, %c1_326, %c0_327, %c0_328], %279 {strides = array<i32>} : memref<2x4x4x4x4x128xbf16, #tpu.memory_space<vmem>>, vector<1x1x1x1x4x128xbf16>,
    %280 = vector.extract_strided_slice %9 {offsets = [8, 1664], sizes = [4, 128], strides = [1, 1]} : vector<32x2048xf32> to vector<4x128xf32>
    %281 = arith.truncf %280 : vector<4x128xf32> to vector<4x128xbf16>
    %c0_329 = arith.constant 0 : index
    %c3_330 = arith.constant 3 : index
    %c2_331 = arith.constant 2 : index
    %c1_332 = arith.constant 1 : index
    %c0_333 = arith.constant 0 : index
    %c0_334 = arith.constant 0 : index
    %282 = vector.load %arg5[%c0_329, %c3_330, %c2_331, %c1_332, %c0_333, %c0_334] : memref<2x4x4x4x4x128xbf16, #tpu.memory_space<vmem>>, vector<1x1x1x1x4x128xbf16>
    %283 = vector.shape_cast %282 : vector<1x1x1x1x4x128xbf16> to vector<4x128xbf16>
    %284 = vector.shape_cast %281 : vector<4x128xbf16> to vector<1x1x1x1x4x128xbf16>
    tpu.vector_store %arg5[%c0_329, %c3_330, %c2_331, %c1_332, %c0_333, %c0_334], %284 {strides = array<i32>} : memref<2x4x4x4x4x128xbf16, #tpu.memory_space<vmem>>, vector<1x1x1x1x4x128xbf16>,
    %285 = vector.extract_strided_slice %9 {offsets = [12, 1664], sizes = [4, 128], strides = [1, 1]} : vector<32x2048xf32> to vector<4x128xf32>
    %286 = arith.truncf %285 : vector<4x128xf32> to vector<4x128xbf16>
    %c0_335 = arith.constant 0 : index
    %c3_336 = arith.constant 3 : index
    %c3_337 = arith.constant 3 : index
    %c1_338 = arith.constant 1 : index
    %c0_339 = arith.constant 0 : index
    %c0_340 = arith.constant 0 : index
    %287 = vector.load %arg5[%c0_335, %c3_336, %c3_337, %c1_338, %c0_339, %c0_340] : memref<2x4x4x4x4x128xbf16, #tpu.memory_space<vmem>>, vector<1x1x1x1x4x128xbf16>
    %288 = vector.shape_cast %287 : vector<1x1x1x1x4x128xbf16> to vector<4x128xbf16>
    %289 = vector.shape_cast %286 : vector<4x128xbf16> to vector<1x1x1x1x4x128xbf16>
    tpu.vector_store %arg5[%c0_335, %c3_336, %c3_337, %c1_338, %c0_339, %c0_340], %289 {strides = array<i32>} : memref<2x4x4x4x4x128xbf16, #tpu.memory_space<vmem>>, vector<1x1x1x1x4x128xbf16>,
    %290 = vector.extract_strided_slice %9 {offsets = [0, 1792], sizes = [4, 128], strides = [1, 1]} : vector<32x2048xf32> to vector<4x128xf32>
    %291 = arith.truncf %290 : vector<4x128xf32> to vector<4x128xbf16>
    %c0_341 = arith.constant 0 : index
    %c3_342 = arith.constant 3 : index
    %c0_343 = arith.constant 0 : index
    %c2_344 = arith.constant 2 : index
    %c0_345 = arith.constant 0 : index
    %c0_346 = arith.constant 0 : index
    %292 = vector.load %arg5[%c0_341, %c3_342, %c0_343, %c2_344, %c0_345, %c0_346] : memref<2x4x4x4x4x128xbf16, #tpu.memory_space<vmem>>, vector<1x1x1x1x4x128xbf16>
    %293 = vector.shape_cast %292 : vector<1x1x1x1x4x128xbf16> to vector<4x128xbf16>
    %294 = vector.shape_cast %291 : vector<4x128xbf16> to vector<1x1x1x1x4x128xbf16>
    tpu.vector_store %arg5[%c0_341, %c3_342, %c0_343, %c2_344, %c0_345, %c0_346], %294 {strides = array<i32>} : memref<2x4x4x4x4x128xbf16, #tpu.memory_space<vmem>>, vector<1x1x1x1x4x128xbf16>,
    %295 = vector.extract_strided_slice %9 {offsets = [4, 1792], sizes = [4, 128], strides = [1, 1]} : vector<32x2048xf32> to vector<4x128xf32>
    %296 = arith.truncf %295 : vector<4x128xf32> to vector<4x128xbf16>
    %c0_347 = arith.constant 0 : index
    %c3_348 = arith.constant 3 : index
    %c1_349 = arith.constant 1 : index
    %c2_350 = arith.constant 2 : index
    %c0_351 = arith.constant 0 : index
    %c0_352 = arith.constant 0 : index
    %297 = vector.load %arg5[%c0_347, %c3_348, %c1_349, %c2_350, %c0_351, %c0_352] : memref<2x4x4x4x4x128xbf16, #tpu.memory_space<vmem>>, vector<1x1x1x1x4x128xbf16>
    %298 = vector.shape_cast %297 : vector<1x1x1x1x4x128xbf16> to vector<4x128xbf16>
    %299 = vector.shape_cast %296 : vector<4x128xbf16> to vector<1x1x1x1x4x128xbf16>
    tpu.vector_store %arg5[%c0_347, %c3_348, %c1_349, %c2_350, %c0_351, %c0_352], %299 {strides = array<i32>} : memref<2x4x4x4x4x128xbf16, #tpu.memory_space<vmem>>, vector<1x1x1x1x4x128xbf16>,
    %300 = vector.extract_strided_slice %9 {offsets = [8, 1792], sizes = [4, 128], strides = [1, 1]} : vector<32x2048xf32> to vector<4x128xf32>
    %301 = arith.truncf %300 : vector<4x128xf32> to vector<4x128xbf16>
    %c0_353 = arith.constant 0 : index
    %c3_354 = arith.constant 3 : index
    %c2_355 = arith.constant 2 : index
    %c2_356 = arith.constant 2 : index
    %c0_357 = arith.constant 0 : index
    %c0_358 = arith.constant 0 : index
    %302 = vector.load %arg5[%c0_353, %c3_354, %c2_355, %c2_356, %c0_357, %c0_358] : memref<2x4x4x4x4x128xbf16, #tpu.memory_space<vmem>>, vector<1x1x1x1x4x128xbf16>
    %303 = vector.shape_cast %302 : vector<1x1x1x1x4x128xbf16> to vector<4x128xbf16>
    %304 = vector.shape_cast %301 : vector<4x128xbf16> to vector<1x1x1x1x4x128xbf16>
    tpu.vector_store %arg5[%c0_353, %c3_354, %c2_355, %c2_356, %c0_357, %c0_358], %304 {strides = array<i32>} : memref<2x4x4x4x4x128xbf16, #tpu.memory_space<vmem>>, vector<1x1x1x1x4x128xbf16>,
    %305 = vector.extract_strided_slice %9 {offsets = [12, 1792], sizes = [4, 128], strides = [1, 1]} : vector<32x2048xf32> to vector<4x128xf32>
    %306 = arith.truncf %305 : vector<4x128xf32> to vector<4x128xbf16>
    %c0_359 = arith.constant 0 : index
    %c3_360 = arith.constant 3 : index
    %c3_361 = arith.constant 3 : index
    %c2_362 = arith.constant 2 : index
    %c0_363 = arith.constant 0 : index
    %c0_364 = arith.constant 0 : index
    %307 = vector.load %arg5[%c0_359, %c3_360, %c3_361, %c2_362, %c0_363, %c0_364] : memref<2x4x4x4x4x128xbf16, #tpu.memory_space<vmem>>, vector<1x1x1x1x4x128xbf16>
    %308 = vector.shape_cast %307 : vector<1x1x1x1x4x128xbf16> to vector<4x128xbf16>
    %309 = vector.shape_cast %306 : vector<4x128xbf16> to vector<1x1x1x1x4x128xbf16>
    tpu.vector_store %arg5[%c0_359, %c3_360, %c3_361, %c2_362, %c0_363, %c0_364], %309 {strides = array<i32>} : memref<2x4x4x4x4x128xbf16, #tpu.memory_space<vmem>>, vector<1x1x1x1x4x128xbf16>,
    %310 = vector.extract_strided_slice %9 {offsets = [0, 1920], sizes = [4, 128], strides = [1, 1]} : vector<32x2048xf32> to vector<4x128xf32>
    %311 = arith.truncf %310 : vector<4x128xf32> to vector<4x128xbf16>
    %c0_365 = arith.constant 0 : index
    %c3_366 = arith.constant 3 : index
    %c0_367 = arith.constant 0 : index
    %c3_368 = arith.constant 3 : index
    %c0_369 = arith.constant 0 : index
    %c0_370 = arith.constant 0 : index
    %312 = vector.load %arg5[%c0_365, %c3_366, %c0_367, %c3_368, %c0_369, %c0_370] : memref<2x4x4x4x4x128xbf16, #tpu.memory_space<vmem>>, vector<1x1x1x1x4x128xbf16>
    %313 = vector.shape_cast %312 : vector<1x1x1x1x4x128xbf16> to vector<4x128xbf16>
    %314 = vector.shape_cast %311 : vector<4x128xbf16> to vector<1x1x1x1x4x128xbf16>
    tpu.vector_store %arg5[%c0_365, %c3_366, %c0_367, %c3_368, %c0_369, %c0_370], %314 {strides = array<i32>} : memref<2x4x4x4x4x128xbf16, #tpu.memory_space<vmem>>, vector<1x1x1x1x4x128xbf16>,
    %315 = vector.extract_strided_slice %9 {offsets = [4, 1920], sizes = [4, 128], strides = [1, 1]} : vector<32x2048xf32> to vector<4x128xf32>
    %316 = arith.truncf %315 : vector<4x128xf32> to vector<4x128xbf16>
    %c0_371 = arith.constant 0 : index
    %c3_372 = arith.constant 3 : index
    %c1_373 = arith.constant 1 : index
    %c3_374 = arith.constant 3 : index
    %c0_375 = arith.constant 0 : index
    %c0_376 = arith.constant 0 : index
    %317 = vector.load %arg5[%c0_371, %c3_372, %c1_373, %c3_374, %c0_375, %c0_376] : memref<2x4x4x4x4x128xbf16, #tpu.memory_space<vmem>>, vector<1x1x1x1x4x128xbf16>
    %318 = vector.shape_cast %317 : vector<1x1x1x1x4x128xbf16> to vector<4x128xbf16>
    %319 = vector.shape_cast %316 : vector<4x128xbf16> to vector<1x1x1x1x4x128xbf16>
    tpu.vector_store %arg5[%c0_371, %c3_372, %c1_373, %c3_374, %c0_375, %c0_376], %319 {strides = array<i32>} : memref<2x4x4x4x4x128xbf16, #tpu.memory_space<vmem>>, vector<1x1x1x1x4x128xbf16>,
    %320 = vector.extract_strided_slice %9 {offsets = [8, 1920], sizes = [4, 128], strides = [1, 1]} : vector<32x2048xf32> to vector<4x128xf32>
    %321 = arith.truncf %320 : vector<4x128xf32> to vector<4x128xbf16>
    %c0_377 = arith.constant 0 : index
    %c3_378 = arith.constant 3 : index
    %c2_379 = arith.constant 2 : index
    %c3_380 = arith.constant 3 : index
    %c0_381 = arith.constant 0 : index
    %c0_382 = arith.constant 0 : index
    %322 = vector.load %arg5[%c0_377, %c3_378, %c2_379, %c3_380, %c0_381, %c0_382] : memref<2x4x4x4x4x128xbf16, #tpu.memory_space<vmem>>, vector<1x1x1x1x4x128xbf16>
    %323 = vector.shape_cast %322 : vector<1x1x1x1x4x128xbf16> to vector<4x128xbf16>
    %324 = vector.shape_cast %321 : vector<4x128xbf16> to vector<1x1x1x1x4x128xbf16>
    tpu.vector_store %arg5[%c0_377, %c3_378, %c2_379, %c3_380, %c0_381, %c0_382], %324 {strides = array<i32>} : memref<2x4x4x4x4x128xbf16, #tpu.memory_space<vmem>>, vector<1x1x1x1x4x128xbf16>,
    %325 = vector.extract_strided_slice %9 {offsets = [12, 1920], sizes = [4, 128], strides = [1, 1]} : vector<32x2048xf32> to vector<4x128xf32>
    %326 = arith.truncf %325 : vector<4x128xf32> to vector<4x128xbf16>
    %c0_383 = arith.constant 0 : index
    %c3_384 = arith.constant 3 : index
    %c3_385 = arith.constant 3 : index
    %c3_386 = arith.constant 3 : index
    %c0_387 = arith.constant 0 : index
    %c0_388 = arith.constant 0 : index
    %327 = vector.load %arg5[%c0_383, %c3_384, %c3_385, %c3_386, %c0_387, %c0_388] : memref<2x4x4x4x4x128xbf16, #tpu.memory_space<vmem>>, vector<1x1x1x1x4x128xbf16>
    %328 = vector.shape_cast %327 : vector<1x1x1x1x4x128xbf16> to vector<4x128xbf16>
    %329 = vector.shape_cast %326 : vector<4x128xbf16> to vector<1x1x1x1x4x128xbf16>
    tpu.vector_store %arg5[%c0_383, %c3_384, %c3_385, %c3_386, %c0_387, %c0_388], %329 {strides = array<i32>} : memref<2x4x4x4x4x128xbf16, #tpu.memory_space<vmem>>, vector<1x1x1x1x4x128xbf16>,
    %330 = vector.extract_strided_slice %9 {offsets = [16, 0], sizes = [4, 128], strides = [1, 1]} : vector<32x2048xf32> to vector<4x128xf32>
    %331 = arith.truncf %330 : vector<4x128xf32> to vector<4x128xbf16>
    %c1_389 = arith.constant 1 : index
    %c0_390 = arith.constant 0 : index
    %c0_391 = arith.constant 0 : index
    %c0_392 = arith.constant 0 : index
    %c0_393 = arith.constant 0 : index
    %c0_394 = arith.constant 0 : index
    %332 = vector.load %arg5[%c1_389, %c0_390, %c0_391, %c0_392, %c0_393, %c0_394] : memref<2x4x4x4x4x128xbf16, #tpu.memory_space<vmem>>, vector<1x1x1x1x4x128xbf16>
    %333 = vector.shape_cast %332 : vector<1x1x1x1x4x128xbf16> to vector<4x128xbf16>
    %334 = vector.shape_cast %331 : vector<4x128xbf16> to vector<1x1x1x1x4x128xbf16>
    tpu.vector_store %arg5[%c1_389, %c0_390, %c0_391, %c0_392, %c0_393, %c0_394], %334 {strides = array<i32>} : memref<2x4x4x4x4x128xbf16, #tpu.memory_space<vmem>>, vector<1x1x1x1x4x128xbf16>,
    %335 = vector.extract_strided_slice %9 {offsets = [20, 0], sizes = [4, 128], strides = [1, 1]} : vector<32x2048xf32> to vector<4x128xf32>
    %336 = arith.truncf %335 : vector<4x128xf32> to vector<4x128xbf16>
    %c1_395 = arith.constant 1 : index
    %c0_396 = arith.constant 0 : index
    %c1_397 = arith.constant 1 : index
    %c0_398 = arith.constant 0 : index
    %c0_399 = arith.constant 0 : index
    %c0_400 = arith.constant 0 : index
    %337 = vector.load %arg5[%c1_395, %c0_396, %c1_397, %c0_398, %c0_399, %c0_400] : memref<2x4x4x4x4x128xbf16, #tpu.memory_space<vmem>>, vector<1x1x1x1x4x128xbf16>
    %338 = vector.shape_cast %337 : vector<1x1x1x1x4x128xbf16> to vector<4x128xbf16>
    %339 = vector.shape_cast %336 : vector<4x128xbf16> to vector<1x1x1x1x4x128xbf16>
    tpu.vector_store %arg5[%c1_395, %c0_396, %c1_397, %c0_398, %c0_399, %c0_400], %339 {strides = array<i32>} : memref<2x4x4x4x4x128xbf16, #tpu.memory_space<vmem>>, vector<1x1x1x1x4x128xbf16>,
    %340 = vector.extract_strided_slice %9 {offsets = [24, 0], sizes = [4, 128], strides = [1, 1]} : vector<32x2048xf32> to vector<4x128xf32>
    %341 = arith.truncf %340 : vector<4x128xf32> to vector<4x128xbf16>
    %c1_401 = arith.constant 1 : index
    %c0_402 = arith.constant 0 : index
    %c2_403 = arith.constant 2 : index
    %c0_404 = arith.constant 0 : index
    %c0_405 = arith.constant 0 : index
    %c0_406 = arith.constant 0 : index
    %342 = vector.load %arg5[%c1_401, %c0_402, %c2_403, %c0_404, %c0_405, %c0_406] : memref<2x4x4x4x4x128xbf16, #tpu.memory_space<vmem>>, vector<1x1x1x1x4x128xbf16>
    %343 = vector.shape_cast %342 : vector<1x1x1x1x4x128xbf16> to vector<4x128xbf16>
    %344 = vector.shape_cast %341 : vector<4x128xbf16> to vector<1x1x1x1x4x128xbf16>
    tpu.vector_store %arg5[%c1_401, %c0_402, %c2_403, %c0_404, %c0_405, %c0_406], %344 {strides = array<i32>} : memref<2x4x4x4x4x128xbf16, #tpu.memory_space<vmem>>, vector<1x1x1x1x4x128xbf16>,
    %345 = vector.extract_strided_slice %9 {offsets = [28, 0], sizes = [4, 128], strides = [1, 1]} : vector<32x2048xf32> to vector<4x128xf32>
    %346 = arith.truncf %345 : vector<4x128xf32> to vector<4x128xbf16>
    %c1_407 = arith.constant 1 : index
    %c0_408 = arith.constant 0 : index
    %c3_409 = arith.constant 3 : index
    %c0_410 = arith.constant 0 : index
    %c0_411 = arith.constant 0 : index
    %c0_412 = arith.constant 0 : index
    %347 = vector.load %arg5[%c1_407, %c0_408, %c3_409, %c0_410, %c0_411, %c0_412] : memref<2x4x4x4x4x128xbf16, #tpu.memory_space<vmem>>, vector<1x1x1x1x4x128xbf16>
    %348 = vector.shape_cast %347 : vector<1x1x1x1x4x128xbf16> to vector<4x128xbf16>
    %349 = vector.shape_cast %346 : vector<4x128xbf16> to vector<1x1x1x1x4x128xbf16>
    tpu.vector_store %arg5[%c1_407, %c0_408, %c3_409, %c0_410, %c0_411, %c0_412], %349 {strides = array<i32>} : memref<2x4x4x4x4x128xbf16, #tpu.memory_space<vmem>>, vector<1x1x1x1x4x128xbf16>,
    %350 = vector.extract_strided_slice %9 {offsets = [16, 128], sizes = [4, 128], strides = [1, 1]} : vector<32x2048xf32> to vector<4x128xf32>
    %351 = arith.truncf %350 : vector<4x128xf32> to vector<4x128xbf16>
    %c1_413 = arith.constant 1 : index
    %c0_414 = arith.constant 0 : index
    %c0_415 = arith.constant 0 : index
    %c1_416 = arith.constant 1 : index
    %c0_417 = arith.constant 0 : index
    %c0_418 = arith.constant 0 : index
    %352 = vector.load %arg5[%c1_413, %c0_414, %c0_415, %c1_416, %c0_417, %c0_418] : memref<2x4x4x4x4x128xbf16, #tpu.memory_space<vmem>>, vector<1x1x1x1x4x128xbf16>
    %353 = vector.shape_cast %352 : vector<1x1x1x1x4x128xbf16> to vector<4x128xbf16>
    %354 = vector.shape_cast %351 : vector<4x128xbf16> to vector<1x1x1x1x4x128xbf16>
    tpu.vector_store %arg5[%c1_413, %c0_414, %c0_415, %c1_416, %c0_417, %c0_418], %354 {strides = array<i32>} : memref<2x4x4x4x4x128xbf16, #tpu.memory_space<vmem>>, vector<1x1x1x1x4x128xbf16>,
    %355 = vector.extract_strided_slice %9 {offsets = [20, 128], sizes = [4, 128], strides = [1, 1]} : vector<32x2048xf32> to vector<4x128xf32>
    %356 = arith.truncf %355 : vector<4x128xf32> to vector<4x128xbf16>
    %c1_419 = arith.constant 1 : index
    %c0_420 = arith.constant 0 : index
    %c1_421 = arith.constant 1 : index
    %c1_422 = arith.constant 1 : index
    %c0_423 = arith.constant 0 : index
    %c0_424 = arith.constant 0 : index
    %357 = vector.load %arg5[%c1_419, %c0_420, %c1_421, %c1_422, %c0_423, %c0_424] : memref<2x4x4x4x4x128xbf16, #tpu.memory_space<vmem>>, vector<1x1x1x1x4x128xbf16>
    %358 = vector.shape_cast %357 : vector<1x1x1x1x4x128xbf16> to vector<4x128xbf16>
    %359 = vector.shape_cast %356 : vector<4x128xbf16> to vector<1x1x1x1x4x128xbf16>
    tpu.vector_store %arg5[%c1_419, %c0_420, %c1_421, %c1_422, %c0_423, %c0_424], %359 {strides = array<i32>} : memref<2x4x4x4x4x128xbf16, #tpu.memory_space<vmem>>, vector<1x1x1x1x4x128xbf16>,
    %360 = vector.extract_strided_slice %9 {offsets = [24, 128], sizes = [4, 128], strides = [1, 1]} : vector<32x2048xf32> to vector<4x128xf32>
    %361 = arith.truncf %360 : vector<4x128xf32> to vector<4x128xbf16>
    %c1_425 = arith.constant 1 : index
    %c0_426 = arith.constant 0 : index
    %c2_427 = arith.constant 2 : index
    %c1_428 = arith.constant 1 : index
    %c0_429 = arith.constant 0 : index
    %c0_430 = arith.constant 0 : index
    %362 = vector.load %arg5[%c1_425, %c0_426, %c2_427, %c1_428, %c0_429, %c0_430] : memref<2x4x4x4x4x128xbf16, #tpu.memory_space<vmem>>, vector<1x1x1x1x4x128xbf16>
    %363 = vector.shape_cast %362 : vector<1x1x1x1x4x128xbf16> to vector<4x128xbf16>
    %364 = vector.shape_cast %361 : vector<4x128xbf16> to vector<1x1x1x1x4x128xbf16>
    tpu.vector_store %arg5[%c1_425, %c0_426, %c2_427, %c1_428, %c0_429, %c0_430], %364 {strides = array<i32>} : memref<2x4x4x4x4x128xbf16, #tpu.memory_space<vmem>>, vector<1x1x1x1x4x128xbf16>,
    %365 = vector.extract_strided_slice %9 {offsets = [28, 128], sizes = [4, 128], strides = [1, 1]} : vector<32x2048xf32> to vector<4x128xf32>
    %366 = arith.truncf %365 : vector<4x128xf32> to vector<4x128xbf16>
    %c1_431 = arith.constant 1 : index
    %c0_432 = arith.constant 0 : index
    %c3_433 = arith.constant 3 : index
    %c1_434 = arith.constant 1 : index
    %c0_435 = arith.constant 0 : index
    %c0_436 = arith.constant 0 : index
    %367 = vector.load %arg5[%c1_431, %c0_432, %c3_433, %c1_434, %c0_435, %c0_436] : memref<2x4x4x4x4x128xbf16, #tpu.memory_space<vmem>>, vector<1x1x1x1x4x128xbf16>
    %368 = vector.shape_cast %367 : vector<1x1x1x1x4x128xbf16> to vector<4x128xbf16>
    %369 = vector.shape_cast %366 : vector<4x128xbf16> to vector<1x1x1x1x4x128xbf16>
    tpu.vector_store %arg5[%c1_431, %c0_432, %c3_433, %c1_434, %c0_435, %c0_436], %369 {strides = array<i32>} : memref<2x4x4x4x4x128xbf16, #tpu.memory_space<vmem>>, vector<1x1x1x1x4x128xbf16>,
    %370 = vector.extract_strided_slice %9 {offsets = [16, 256], sizes = [4, 128], strides = [1, 1]} : vector<32x2048xf32> to vector<4x128xf32>
    %371 = arith.truncf %370 : vector<4x128xf32> to vector<4x128xbf16>
    %c1_437 = arith.constant 1 : index
    %c0_438 = arith.constant 0 : index
    %c0_439 = arith.constant 0 : index
    %c2_440 = arith.constant 2 : index
    %c0_441 = arith.constant 0 : index
    %c0_442 = arith.constant 0 : index
    %372 = vector.load %arg5[%c1_437, %c0_438, %c0_439, %c2_440, %c0_441, %c0_442] : memref<2x4x4x4x4x128xbf16, #tpu.memory_space<vmem>>, vector<1x1x1x1x4x128xbf16>
    %373 = vector.shape_cast %372 : vector<1x1x1x1x4x128xbf16> to vector<4x128xbf16>
    %374 = vector.shape_cast %371 : vector<4x128xbf16> to vector<1x1x1x1x4x128xbf16>
    tpu.vector_store %arg5[%c1_437, %c0_438, %c0_439, %c2_440, %c0_441, %c0_442], %374 {strides = array<i32>} : memref<2x4x4x4x4x128xbf16, #tpu.memory_space<vmem>>, vector<1x1x1x1x4x128xbf16>,
    %375 = vector.extract_strided_slice %9 {offsets = [20, 256], sizes = [4, 128], strides = [1, 1]} : vector<32x2048xf32> to vector<4x128xf32>
    %376 = arith.truncf %375 : vector<4x128xf32> to vector<4x128xbf16>
    %c1_443 = arith.constant 1 : index
    %c0_444 = arith.constant 0 : index
    %c1_445 = arith.constant 1 : index
    %c2_446 = arith.constant 2 : index
    %c0_447 = arith.constant 0 : index
    %c0_448 = arith.constant 0 : index
    %377 = vector.load %arg5[%c1_443, %c0_444, %c1_445, %c2_446, %c0_447, %c0_448] : memref<2x4x4x4x4x128xbf16, #tpu.memory_space<vmem>>, vector<1x1x1x1x4x128xbf16>
    %378 = vector.shape_cast %377 : vector<1x1x1x1x4x128xbf16> to vector<4x128xbf16>
    %379 = vector.shape_cast %376 : vector<4x128xbf16> to vector<1x1x1x1x4x128xbf16>
    tpu.vector_store %arg5[%c1_443, %c0_444, %c1_445, %c2_446, %c0_447, %c0_448], %379 {strides = array<i32>} : memref<2x4x4x4x4x128xbf16, #tpu.memory_space<vmem>>, vector<1x1x1x1x4x128xbf16>,
    %380 = vector.extract_strided_slice %9 {offsets = [24, 256], sizes = [4, 128], strides = [1, 1]} : vector<32x2048xf32> to vector<4x128xf32>
    %381 = arith.truncf %380 : vector<4x128xf32> to vector<4x128xbf16>
    %c1_449 = arith.constant 1 : index
    %c0_450 = arith.constant 0 : index
    %c2_451 = arith.constant 2 : index
    %c2_452 = arith.constant 2 : index
    %c0_453 = arith.constant 0 : index
    %c0_454 = arith.constant 0 : index
    %382 = vector.load %arg5[%c1_449, %c0_450, %c2_451, %c2_452, %c0_453, %c0_454] : memref<2x4x4x4x4x128xbf16, #tpu.memory_space<vmem>>, vector<1x1x1x1x4x128xbf16>
    %383 = vector.shape_cast %382 : vector<1x1x1x1x4x128xbf16> to vector<4x128xbf16>
    %384 = vector.shape_cast %381 : vector<4x128xbf16> to vector<1x1x1x1x4x128xbf16>
    tpu.vector_store %arg5[%c1_449, %c0_450, %c2_451, %c2_452, %c0_453, %c0_454], %384 {strides = array<i32>} : memref<2x4x4x4x4x128xbf16, #tpu.memory_space<vmem>>, vector<1x1x1x1x4x128xbf16>,
    %385 = vector.extract_strided_slice %9 {offsets = [28, 256], sizes = [4, 128], strides = [1, 1]} : vector<32x2048xf32> to vector<4x128xf32>
    %386 = arith.truncf %385 : vector<4x128xf32> to vector<4x128xbf16>
    %c1_455 = arith.constant 1 : index
    %c0_456 = arith.constant 0 : index
    %c3_457 = arith.constant 3 : index
    %c2_458 = arith.constant 2 : index
    %c0_459 = arith.constant 0 : index
    %c0_460 = arith.constant 0 : index
    %387 = vector.load %arg5[%c1_455, %c0_456, %c3_457, %c2_458, %c0_459, %c0_460] : memref<2x4x4x4x4x128xbf16, #tpu.memory_space<vmem>>, vector<1x1x1x1x4x128xbf16>
    %388 = vector.shape_cast %387 : vector<1x1x1x1x4x128xbf16> to vector<4x128xbf16>
    %389 = vector.shape_cast %386 : vector<4x128xbf16> to vector<1x1x1x1x4x128xbf16>
    tpu.vector_store %arg5[%c1_455, %c0_456, %c3_457, %c2_458, %c0_459, %c0_460], %389 {strides = array<i32>} : memref<2x4x4x4x4x128xbf16, #tpu.memory_space<vmem>>, vector<1x1x1x1x4x128xbf16>,
    %390 = vector.extract_strided_slice %9 {offsets = [16, 384], sizes = [4, 128], strides = [1, 1]} : vector<32x2048xf32> to vector<4x128xf32>
    %391 = arith.truncf %390 : vector<4x128xf32> to vector<4x128xbf16>
    %c1_461 = arith.constant 1 : index
    %c0_462 = arith.constant 0 : index
    %c0_463 = arith.constant 0 : index
    %c3_464 = arith.constant 3 : index
    %c0_465 = arith.constant 0 : index
    %c0_466 = arith.constant 0 : index
    %392 = vector.load %arg5[%c1_461, %c0_462, %c0_463, %c3_464, %c0_465, %c0_466] : memref<2x4x4x4x4x128xbf16, #tpu.memory_space<vmem>>, vector<1x1x1x1x4x128xbf16>
    %393 = vector.shape_cast %392 : vector<1x1x1x1x4x128xbf16> to vector<4x128xbf16>
    %394 = vector.shape_cast %391 : vector<4x128xbf16> to vector<1x1x1x1x4x128xbf16>
    tpu.vector_store %arg5[%c1_461, %c0_462, %c0_463, %c3_464, %c0_465, %c0_466], %394 {strides = array<i32>} : memref<2x4x4x4x4x128xbf16, #tpu.memory_space<vmem>>, vector<1x1x1x1x4x128xbf16>,
    %395 = vector.extract_strided_slice %9 {offsets = [20, 384], sizes = [4, 128], strides = [1, 1]} : vector<32x2048xf32> to vector<4x128xf32>
    %396 = arith.truncf %395 : vector<4x128xf32> to vector<4x128xbf16>
    %c1_467 = arith.constant 1 : index
    %c0_468 = arith.constant 0 : index
    %c1_469 = arith.constant 1 : index
    %c3_470 = arith.constant 3 : index
    %c0_471 = arith.constant 0 : index
    %c0_472 = arith.constant 0 : index
    %397 = vector.load %arg5[%c1_467, %c0_468, %c1_469, %c3_470, %c0_471, %c0_472] : memref<2x4x4x4x4x128xbf16, #tpu.memory_space<vmem>>, vector<1x1x1x1x4x128xbf16>
    %398 = vector.shape_cast %397 : vector<1x1x1x1x4x128xbf16> to vector<4x128xbf16>
    %399 = vector.shape_cast %396 : vector<4x128xbf16> to vector<1x1x1x1x4x128xbf16>
    tpu.vector_store %arg5[%c1_467, %c0_468, %c1_469, %c3_470, %c0_471, %c0_472], %399 {strides = array<i32>} : memref<2x4x4x4x4x128xbf16, #tpu.memory_space<vmem>>, vector<1x1x1x1x4x128xbf16>,
    %400 = vector.extract_strided_slice %9 {offsets = [24, 384], sizes = [4, 128], strides = [1, 1]} : vector<32x2048xf32> to vector<4x128xf32>
    %401 = arith.truncf %400 : vector<4x128xf32> to vector<4x128xbf16>
    %c1_473 = arith.constant 1 : index
    %c0_474 = arith.constant 0 : index
    %c2_475 = arith.constant 2 : index
    %c3_476 = arith.constant 3 : index
    %c0_477 = arith.constant 0 : index
    %c0_478 = arith.constant 0 : index
    %402 = vector.load %arg5[%c1_473, %c0_474, %c2_475, %c3_476, %c0_477, %c0_478] : memref<2x4x4x4x4x128xbf16, #tpu.memory_space<vmem>>, vector<1x1x1x1x4x128xbf16>
    %403 = vector.shape_cast %402 : vector<1x1x1x1x4x128xbf16> to vector<4x128xbf16>
    %404 = vector.shape_cast %401 : vector<4x128xbf16> to vector<1x1x1x1x4x128xbf16>
    tpu.vector_store %arg5[%c1_473, %c0_474, %c2_475, %c3_476, %c0_477, %c0_478], %404 {strides = array<i32>} : memref<2x4x4x4x4x128xbf16, #tpu.memory_space<vmem>>, vector<1x1x1x1x4x128xbf16>,
    %405 = vector.extract_strided_slice %9 {offsets = [28, 384], sizes = [4, 128], strides = [1, 1]} : vector<32x2048xf32> to vector<4x128xf32>
    %406 = arith.truncf %405 : vector<4x128xf32> to vector<4x128xbf16>
    %c1_479 = arith.constant 1 : index
    %c0_480 = arith.constant 0 : index
    %c3_481 = arith.constant 3 : index
    %c3_482 = arith.constant 3 : index
    %c0_483 = arith.constant 0 : index
    %c0_484 = arith.constant 0 : index
    %407 = vector.load %arg5[%c1_479, %c0_480, %c3_481, %c3_482, %c0_483, %c0_484] : memref<2x4x4x4x4x128xbf16, #tpu.memory_space<vmem>>, vector<1x1x1x1x4x128xbf16>
    %408 = vector.shape_cast %407 : vector<1x1x1x1x4x128xbf16> to vector<4x128xbf16>
    %409 = vector.shape_cast %406 : vector<4x128xbf16> to vector<1x1x1x1x4x128xbf16>
    tpu.vector_store %arg5[%c1_479, %c0_480, %c3_481, %c3_482, %c0_483, %c0_484], %409 {strides = array<i32>} : memref<2x4x4x4x4x128xbf16, #tpu.memory_space<vmem>>, vector<1x1x1x1x4x128xbf16>,
    %410 = vector.extract_strided_slice %9 {offsets = [16, 512], sizes = [4, 128], strides = [1, 1]} : vector<32x2048xf32> to vector<4x128xf32>
    %411 = arith.truncf %410 : vector<4x128xf32> to vector<4x128xbf16>
    %c1_485 = arith.constant 1 : index
    %c1_486 = arith.constant 1 : index
    %c0_487 = arith.constant 0 : index
    %c0_488 = arith.constant 0 : index
    %c0_489 = arith.constant 0 : index
    %c0_490 = arith.constant 0 : index
    %412 = vector.load %arg5[%c1_485, %c1_486, %c0_487, %c0_488, %c0_489, %c0_490] : memref<2x4x4x4x4x128xbf16, #tpu.memory_space<vmem>>, vector<1x1x1x1x4x128xbf16>
    %413 = vector.shape_cast %412 : vector<1x1x1x1x4x128xbf16> to vector<4x128xbf16>
    %414 = vector.shape_cast %411 : vector<4x128xbf16> to vector<1x1x1x1x4x128xbf16>
    tpu.vector_store %arg5[%c1_485, %c1_486, %c0_487, %c0_488, %c0_489, %c0_490], %414 {strides = array<i32>} : memref<2x4x4x4x4x128xbf16, #tpu.memory_space<vmem>>, vector<1x1x1x1x4x128xbf16>,
    %415 = vector.extract_strided_slice %9 {offsets = [20, 512], sizes = [4, 128], strides = [1, 1]} : vector<32x2048xf32> to vector<4x128xf32>
    %416 = arith.truncf %415 : vector<4x128xf32> to vector<4x128xbf16>
    %c1_491 = arith.constant 1 : index
    %c1_492 = arith.constant 1 : index
    %c1_493 = arith.constant 1 : index
    %c0_494 = arith.constant 0 : index
    %c0_495 = arith.constant 0 : index
    %c0_496 = arith.constant 0 : index
    %417 = vector.load %arg5[%c1_491, %c1_492, %c1_493, %c0_494, %c0_495, %c0_496] : memref<2x4x4x4x4x128xbf16, #tpu.memory_space<vmem>>, vector<1x1x1x1x4x128xbf16>
    %418 = vector.shape_cast %417 : vector<1x1x1x1x4x128xbf16> to vector<4x128xbf16>
    %419 = vector.shape_cast %416 : vector<4x128xbf16> to vector<1x1x1x1x4x128xbf16>
    tpu.vector_store %arg5[%c1_491, %c1_492, %c1_493, %c0_494, %c0_495, %c0_496], %419 {strides = array<i32>} : memref<2x4x4x4x4x128xbf16, #tpu.memory_space<vmem>>, vector<1x1x1x1x4x128xbf16>,
    %420 = vector.extract_strided_slice %9 {offsets = [24, 512], sizes = [4, 128], strides = [1, 1]} : vector<32x2048xf32> to vector<4x128xf32>
    %421 = arith.truncf %420 : vector<4x128xf32> to vector<4x128xbf16>
    %c1_497 = arith.constant 1 : index
    %c1_498 = arith.constant 1 : index
    %c2_499 = arith.constant 2 : index
    %c0_500 = arith.constant 0 : index
    %c0_501 = arith.constant 0 : index
    %c0_502 = arith.constant 0 : index
    %422 = vector.load %arg5[%c1_497, %c1_498, %c2_499, %c0_500, %c0_501, %c0_502] : memref<2x4x4x4x4x128xbf16, #tpu.memory_space<vmem>>, vector<1x1x1x1x4x128xbf16>
    %423 = vector.shape_cast %422 : vector<1x1x1x1x4x128xbf16> to vector<4x128xbf16>
    %424 = vector.shape_cast %421 : vector<4x128xbf16> to vector<1x1x1x1x4x128xbf16>
    tpu.vector_store %arg5[%c1_497, %c1_498, %c2_499, %c0_500, %c0_501, %c0_502], %424 {strides = array<i32>} : memref<2x4x4x4x4x128xbf16, #tpu.memory_space<vmem>>, vector<1x1x1x1x4x128xbf16>,
    %425 = vector.extract_strided_slice %9 {offsets = [28, 512], sizes = [4, 128], strides = [1, 1]} : vector<32x2048xf32> to vector<4x128xf32>
    %426 = arith.truncf %425 : vector<4x128xf32> to vector<4x128xbf16>
    %c1_503 = arith.constant 1 : index
    %c1_504 = arith.constant 1 : index
    %c3_505 = arith.constant 3 : index
    %c0_506 = arith.constant 0 : index
    %c0_507 = arith.constant 0 : index
    %c0_508 = arith.constant 0 : index
    %427 = vector.load %arg5[%c1_503, %c1_504, %c3_505, %c0_506, %c0_507, %c0_508] : memref<2x4x4x4x4x128xbf16, #tpu.memory_space<vmem>>, vector<1x1x1x1x4x128xbf16>
    %428 = vector.shape_cast %427 : vector<1x1x1x1x4x128xbf16> to vector<4x128xbf16>
    %429 = vector.shape_cast %426 : vector<4x128xbf16> to vector<1x1x1x1x4x128xbf16>
    tpu.vector_store %arg5[%c1_503, %c1_504, %c3_505, %c0_506, %c0_507, %c0_508], %429 {strides = array<i32>} : memref<2x4x4x4x4x128xbf16, #tpu.memory_space<vmem>>, vector<1x1x1x1x4x128xbf16>,
    %430 = vector.extract_strided_slice %9 {offsets = [16, 640], sizes = [4, 128], strides = [1, 1]} : vector<32x2048xf32> to vector<4x128xf32>
    %431 = arith.truncf %430 : vector<4x128xf32> to vector<4x128xbf16>
    %c1_509 = arith.constant 1 : index
    %c1_510 = arith.constant 1 : index
    %c0_511 = arith.constant 0 : index
    %c1_512 = arith.constant 1 : index
    %c0_513 = arith.constant 0 : index
    %c0_514 = arith.constant 0 : index
    %432 = vector.load %arg5[%c1_509, %c1_510, %c0_511, %c1_512, %c0_513, %c0_514] : memref<2x4x4x4x4x128xbf16, #tpu.memory_space<vmem>>, vector<1x1x1x1x4x128xbf16>
    %433 = vector.shape_cast %432 : vector<1x1x1x1x4x128xbf16> to vector<4x128xbf16>
    %434 = vector.shape_cast %431 : vector<4x128xbf16> to vector<1x1x1x1x4x128xbf16>
    tpu.vector_store %arg5[%c1_509, %c1_510, %c0_511, %c1_512, %c0_513, %c0_514], %434 {strides = array<i32>} : memref<2x4x4x4x4x128xbf16, #tpu.memory_space<vmem>>, vector<1x1x1x1x4x128xbf16>,
    %435 = vector.extract_strided_slice %9 {offsets = [20, 640], sizes = [4, 128], strides = [1, 1]} : vector<32x2048xf32> to vector<4x128xf32>
    %436 = arith.truncf %435 : vector<4x128xf32> to vector<4x128xbf16>
    %c1_515 = arith.constant 1 : index
    %c1_516 = arith.constant 1 : index
    %c1_517 = arith.constant 1 : index
    %c1_518 = arith.constant 1 : index
    %c0_519 = arith.constant 0 : index
    %c0_520 = arith.constant 0 : index
    %437 = vector.load %arg5[%c1_515, %c1_516, %c1_517, %c1_518, %c0_519, %c0_520] : memref<2x4x4x4x4x128xbf16, #tpu.memory_space<vmem>>, vector<1x1x1x1x4x128xbf16>
    %438 = vector.shape_cast %437 : vector<1x1x1x1x4x128xbf16> to vector<4x128xbf16>
    %439 = vector.shape_cast %436 : vector<4x128xbf16> to vector<1x1x1x1x4x128xbf16>
    tpu.vector_store %arg5[%c1_515, %c1_516, %c1_517, %c1_518, %c0_519, %c0_520], %439 {strides = array<i32>} : memref<2x4x4x4x4x128xbf16, #tpu.memory_space<vmem>>, vector<1x1x1x1x4x128xbf16>,
    %440 = vector.extract_strided_slice %9 {offsets = [24, 640], sizes = [4, 128], strides = [1, 1]} : vector<32x2048xf32> to vector<4x128xf32>
    %441 = arith.truncf %440 : vector<4x128xf32> to vector<4x128xbf16>
    %c1_521 = arith.constant 1 : index
    %c1_522 = arith.constant 1 : index
    %c2_523 = arith.constant 2 : index
    %c1_524 = arith.constant 1 : index
    %c0_525 = arith.constant 0 : index
    %c0_526 = arith.constant 0 : index
    %442 = vector.load %arg5[%c1_521, %c1_522, %c2_523, %c1_524, %c0_525, %c0_526] : memref<2x4x4x4x4x128xbf16, #tpu.memory_space<vmem>>, vector<1x1x1x1x4x128xbf16>
    %443 = vector.shape_cast %442 : vector<1x1x1x1x4x128xbf16> to vector<4x128xbf16>
    %444 = vector.shape_cast %441 : vector<4x128xbf16> to vector<1x1x1x1x4x128xbf16>
    tpu.vector_store %arg5[%c1_521, %c1_522, %c2_523, %c1_524, %c0_525, %c0_526], %444 {strides = array<i32>} : memref<2x4x4x4x4x128xbf16, #tpu.memory_space<vmem>>, vector<1x1x1x1x4x128xbf16>,
    %445 = vector.extract_strided_slice %9 {offsets = [28, 640], sizes = [4, 128], strides = [1, 1]} : vector<32x2048xf32> to vector<4x128xf32>
    %446 = arith.truncf %445 : vector<4x128xf32> to vector<4x128xbf16>
    %c1_527 = arith.constant 1 : index
    %c1_528 = arith.constant 1 : index
    %c3_529 = arith.constant 3 : index
    %c1_530 = arith.constant 1 : index
    %c0_531 = arith.constant 0 : index
    %c0_532 = arith.constant 0 : index
    %447 = vector.load %arg5[%c1_527, %c1_528, %c3_529, %c1_530, %c0_531, %c0_532] : memref<2x4x4x4x4x128xbf16, #tpu.memory_space<vmem>>, vector<1x1x1x1x4x128xbf16>
    %448 = vector.shape_cast %447 : vector<1x1x1x1x4x128xbf16> to vector<4x128xbf16>
    %449 = vector.shape_cast %446 : vector<4x128xbf16> to vector<1x1x1x1x4x128xbf16>
    tpu.vector_store %arg5[%c1_527, %c1_528, %c3_529, %c1_530, %c0_531, %c0_532], %449 {strides = array<i32>} : memref<2x4x4x4x4x128xbf16, #tpu.memory_space<vmem>>, vector<1x1x1x1x4x128xbf16>,
    %450 = vector.extract_strided_slice %9 {offsets = [16, 768], sizes = [4, 128], strides = [1, 1]} : vector<32x2048xf32> to vector<4x128xf32>
    %451 = arith.truncf %450 : vector<4x128xf32> to vector<4x128xbf16>
    %c1_533 = arith.constant 1 : index
    %c1_534 = arith.constant 1 : index
    %c0_535 = arith.constant 0 : index
    %c2_536 = arith.constant 2 : index
    %c0_537 = arith.constant 0 : index
    %c0_538 = arith.constant 0 : index
    %452 = vector.load %arg5[%c1_533, %c1_534, %c0_535, %c2_536, %c0_537, %c0_538] : memref<2x4x4x4x4x128xbf16, #tpu.memory_space<vmem>>, vector<1x1x1x1x4x128xbf16>
    %453 = vector.shape_cast %452 : vector<1x1x1x1x4x128xbf16> to vector<4x128xbf16>
    %454 = vector.shape_cast %451 : vector<4x128xbf16> to vector<1x1x1x1x4x128xbf16>
    tpu.vector_store %arg5[%c1_533, %c1_534, %c0_535, %c2_536, %c0_537, %c0_538], %454 {strides = array<i32>} : memref<2x4x4x4x4x128xbf16, #tpu.memory_space<vmem>>, vector<1x1x1x1x4x128xbf16>,
    %455 = vector.extract_strided_slice %9 {offsets = [20, 768], sizes = [4, 128], strides = [1, 1]} : vector<32x2048xf32> to vector<4x128xf32>
    %456 = arith.truncf %455 : vector<4x128xf32> to vector<4x128xbf16>
    %c1_539 = arith.constant 1 : index
    %c1_540 = arith.constant 1 : index
    %c1_541 = arith.constant 1 : index
    %c2_542 = arith.constant 2 : index
    %c0_543 = arith.constant 0 : index
    %c0_544 = arith.constant 0 : index
    %457 = vector.load %arg5[%c1_539, %c1_540, %c1_541, %c2_542, %c0_543, %c0_544] : memref<2x4x4x4x4x128xbf16, #tpu.memory_space<vmem>>, vector<1x1x1x1x4x128xbf16>
    %458 = vector.shape_cast %457 : vector<1x1x1x1x4x128xbf16> to vector<4x128xbf16>
    %459 = vector.shape_cast %456 : vector<4x128xbf16> to vector<1x1x1x1x4x128xbf16>
    tpu.vector_store %arg5[%c1_539, %c1_540, %c1_541, %c2_542, %c0_543, %c0_544], %459 {strides = array<i32>} : memref<2x4x4x4x4x128xbf16, #tpu.memory_space<vmem>>, vector<1x1x1x1x4x128xbf16>,
    %460 = vector.extract_strided_slice %9 {offsets = [24, 768], sizes = [4, 128], strides = [1, 1]} : vector<32x2048xf32> to vector<4x128xf32>
    %461 = arith.truncf %460 : vector<4x128xf32> to vector<4x128xbf16>
    %c1_545 = arith.constant 1 : index
    %c1_546 = arith.constant 1 : index
    %c2_547 = arith.constant 2 : index
    %c2_548 = arith.constant 2 : index
    %c0_549 = arith.constant 0 : index
    %c0_550 = arith.constant 0 : index
    %462 = vector.load %arg5[%c1_545, %c1_546, %c2_547, %c2_548, %c0_549, %c0_550] : memref<2x4x4x4x4x128xbf16, #tpu.memory_space<vmem>>, vector<1x1x1x1x4x128xbf16>
    %463 = vector.shape_cast %462 : vector<1x1x1x1x4x128xbf16> to vector<4x128xbf16>
    %464 = vector.shape_cast %461 : vector<4x128xbf16> to vector<1x1x1x1x4x128xbf16>
    tpu.vector_store %arg5[%c1_545, %c1_546, %c2_547, %c2_548, %c0_549, %c0_550], %464 {strides = array<i32>} : memref<2x4x4x4x4x128xbf16, #tpu.memory_space<vmem>>, vector<1x1x1x1x4x128xbf16>,
    %465 = vector.extract_strided_slice %9 {offsets = [28, 768], sizes = [4, 128], strides = [1, 1]} : vector<32x2048xf32> to vector<4x128xf32>
    %466 = arith.truncf %465 : vector<4x128xf32> to vector<4x128xbf16>
    %c1_551 = arith.constant 1 : index
    %c1_552 = arith.constant 1 : index
    %c3_553 = arith.constant 3 : index
    %c2_554 = arith.constant 2 : index
    %c0_555 = arith.constant 0 : index
    %c0_556 = arith.constant 0 : index
    %467 = vector.load %arg5[%c1_551, %c1_552, %c3_553, %c2_554, %c0_555, %c0_556] : memref<2x4x4x4x4x128xbf16, #tpu.memory_space<vmem>>, vector<1x1x1x1x4x128xbf16>
    %468 = vector.shape_cast %467 : vector<1x1x1x1x4x128xbf16> to vector<4x128xbf16>
    %469 = vector.shape_cast %466 : vector<4x128xbf16> to vector<1x1x1x1x4x128xbf16>
    tpu.vector_store %arg5[%c1_551, %c1_552, %c3_553, %c2_554, %c0_555, %c0_556], %469 {strides = array<i32>} : memref<2x4x4x4x4x128xbf16, #tpu.memory_space<vmem>>, vector<1x1x1x1x4x128xbf16>,
    %470 = vector.extract_strided_slice %9 {offsets = [16, 896], sizes = [4, 128], strides = [1, 1]} : vector<32x2048xf32> to vector<4x128xf32>
    %471 = arith.truncf %470 : vector<4x128xf32> to vector<4x128xbf16>
    %c1_557 = arith.constant 1 : index
    %c1_558 = arith.constant 1 : index
    %c0_559 = arith.constant 0 : index
    %c3_560 = arith.constant 3 : index
    %c0_561 = arith.constant 0 : index
    %c0_562 = arith.constant 0 : index
    %472 = vector.load %arg5[%c1_557, %c1_558, %c0_559, %c3_560, %c0_561, %c0_562] : memref<2x4x4x4x4x128xbf16, #tpu.memory_space<vmem>>, vector<1x1x1x1x4x128xbf16>
    %473 = vector.shape_cast %472 : vector<1x1x1x1x4x128xbf16> to vector<4x128xbf16>
    %474 = vector.shape_cast %471 : vector<4x128xbf16> to vector<1x1x1x1x4x128xbf16>
    tpu.vector_store %arg5[%c1_557, %c1_558, %c0_559, %c3_560, %c0_561, %c0_562], %474 {strides = array<i32>} : memref<2x4x4x4x4x128xbf16, #tpu.memory_space<vmem>>, vector<1x1x1x1x4x128xbf16>,
    %475 = vector.extract_strided_slice %9 {offsets = [20, 896], sizes = [4, 128], strides = [1, 1]} : vector<32x2048xf32> to vector<4x128xf32>
    %476 = arith.truncf %475 : vector<4x128xf32> to vector<4x128xbf16>
    %c1_563 = arith.constant 1 : index
    %c1_564 = arith.constant 1 : index
    %c1_565 = arith.constant 1 : index
    %c3_566 = arith.constant 3 : index
    %c0_567 = arith.constant 0 : index
    %c0_568 = arith.constant 0 : index
    %477 = vector.load %arg5[%c1_563, %c1_564, %c1_565, %c3_566, %c0_567, %c0_568] : memref<2x4x4x4x4x128xbf16, #tpu.memory_space<vmem>>, vector<1x1x1x1x4x128xbf16>
    %478 = vector.shape_cast %477 : vector<1x1x1x1x4x128xbf16> to vector<4x128xbf16>
    %479 = vector.shape_cast %476 : vector<4x128xbf16> to vector<1x1x1x1x4x128xbf16>
    tpu.vector_store %arg5[%c1_563, %c1_564, %c1_565, %c3_566, %c0_567, %c0_568], %479 {strides = array<i32>} : memref<2x4x4x4x4x128xbf16, #tpu.memory_space<vmem>>, vector<1x1x1x1x4x128xbf16>,
    %480 = vector.extract_strided_slice %9 {offsets = [24, 896], sizes = [4, 128], strides = [1, 1]} : vector<32x2048xf32> to vector<4x128xf32>
    %481 = arith.truncf %480 : vector<4x128xf32> to vector<4x128xbf16>
    %c1_569 = arith.constant 1 : index
    %c1_570 = arith.constant 1 : index
    %c2_571 = arith.constant 2 : index
    %c3_572 = arith.constant 3 : index
    %c0_573 = arith.constant 0 : index
    %c0_574 = arith.constant 0 : index
    %482 = vector.load %arg5[%c1_569, %c1_570, %c2_571, %c3_572, %c0_573, %c0_574] : memref<2x4x4x4x4x128xbf16, #tpu.memory_space<vmem>>, vector<1x1x1x1x4x128xbf16>
    %483 = vector.shape_cast %482 : vector<1x1x1x1x4x128xbf16> to vector<4x128xbf16>
    %484 = vector.shape_cast %481 : vector<4x128xbf16> to vector<1x1x1x1x4x128xbf16>
    tpu.vector_store %arg5[%c1_569, %c1_570, %c2_571, %c3_572, %c0_573, %c0_574], %484 {strides = array<i32>} : memref<2x4x4x4x4x128xbf16, #tpu.memory_space<vmem>>, vector<1x1x1x1x4x128xbf16>,
    %485 = vector.extract_strided_slice %9 {offsets = [28, 896], sizes = [4, 128], strides = [1, 1]} : vector<32x2048xf32> to vector<4x128xf32>
    %486 = arith.truncf %485 : vector<4x128xf32> to vector<4x128xbf16>
    %c1_575 = arith.constant 1 : index
    %c1_576 = arith.constant 1 : index
    %c3_577 = arith.constant 3 : index
    %c3_578 = arith.constant 3 : index
    %c0_579 = arith.constant 0 : index
    %c0_580 = arith.constant 0 : index
    %487 = vector.load %arg5[%c1_575, %c1_576, %c3_577, %c3_578, %c0_579, %c0_580] : memref<2x4x4x4x4x128xbf16, #tpu.memory_space<vmem>>, vector<1x1x1x1x4x128xbf16>
    %488 = vector.shape_cast %487 : vector<1x1x1x1x4x128xbf16> to vector<4x128xbf16>
    %489 = vector.shape_cast %486 : vector<4x128xbf16> to vector<1x1x1x1x4x128xbf16>
    tpu.vector_store %arg5[%c1_575, %c1_576, %c3_577, %c3_578, %c0_579, %c0_580], %489 {strides = array<i32>} : memref<2x4x4x4x4x128xbf16, #tpu.memory_space<vmem>>, vector<1x1x1x1x4x128xbf16>,
    %490 = vector.extract_strided_slice %9 {offsets = [16, 1024], sizes = [4, 128], strides = [1, 1]} : vector<32x2048xf32> to vector<4x128xf32>
    %491 = arith.truncf %490 : vector<4x128xf32> to vector<4x128xbf16>
    %c1_581 = arith.constant 1 : index
    %c2_582 = arith.constant 2 : index
    %c0_583 = arith.constant 0 : index
    %c0_584 = arith.constant 0 : index
    %c0_585 = arith.constant 0 : index
    %c0_586 = arith.constant 0 : index
    %492 = vector.load %arg5[%c1_581, %c2_582, %c0_583, %c0_584, %c0_585, %c0_586] : memref<2x4x4x4x4x128xbf16, #tpu.memory_space<vmem>>, vector<1x1x1x1x4x128xbf16>
    %493 = vector.shape_cast %492 : vector<1x1x1x1x4x128xbf16> to vector<4x128xbf16>
    %494 = vector.shape_cast %491 : vector<4x128xbf16> to vector<1x1x1x1x4x128xbf16>
    tpu.vector_store %arg5[%c1_581, %c2_582, %c0_583, %c0_584, %c0_585, %c0_586], %494 {strides = array<i32>} : memref<2x4x4x4x4x128xbf16, #tpu.memory_space<vmem>>, vector<1x1x1x1x4x128xbf16>,
    %495 = vector.extract_strided_slice %9 {offsets = [20, 1024], sizes = [4, 128], strides = [1, 1]} : vector<32x2048xf32> to vector<4x128xf32>
    %496 = arith.truncf %495 : vector<4x128xf32> to vector<4x128xbf16>
    %c1_587 = arith.constant 1 : index
    %c2_588 = arith.constant 2 : index
    %c1_589 = arith.constant 1 : index
    %c0_590 = arith.constant 0 : index
    %c0_591 = arith.constant 0 : index
    %c0_592 = arith.constant 0 : index
    %497 = vector.load %arg5[%c1_587, %c2_588, %c1_589, %c0_590, %c0_591, %c0_592] : memref<2x4x4x4x4x128xbf16, #tpu.memory_space<vmem>>, vector<1x1x1x1x4x128xbf16>
    %498 = vector.shape_cast %497 : vector<1x1x1x1x4x128xbf16> to vector<4x128xbf16>
    %499 = vector.shape_cast %496 : vector<4x128xbf16> to vector<1x1x1x1x4x128xbf16>
    tpu.vector_store %arg5[%c1_587, %c2_588, %c1_589, %c0_590, %c0_591, %c0_592], %499 {strides = array<i32>} : memref<2x4x4x4x4x128xbf16, #tpu.memory_space<vmem>>, vector<1x1x1x1x4x128xbf16>,
    %500 = vector.extract_strided_slice %9 {offsets = [24, 1024], sizes = [4, 128], strides = [1, 1]} : vector<32x2048xf32> to vector<4x128xf32>
    %501 = arith.truncf %500 : vector<4x128xf32> to vector<4x128xbf16>
    %c1_593 = arith.constant 1 : index
    %c2_594 = arith.constant 2 : index
    %c2_595 = arith.constant 2 : index
    %c0_596 = arith.constant 0 : index
    %c0_597 = arith.constant 0 : index
    %c0_598 = arith.constant 0 : index
    %502 = vector.load %arg5[%c1_593, %c2_594, %c2_595, %c0_596, %c0_597, %c0_598] : memref<2x4x4x4x4x128xbf16, #tpu.memory_space<vmem>>, vector<1x1x1x1x4x128xbf16>
    %503 = vector.shape_cast %502 : vector<1x1x1x1x4x128xbf16> to vector<4x128xbf16>
    %504 = vector.shape_cast %501 : vector<4x128xbf16> to vector<1x1x1x1x4x128xbf16>
    tpu.vector_store %arg5[%c1_593, %c2_594, %c2_595, %c0_596, %c0_597, %c0_598], %504 {strides = array<i32>} : memref<2x4x4x4x4x128xbf16, #tpu.memory_space<vmem>>, vector<1x1x1x1x4x128xbf16>,
    %505 = vector.extract_strided_slice %9 {offsets = [28, 1024], sizes = [4, 128], strides = [1, 1]} : vector<32x2048xf32> to vector<4x128xf32>
    %506 = arith.truncf %505 : vector<4x128xf32> to vector<4x128xbf16>
    %c1_599 = arith.constant 1 : index
    %c2_600 = arith.constant 2 : index
    %c3_601 = arith.constant 3 : index
    %c0_602 = arith.constant 0 : index
    %c0_603 = arith.constant 0 : index
    %c0_604 = arith.constant 0 : index
    %507 = vector.load %arg5[%c1_599, %c2_600, %c3_601, %c0_602, %c0_603, %c0_604] : memref<2x4x4x4x4x128xbf16, #tpu.memory_space<vmem>>, vector<1x1x1x1x4x128xbf16>
    %508 = vector.shape_cast %507 : vector<1x1x1x1x4x128xbf16> to vector<4x128xbf16>
    %509 = vector.shape_cast %506 : vector<4x128xbf16> to vector<1x1x1x1x4x128xbf16>
    tpu.vector_store %arg5[%c1_599, %c2_600, %c3_601, %c0_602, %c0_603, %c0_604], %509 {strides = array<i32>} : memref<2x4x4x4x4x128xbf16, #tpu.memory_space<vmem>>, vector<1x1x1x1x4x128xbf16>,
    %510 = vector.extract_strided_slice %9 {offsets = [16, 1152], sizes = [4, 128], strides = [1, 1]} : vector<32x2048xf32> to vector<4x128xf32>
    %511 = arith.truncf %510 : vector<4x128xf32> to vector<4x128xbf16>
    %c1_605 = arith.constant 1 : index
    %c2_606 = arith.constant 2 : index
    %c0_607 = arith.constant 0 : index
    %c1_608 = arith.constant 1 : index
    %c0_609 = arith.constant 0 : index
    %c0_610 = arith.constant 0 : index
    %512 = vector.load %arg5[%c1_605, %c2_606, %c0_607, %c1_608, %c0_609, %c0_610] : memref<2x4x4x4x4x128xbf16, #tpu.memory_space<vmem>>, vector<1x1x1x1x4x128xbf16>
    %513 = vector.shape_cast %512 : vector<1x1x1x1x4x128xbf16> to vector<4x128xbf16>
    %514 = vector.shape_cast %511 : vector<4x128xbf16> to vector<1x1x1x1x4x128xbf16>
    tpu.vector_store %arg5[%c1_605, %c2_606, %c0_607, %c1_608, %c0_609, %c0_610], %514 {strides = array<i32>} : memref<2x4x4x4x4x128xbf16, #tpu.memory_space<vmem>>, vector<1x1x1x1x4x128xbf16>,
    %515 = vector.extract_strided_slice %9 {offsets = [20, 1152], sizes = [4, 128], strides = [1, 1]} : vector<32x2048xf32> to vector<4x128xf32>
    %516 = arith.truncf %515 : vector<4x128xf32> to vector<4x128xbf16>
    %c1_611 = arith.constant 1 : index
    %c2_612 = arith.constant 2 : index
    %c1_613 = arith.constant 1 : index
    %c1_614 = arith.constant 1 : index
    %c0_615 = arith.constant 0 : index
    %c0_616 = arith.constant 0 : index
    %517 = vector.load %arg5[%c1_611, %c2_612, %c1_613, %c1_614, %c0_615, %c0_616] : memref<2x4x4x4x4x128xbf16, #tpu.memory_space<vmem>>, vector<1x1x1x1x4x128xbf16>
    %518 = vector.shape_cast %517 : vector<1x1x1x1x4x128xbf16> to vector<4x128xbf16>
    %519 = vector.shape_cast %516 : vector<4x128xbf16> to vector<1x1x1x1x4x128xbf16>
    tpu.vector_store %arg5[%c1_611, %c2_612, %c1_613, %c1_614, %c0_615, %c0_616], %519 {strides = array<i32>} : memref<2x4x4x4x4x128xbf16, #tpu.memory_space<vmem>>, vector<1x1x1x1x4x128xbf16>,
    %520 = vector.extract_strided_slice %9 {offsets = [24, 1152], sizes = [4, 128], strides = [1, 1]} : vector<32x2048xf32> to vector<4x128xf32>
    %521 = arith.truncf %520 : vector<4x128xf32> to vector<4x128xbf16>
    %c1_617 = arith.constant 1 : index
    %c2_618 = arith.constant 2 : index
    %c2_619 = arith.constant 2 : index
    %c1_620 = arith.constant 1 : index
    %c0_621 = arith.constant 0 : index
    %c0_622 = arith.constant 0 : index
    %522 = vector.load %arg5[%c1_617, %c2_618, %c2_619, %c1_620, %c0_621, %c0_622] : memref<2x4x4x4x4x128xbf16, #tpu.memory_space<vmem>>, vector<1x1x1x1x4x128xbf16>
    %523 = vector.shape_cast %522 : vector<1x1x1x1x4x128xbf16> to vector<4x128xbf16>
    %524 = vector.shape_cast %521 : vector<4x128xbf16> to vector<1x1x1x1x4x128xbf16>
    tpu.vector_store %arg5[%c1_617, %c2_618, %c2_619, %c1_620, %c0_621, %c0_622], %524 {strides = array<i32>} : memref<2x4x4x4x4x128xbf16, #tpu.memory_space<vmem>>, vector<1x1x1x1x4x128xbf16>,
    %525 = vector.extract_strided_slice %9 {offsets = [28, 1152], sizes = [4, 128], strides = [1, 1]} : vector<32x2048xf32> to vector<4x128xf32>
    %526 = arith.truncf %525 : vector<4x128xf32> to vector<4x128xbf16>
    %c1_623 = arith.constant 1 : index
    %c2_624 = arith.constant 2 : index
    %c3_625 = arith.constant 3 : index
    %c1_626 = arith.constant 1 : index
    %c0_627 = arith.constant 0 : index
    %c0_628 = arith.constant 0 : index
    %527 = vector.load %arg5[%c1_623, %c2_624, %c3_625, %c1_626, %c0_627, %c0_628] : memref<2x4x4x4x4x128xbf16, #tpu.memory_space<vmem>>, vector<1x1x1x1x4x128xbf16>
    %528 = vector.shape_cast %527 : vector<1x1x1x1x4x128xbf16> to vector<4x128xbf16>
    %529 = vector.shape_cast %526 : vector<4x128xbf16> to vector<1x1x1x1x4x128xbf16>
    tpu.vector_store %arg5[%c1_623, %c2_624, %c3_625, %c1_626, %c0_627, %c0_628], %529 {strides = array<i32>} : memref<2x4x4x4x4x128xbf16, #tpu.memory_space<vmem>>, vector<1x1x1x1x4x128xbf16>,
    %530 = vector.extract_strided_slice %9 {offsets = [16, 1280], sizes = [4, 128], strides = [1, 1]} : vector<32x2048xf32> to vector<4x128xf32>
    %531 = arith.truncf %530 : vector<4x128xf32> to vector<4x128xbf16>
    %c1_629 = arith.constant 1 : index
    %c2_630 = arith.constant 2 : index
    %c0_631 = arith.constant 0 : index
    %c2_632 = arith.constant 2 : index
    %c0_633 = arith.constant 0 : index
    %c0_634 = arith.constant 0 : index
    %532 = vector.load %arg5[%c1_629, %c2_630, %c0_631, %c2_632, %c0_633, %c0_634] : memref<2x4x4x4x4x128xbf16, #tpu.memory_space<vmem>>, vector<1x1x1x1x4x128xbf16>
    %533 = vector.shape_cast %532 : vector<1x1x1x1x4x128xbf16> to vector<4x128xbf16>
    %534 = vector.shape_cast %531 : vector<4x128xbf16> to vector<1x1x1x1x4x128xbf16>
    tpu.vector_store %arg5[%c1_629, %c2_630, %c0_631, %c2_632, %c0_633, %c0_634], %534 {strides = array<i32>} : memref<2x4x4x4x4x128xbf16, #tpu.memory_space<vmem>>, vector<1x1x1x1x4x128xbf16>,
    %535 = vector.extract_strided_slice %9 {offsets = [20, 1280], sizes = [4, 128], strides = [1, 1]} : vector<32x2048xf32> to vector<4x128xf32>
    %536 = arith.truncf %535 : vector<4x128xf32> to vector<4x128xbf16>
    %c1_635 = arith.constant 1 : index
    %c2_636 = arith.constant 2 : index
    %c1_637 = arith.constant 1 : index
    %c2_638 = arith.constant 2 : index
    %c0_639 = arith.constant 0 : index
    %c0_640 = arith.constant 0 : index
    %537 = vector.load %arg5[%c1_635, %c2_636, %c1_637, %c2_638, %c0_639, %c0_640] : memref<2x4x4x4x4x128xbf16, #tpu.memory_space<vmem>>, vector<1x1x1x1x4x128xbf16>
    %538 = vector.shape_cast %537 : vector<1x1x1x1x4x128xbf16> to vector<4x128xbf16>
    %539 = vector.shape_cast %536 : vector<4x128xbf16> to vector<1x1x1x1x4x128xbf16>
    tpu.vector_store %arg5[%c1_635, %c2_636, %c1_637, %c2_638, %c0_639, %c0_640], %539 {strides = array<i32>} : memref<2x4x4x4x4x128xbf16, #tpu.memory_space<vmem>>, vector<1x1x1x1x4x128xbf16>,
    %540 = vector.extract_strided_slice %9 {offsets = [24, 1280], sizes = [4, 128], strides = [1, 1]} : vector<32x2048xf32> to vector<4x128xf32>
    %541 = arith.truncf %540 : vector<4x128xf32> to vector<4x128xbf16>
    %c1_641 = arith.constant 1 : index
    %c2_642 = arith.constant 2 : index
    %c2_643 = arith.constant 2 : index
    %c2_644 = arith.constant 2 : index
    %c0_645 = arith.constant 0 : index
    %c0_646 = arith.constant 0 : index
    %542 = vector.load %arg5[%c1_641, %c2_642, %c2_643, %c2_644, %c0_645, %c0_646] : memref<2x4x4x4x4x128xbf16, #tpu.memory_space<vmem>>, vector<1x1x1x1x4x128xbf16>
    %543 = vector.shape_cast %542 : vector<1x1x1x1x4x128xbf16> to vector<4x128xbf16>
    %544 = vector.shape_cast %541 : vector<4x128xbf16> to vector<1x1x1x1x4x128xbf16>
    tpu.vector_store %arg5[%c1_641, %c2_642, %c2_643, %c2_644, %c0_645, %c0_646], %544 {strides = array<i32>} : memref<2x4x4x4x4x128xbf16, #tpu.memory_space<vmem>>, vector<1x1x1x1x4x128xbf16>,
    %545 = vector.extract_strided_slice %9 {offsets = [28, 1280], sizes = [4, 128], strides = [1, 1]} : vector<32x2048xf32> to vector<4x128xf32>
    %546 = arith.truncf %545 : vector<4x128xf32> to vector<4x128xbf16>
    %c1_647 = arith.constant 1 : index
    %c2_648 = arith.constant 2 : index
    %c3_649 = arith.constant 3 : index
    %c2_650 = arith.constant 2 : index
    %c0_651 = arith.constant 0 : index
    %c0_652 = arith.constant 0 : index
    %547 = vector.load %arg5[%c1_647, %c2_648, %c3_649, %c2_650, %c0_651, %c0_652] : memref<2x4x4x4x4x128xbf16, #tpu.memory_space<vmem>>, vector<1x1x1x1x4x128xbf16>
    %548 = vector.shape_cast %547 : vector<1x1x1x1x4x128xbf16> to vector<4x128xbf16>
    %549 = vector.shape_cast %546 : vector<4x128xbf16> to vector<1x1x1x1x4x128xbf16>
    tpu.vector_store %arg5[%c1_647, %c2_648, %c3_649, %c2_650, %c0_651, %c0_652], %549 {strides = array<i32>} : memref<2x4x4x4x4x128xbf16, #tpu.memory_space<vmem>>, vector<1x1x1x1x4x128xbf16>,
    %550 = vector.extract_strided_slice %9 {offsets = [16, 1408], sizes = [4, 128], strides = [1, 1]} : vector<32x2048xf32> to vector<4x128xf32>
    %551 = arith.truncf %550 : vector<4x128xf32> to vector<4x128xbf16>
    %c1_653 = arith.constant 1 : index
    %c2_654 = arith.constant 2 : index
    %c0_655 = arith.constant 0 : index
    %c3_656 = arith.constant 3 : index
    %c0_657 = arith.constant 0 : index
    %c0_658 = arith.constant 0 : index
    %552 = vector.load %arg5[%c1_653, %c2_654, %c0_655, %c3_656, %c0_657, %c0_658] : memref<2x4x4x4x4x128xbf16, #tpu.memory_space<vmem>>, vector<1x1x1x1x4x128xbf16>
    %553 = vector.shape_cast %552 : vector<1x1x1x1x4x128xbf16> to vector<4x128xbf16>
    %554 = vector.shape_cast %551 : vector<4x128xbf16> to vector<1x1x1x1x4x128xbf16>
    tpu.vector_store %arg5[%c1_653, %c2_654, %c0_655, %c3_656, %c0_657, %c0_658], %554 {strides = array<i32>} : memref<2x4x4x4x4x128xbf16, #tpu.memory_space<vmem>>, vector<1x1x1x1x4x128xbf16>,
    %555 = vector.extract_strided_slice %9 {offsets = [20, 1408], sizes = [4, 128], strides = [1, 1]} : vector<32x2048xf32> to vector<4x128xf32>
    %556 = arith.truncf %555 : vector<4x128xf32> to vector<4x128xbf16>
    %c1_659 = arith.constant 1 : index
    %c2_660 = arith.constant 2 : index
    %c1_661 = arith.constant 1 : index
    %c3_662 = arith.constant 3 : index
    %c0_663 = arith.constant 0 : index
    %c0_664 = arith.constant 0 : index
    %557 = vector.load %arg5[%c1_659, %c2_660, %c1_661, %c3_662, %c0_663, %c0_664] : memref<2x4x4x4x4x128xbf16, #tpu.memory_space<vmem>>, vector<1x1x1x1x4x128xbf16>
    %558 = vector.shape_cast %557 : vector<1x1x1x1x4x128xbf16> to vector<4x128xbf16>
    %559 = vector.shape_cast %556 : vector<4x128xbf16> to vector<1x1x1x1x4x128xbf16>
    tpu.vector_store %arg5[%c1_659, %c2_660, %c1_661, %c3_662, %c0_663, %c0_664], %559 {strides = array<i32>} : memref<2x4x4x4x4x128xbf16, #tpu.memory_space<vmem>>, vector<1x1x1x1x4x128xbf16>,
    %560 = vector.extract_strided_slice %9 {offsets = [24, 1408], sizes = [4, 128], strides = [1, 1]} : vector<32x2048xf32> to vector<4x128xf32>
    %561 = arith.truncf %560 : vector<4x128xf32> to vector<4x128xbf16>
    %c1_665 = arith.constant 1 : index
    %c2_666 = arith.constant 2 : index
    %c2_667 = arith.constant 2 : index
    %c3_668 = arith.constant 3 : index
    %c0_669 = arith.constant 0 : index
    %c0_670 = arith.constant 0 : index
    %562 = vector.load %arg5[%c1_665, %c2_666, %c2_667, %c3_668, %c0_669, %c0_670] : memref<2x4x4x4x4x128xbf16, #tpu.memory_space<vmem>>, vector<1x1x1x1x4x128xbf16>
    %563 = vector.shape_cast %562 : vector<1x1x1x1x4x128xbf16> to vector<4x128xbf16>
    %564 = vector.shape_cast %561 : vector<4x128xbf16> to vector<1x1x1x1x4x128xbf16>
    tpu.vector_store %arg5[%c1_665, %c2_666, %c2_667, %c3_668, %c0_669, %c0_670], %564 {strides = array<i32>} : memref<2x4x4x4x4x128xbf16, #tpu.memory_space<vmem>>, vector<1x1x1x1x4x128xbf16>,
    %565 = vector.extract_strided_slice %9 {offsets = [28, 1408], sizes = [4, 128], strides = [1, 1]} : vector<32x2048xf32> to vector<4x128xf32>
    %566 = arith.truncf %565 : vector<4x128xf32> to vector<4x128xbf16>
    %c1_671 = arith.constant 1 : index
    %c2_672 = arith.constant 2 : index
    %c3_673 = arith.constant 3 : index
    %c3_674 = arith.constant 3 : index
    %c0_675 = arith.constant 0 : index
    %c0_676 = arith.constant 0 : index
    %567 = vector.load %arg5[%c1_671, %c2_672, %c3_673, %c3_674, %c0_675, %c0_676] : memref<2x4x4x4x4x128xbf16, #tpu.memory_space<vmem>>, vector<1x1x1x1x4x128xbf16>
    %568 = vector.shape_cast %567 : vector<1x1x1x1x4x128xbf16> to vector<4x128xbf16>
    %569 = vector.shape_cast %566 : vector<4x128xbf16> to vector<1x1x1x1x4x128xbf16>
    tpu.vector_store %arg5[%c1_671, %c2_672, %c3_673, %c3_674, %c0_675, %c0_676], %569 {strides = array<i32>} : memref<2x4x4x4x4x128xbf16, #tpu.memory_space<vmem>>, vector<1x1x1x1x4x128xbf16>,
    %570 = vector.extract_strided_slice %9 {offsets = [16, 1536], sizes = [4, 128], strides = [1, 1]} : vector<32x2048xf32> to vector<4x128xf32>
    %571 = arith.truncf %570 : vector<4x128xf32> to vector<4x128xbf16>
    %c1_677 = arith.constant 1 : index
    %c3_678 = arith.constant 3 : index
    %c0_679 = arith.constant 0 : index
    %c0_680 = arith.constant 0 : index
    %c0_681 = arith.constant 0 : index
    %c0_682 = arith.constant 0 : index
    %572 = vector.load %arg5[%c1_677, %c3_678, %c0_679, %c0_680, %c0_681, %c0_682] : memref<2x4x4x4x4x128xbf16, #tpu.memory_space<vmem>>, vector<1x1x1x1x4x128xbf16>
    %573 = vector.shape_cast %572 : vector<1x1x1x1x4x128xbf16> to vector<4x128xbf16>
    %574 = vector.shape_cast %571 : vector<4x128xbf16> to vector<1x1x1x1x4x128xbf16>
    tpu.vector_store %arg5[%c1_677, %c3_678, %c0_679, %c0_680, %c0_681, %c0_682], %574 {strides = array<i32>} : memref<2x4x4x4x4x128xbf16, #tpu.memory_space<vmem>>, vector<1x1x1x1x4x128xbf16>,
    %575 = vector.extract_strided_slice %9 {offsets = [20, 1536], sizes = [4, 128], strides = [1, 1]} : vector<32x2048xf32> to vector<4x128xf32>
    %576 = arith.truncf %575 : vector<4x128xf32> to vector<4x128xbf16>
    %c1_683 = arith.constant 1 : index
    %c3_684 = arith.constant 3 : index
    %c1_685 = arith.constant 1 : index
    %c0_686 = arith.constant 0 : index
    %c0_687 = arith.constant 0 : index
    %c0_688 = arith.constant 0 : index
    %577 = vector.load %arg5[%c1_683, %c3_684, %c1_685, %c0_686, %c0_687, %c0_688] : memref<2x4x4x4x4x128xbf16, #tpu.memory_space<vmem>>, vector<1x1x1x1x4x128xbf16>
    %578 = vector.shape_cast %577 : vector<1x1x1x1x4x128xbf16> to vector<4x128xbf16>
    %579 = vector.shape_cast %576 : vector<4x128xbf16> to vector<1x1x1x1x4x128xbf16>
    tpu.vector_store %arg5[%c1_683, %c3_684, %c1_685, %c0_686, %c0_687, %c0_688], %579 {strides = array<i32>} : memref<2x4x4x4x4x128xbf16, #tpu.memory_space<vmem>>, vector<1x1x1x1x4x128xbf16>,
    %580 = vector.extract_strided_slice %9 {offsets = [24, 1536], sizes = [4, 128], strides = [1, 1]} : vector<32x2048xf32> to vector<4x128xf32>
    %581 = arith.truncf %580 : vector<4x128xf32> to vector<4x128xbf16>
    %c1_689 = arith.constant 1 : index
    %c3_690 = arith.constant 3 : index
    %c2_691 = arith.constant 2 : index
    %c0_692 = arith.constant 0 : index
    %c0_693 = arith.constant 0 : index
    %c0_694 = arith.constant 0 : index
    %582 = vector.load %arg5[%c1_689, %c3_690, %c2_691, %c0_692, %c0_693, %c0_694] : memref<2x4x4x4x4x128xbf16, #tpu.memory_space<vmem>>, vector<1x1x1x1x4x128xbf16>
    %583 = vector.shape_cast %582 : vector<1x1x1x1x4x128xbf16> to vector<4x128xbf16>
    %584 = vector.shape_cast %581 : vector<4x128xbf16> to vector<1x1x1x1x4x128xbf16>
    tpu.vector_store %arg5[%c1_689, %c3_690, %c2_691, %c0_692, %c0_693, %c0_694], %584 {strides = array<i32>} : memref<2x4x4x4x4x128xbf16, #tpu.memory_space<vmem>>, vector<1x1x1x1x4x128xbf16>,
    %585 = vector.extract_strided_slice %9 {offsets = [28, 1536], sizes = [4, 128], strides = [1, 1]} : vector<32x2048xf32> to vector<4x128xf32>
    %586 = arith.truncf %585 : vector<4x128xf32> to vector<4x128xbf16>
    %c1_695 = arith.constant 1 : index
    %c3_696 = arith.constant 3 : index
    %c3_697 = arith.constant 3 : index
    %c0_698 = arith.constant 0 : index
    %c0_699 = arith.constant 0 : index
    %c0_700 = arith.constant 0 : index
    %587 = vector.load %arg5[%c1_695, %c3_696, %c3_697, %c0_698, %c0_699, %c0_700] : memref<2x4x4x4x4x128xbf16, #tpu.memory_space<vmem>>, vector<1x1x1x1x4x128xbf16>
    %588 = vector.shape_cast %587 : vector<1x1x1x1x4x128xbf16> to vector<4x128xbf16>
    %589 = vector.shape_cast %586 : vector<4x128xbf16> to vector<1x1x1x1x4x128xbf16>
    tpu.vector_store %arg5[%c1_695, %c3_696, %c3_697, %c0_698, %c0_699, %c0_700], %589 {strides = array<i32>} : memref<2x4x4x4x4x128xbf16, #tpu.memory_space<vmem>>, vector<1x1x1x1x4x128xbf16>,
    %590 = vector.extract_strided_slice %9 {offsets = [16, 1664], sizes = [4, 128], strides = [1, 1]} : vector<32x2048xf32> to vector<4x128xf32>
    %591 = arith.truncf %590 : vector<4x128xf32> to vector<4x128xbf16>
    %c1_701 = arith.constant 1 : index
    %c3_702 = arith.constant 3 : index
    %c0_703 = arith.constant 0 : index
    %c1_704 = arith.constant 1 : index
    %c0_705 = arith.constant 0 : index
    %c0_706 = arith.constant 0 : index
    %592 = vector.load %arg5[%c1_701, %c3_702, %c0_703, %c1_704, %c0_705, %c0_706] : memref<2x4x4x4x4x128xbf16, #tpu.memory_space<vmem>>, vector<1x1x1x1x4x128xbf16>
    %593 = vector.shape_cast %592 : vector<1x1x1x1x4x128xbf16> to vector<4x128xbf16>
    %594 = vector.shape_cast %591 : vector<4x128xbf16> to vector<1x1x1x1x4x128xbf16>
    tpu.vector_store %arg5[%c1_701, %c3_702, %c0_703, %c1_704, %c0_705, %c0_706], %594 {strides = array<i32>} : memref<2x4x4x4x4x128xbf16, #tpu.memory_space<vmem>>, vector<1x1x1x1x4x128xbf16>,
    %595 = vector.extract_strided_slice %9 {offsets = [20, 1664], sizes = [4, 128], strides = [1, 1]} : vector<32x2048xf32> to vector<4x128xf32>
    %596 = arith.truncf %595 : vector<4x128xf32> to vector<4x128xbf16>
    %c1_707 = arith.constant 1 : index
    %c3_708 = arith.constant 3 : index
    %c1_709 = arith.constant 1 : index
    %c1_710 = arith.constant 1 : index
    %c0_711 = arith.constant 0 : index
    %c0_712 = arith.constant 0 : index
    %597 = vector.load %arg5[%c1_707, %c3_708, %c1_709, %c1_710, %c0_711, %c0_712] : memref<2x4x4x4x4x128xbf16, #tpu.memory_space<vmem>>, vector<1x1x1x1x4x128xbf16>
    %598 = vector.shape_cast %597 : vector<1x1x1x1x4x128xbf16> to vector<4x128xbf16>
    %599 = vector.shape_cast %596 : vector<4x128xbf16> to vector<1x1x1x1x4x128xbf16>
    tpu.vector_store %arg5[%c1_707, %c3_708, %c1_709, %c1_710, %c0_711, %c0_712], %599 {strides = array<i32>} : memref<2x4x4x4x4x128xbf16, #tpu.memory_space<vmem>>, vector<1x1x1x1x4x128xbf16>,
    %600 = vector.extract_strided_slice %9 {offsets = [24, 1664], sizes = [4, 128], strides = [1, 1]} : vector<32x2048xf32> to vector<4x128xf32>
    %601 = arith.truncf %600 : vector<4x128xf32> to vector<4x128xbf16>
    %c1_713 = arith.constant 1 : index
    %c3_714 = arith.constant 3 : index
    %c2_715 = arith.constant 2 : index
    %c1_716 = arith.constant 1 : index
    %c0_717 = arith.constant 0 : index
    %c0_718 = arith.constant 0 : index
    %602 = vector.load %arg5[%c1_713, %c3_714, %c2_715, %c1_716, %c0_717, %c0_718] : memref<2x4x4x4x4x128xbf16, #tpu.memory_space<vmem>>, vector<1x1x1x1x4x128xbf16>
    %603 = vector.shape_cast %602 : vector<1x1x1x1x4x128xbf16> to vector<4x128xbf16>
    %604 = vector.shape_cast %601 : vector<4x128xbf16> to vector<1x1x1x1x4x128xbf16>
    tpu.vector_store %arg5[%c1_713, %c3_714, %c2_715, %c1_716, %c0_717, %c0_718], %604 {strides = array<i32>} : memref<2x4x4x4x4x128xbf16, #tpu.memory_space<vmem>>, vector<1x1x1x1x4x128xbf16>,
    %605 = vector.extract_strided_slice %9 {offsets = [28, 1664], sizes = [4, 128], strides = [1, 1]} : vector<32x2048xf32> to vector<4x128xf32>
    %606 = arith.truncf %605 : vector<4x128xf32> to vector<4x128xbf16>
    %c1_719 = arith.constant 1 : index
    %c3_720 = arith.constant 3 : index
    %c3_721 = arith.constant 3 : index
    %c1_722 = arith.constant 1 : index
    %c0_723 = arith.constant 0 : index
    %c0_724 = arith.constant 0 : index
    %607 = vector.load %arg5[%c1_719, %c3_720, %c3_721, %c1_722, %c0_723, %c0_724] : memref<2x4x4x4x4x128xbf16, #tpu.memory_space<vmem>>, vector<1x1x1x1x4x128xbf16>
    %608 = vector.shape_cast %607 : vector<1x1x1x1x4x128xbf16> to vector<4x128xbf16>
    %609 = vector.shape_cast %606 : vector<4x128xbf16> to vector<1x1x1x1x4x128xbf16>
    tpu.vector_store %arg5[%c1_719, %c3_720, %c3_721, %c1_722, %c0_723, %c0_724], %609 {strides = array<i32>} : memref<2x4x4x4x4x128xbf16, #tpu.memory_space<vmem>>, vector<1x1x1x1x4x128xbf16>,
    %610 = vector.extract_strided_slice %9 {offsets = [16, 1792], sizes = [4, 128], strides = [1, 1]} : vector<32x2048xf32> to vector<4x128xf32>
    %611 = arith.truncf %610 : vector<4x128xf32> to vector<4x128xbf16>
    %c1_725 = arith.constant 1 : index
    %c3_726 = arith.constant 3 : index
    %c0_727 = arith.constant 0 : index
    %c2_728 = arith.constant 2 : index
    %c0_729 = arith.constant 0 : index
    %c0_730 = arith.constant 0 : index
    %612 = vector.load %arg5[%c1_725, %c3_726, %c0_727, %c2_728, %c0_729, %c0_730] : memref<2x4x4x4x4x128xbf16, #tpu.memory_space<vmem>>, vector<1x1x1x1x4x128xbf16>
    %613 = vector.shape_cast %612 : vector<1x1x1x1x4x128xbf16> to vector<4x128xbf16>
    %614 = vector.shape_cast %611 : vector<4x128xbf16> to vector<1x1x1x1x4x128xbf16>
    tpu.vector_store %arg5[%c1_725, %c3_726, %c0_727, %c2_728, %c0_729, %c0_730], %614 {strides = array<i32>} : memref<2x4x4x4x4x128xbf16, #tpu.memory_space<vmem>>, vector<1x1x1x1x4x128xbf16>,
    %615 = vector.extract_strided_slice %9 {offsets = [20, 1792], sizes = [4, 128], strides = [1, 1]} : vector<32x2048xf32> to vector<4x128xf32>
    %616 = arith.truncf %615 : vector<4x128xf32> to vector<4x128xbf16>
    %c1_731 = arith.constant 1 : index
    %c3_732 = arith.constant 3 : index
    %c1_733 = arith.constant 1 : index
    %c2_734 = arith.constant 2 : index
    %c0_735 = arith.constant 0 : index
    %c0_736 = arith.constant 0 : index
    %617 = vector.load %arg5[%c1_731, %c3_732, %c1_733, %c2_734, %c0_735, %c0_736] : memref<2x4x4x4x4x128xbf16, #tpu.memory_space<vmem>>, vector<1x1x1x1x4x128xbf16>
    %618 = vector.shape_cast %617 : vector<1x1x1x1x4x128xbf16> to vector<4x128xbf16>
    %619 = vector.shape_cast %616 : vector<4x128xbf16> to vector<1x1x1x1x4x128xbf16>
    tpu.vector_store %arg5[%c1_731, %c3_732, %c1_733, %c2_734, %c0_735, %c0_736], %619 {strides = array<i32>} : memref<2x4x4x4x4x128xbf16, #tpu.memory_space<vmem>>, vector<1x1x1x1x4x128xbf16>,
    %620 = vector.extract_strided_slice %9 {offsets = [24, 1792], sizes = [4, 128], strides = [1, 1]} : vector<32x2048xf32> to vector<4x128xf32>
    %621 = arith.truncf %620 : vector<4x128xf32> to vector<4x128xbf16>
    %c1_737 = arith.constant 1 : index
    %c3_738 = arith.constant 3 : index
    %c2_739 = arith.constant 2 : index
    %c2_740 = arith.constant 2 : index
    %c0_741 = arith.constant 0 : index
    %c0_742 = arith.constant 0 : index
    %622 = vector.load %arg5[%c1_737, %c3_738, %c2_739, %c2_740, %c0_741, %c0_742] : memref<2x4x4x4x4x128xbf16, #tpu.memory_space<vmem>>, vector<1x1x1x1x4x128xbf16>
    %623 = vector.shape_cast %622 : vector<1x1x1x1x4x128xbf16> to vector<4x128xbf16>
    %624 = vector.shape_cast %621 : vector<4x128xbf16> to vector<1x1x1x1x4x128xbf16>
    tpu.vector_store %arg5[%c1_737, %c3_738, %c2_739, %c2_740, %c0_741, %c0_742], %624 {strides = array<i32>} : memref<2x4x4x4x4x128xbf16, #tpu.memory_space<vmem>>, vector<1x1x1x1x4x128xbf16>,
    %625 = vector.extract_strided_slice %9 {offsets = [28, 1792], sizes = [4, 128], strides = [1, 1]} : vector<32x2048xf32> to vector<4x128xf32>
    %626 = arith.truncf %625 : vector<4x128xf32> to vector<4x128xbf16>
    %c1_743 = arith.constant 1 : index
    %c3_744 = arith.constant 3 : index
    %c3_745 = arith.constant 3 : index
    %c2_746 = arith.constant 2 : index
    %c0_747 = arith.constant 0 : index
    %c0_748 = arith.constant 0 : index
    %627 = vector.load %arg5[%c1_743, %c3_744, %c3_745, %c2_746, %c0_747, %c0_748] : memref<2x4x4x4x4x128xbf16, #tpu.memory_space<vmem>>, vector<1x1x1x1x4x128xbf16>
    %628 = vector.shape_cast %627 : vector<1x1x1x1x4x128xbf16> to vector<4x128xbf16>
    %629 = vector.shape_cast %626 : vector<4x128xbf16> to vector<1x1x1x1x4x128xbf16>
    tpu.vector_store %arg5[%c1_743, %c3_744, %c3_745, %c2_746, %c0_747, %c0_748], %629 {strides = array<i32>} : memref<2x4x4x4x4x128xbf16, #tpu.memory_space<vmem>>, vector<1x1x1x1x4x128xbf16>,
    %630 = vector.extract_strided_slice %9 {offsets = [16, 1920], sizes = [4, 128], strides = [1, 1]} : vector<32x2048xf32> to vector<4x128xf32>
    %631 = arith.truncf %630 : vector<4x128xf32> to vector<4x128xbf16>
    %c1_749 = arith.constant 1 : index
    %c3_750 = arith.constant 3 : index
    %c0_751 = arith.constant 0 : index
    %c3_752 = arith.constant 3 : index
    %c0_753 = arith.constant 0 : index
    %c0_754 = arith.constant 0 : index
    %632 = vector.load %arg5[%c1_749, %c3_750, %c0_751, %c3_752, %c0_753, %c0_754] : memref<2x4x4x4x4x128xbf16, #tpu.memory_space<vmem>>, vector<1x1x1x1x4x128xbf16>
    %633 = vector.shape_cast %632 : vector<1x1x1x1x4x128xbf16> to vector<4x128xbf16>
    %634 = vector.shape_cast %631 : vector<4x128xbf16> to vector<1x1x1x1x4x128xbf16>
    tpu.vector_store %arg5[%c1_749, %c3_750, %c0_751, %c3_752, %c0_753, %c0_754], %634 {strides = array<i32>} : memref<2x4x4x4x4x128xbf16, #tpu.memory_space<vmem>>, vector<1x1x1x1x4x128xbf16>,
    %635 = vector.extract_strided_slice %9 {offsets = [20, 1920], sizes = [4, 128], strides = [1, 1]} : vector<32x2048xf32> to vector<4x128xf32>
    %636 = arith.truncf %635 : vector<4x128xf32> to vector<4x128xbf16>
    %c1_755 = arith.constant 1 : index
    %c3_756 = arith.constant 3 : index
    %c1_757 = arith.constant 1 : index
    %c3_758 = arith.constant 3 : index
    %c0_759 = arith.constant 0 : index
    %c0_760 = arith.constant 0 : index
    %637 = vector.load %arg5[%c1_755, %c3_756, %c1_757, %c3_758, %c0_759, %c0_760] : memref<2x4x4x4x4x128xbf16, #tpu.memory_space<vmem>>, vector<1x1x1x1x4x128xbf16>
    %638 = vector.shape_cast %637 : vector<1x1x1x1x4x128xbf16> to vector<4x128xbf16>
    %639 = vector.shape_cast %636 : vector<4x128xbf16> to vector<1x1x1x1x4x128xbf16>
    tpu.vector_store %arg5[%c1_755, %c3_756, %c1_757, %c3_758, %c0_759, %c0_760], %639 {strides = array<i32>} : memref<2x4x4x4x4x128xbf16, #tpu.memory_space<vmem>>, vector<1x1x1x1x4x128xbf16>,
    %640 = vector.extract_strided_slice %9 {offsets = [24, 1920], sizes = [4, 128], strides = [1, 1]} : vector<32x2048xf32> to vector<4x128xf32>
    %641 = arith.truncf %640 : vector<4x128xf32> to vector<4x128xbf16>
    %c1_761 = arith.constant 1 : index
    %c3_762 = arith.constant 3 : index
    %c2_763 = arith.constant 2 : index
    %c3_764 = arith.constant 3 : index
    %c0_765 = arith.constant 0 : index
    %c0_766 = arith.constant 0 : index
    %642 = vector.load %arg5[%c1_761, %c3_762, %c2_763, %c3_764, %c0_765, %c0_766] : memref<2x4x4x4x4x128xbf16, #tpu.memory_space<vmem>>, vector<1x1x1x1x4x128xbf16>
    %643 = vector.shape_cast %642 : vector<1x1x1x1x4x128xbf16> to vector<4x128xbf16>
    %644 = vector.shape_cast %641 : vector<4x128xbf16> to vector<1x1x1x1x4x128xbf16>
    tpu.vector_store %arg5[%c1_761, %c3_762, %c2_763, %c3_764, %c0_765, %c0_766], %644 {strides = array<i32>} : memref<2x4x4x4x4x128xbf16, #tpu.memory_space<vmem>>, vector<1x1x1x1x4x128xbf16>,
    %645 = vector.extract_strided_slice %9 {offsets = [28, 1920], sizes = [4, 128], strides = [1, 1]} : vector<32x2048xf32> to vector<4x128xf32>
    %646 = arith.truncf %645 : vector<4x128xf32> to vector<4x128xbf16>
    %c1_767 = arith.constant 1 : index
    %c3_768 = arith.constant 3 : index
    %c3_769 = arith.constant 3 : index
    %c3_770 = arith.constant 3 : index
    %c0_771 = arith.constant 0 : index
    %c0_772 = arith.constant 0 : index
    %647 = vector.load %arg5[%c1_767, %c3_768, %c3_769, %c3_770, %c0_771, %c0_772] : memref<2x4x4x4x4x128xbf16, #tpu.memory_space<vmem>>, vector<1x1x1x1x4x128xbf16>
    %648 = vector.shape_cast %647 : vector<1x1x1x1x4x128xbf16> to vector<4x128xbf16>
    %649 = vector.shape_cast %646 : vector<4x128xbf16> to vector<1x1x1x1x4x128xbf16>
    tpu.vector_store %arg5[%c1_767, %c3_768, %c3_769, %c3_770, %c0_771, %c0_772], %649 {strides = array<i32>} : memref<2x4x4x4x4x128xbf16, #tpu.memory_space<vmem>>, vector<1x1x1x1x4x128xbf16>,
    return
  }
  func.func @transform_0(%arg0: i32, %arg1: i32) -> (i32, i32) {
    %c0_i32 = arith.constant 0 : i32
    %c0_i32_0 = arith.constant 0 : i32
    return %arg1, %c0_i32 : i32, i32
  }
  func.func @transform_1(%arg0: i32, %arg1: i32) -> (i32, i32, i32) {
    %c0_i32 = arith.constant 0 : i32
    %c0_i32_0 = arith.constant 0 : i32
    %c0_i32_1 = arith.constant 0 : i32
    return %arg0, %c0_i32, %c0_i32_0 : i32, i32, i32
  }
  func.func @transform_2(%arg0: i32, %arg1: i32) -> (i32, i32, i32) {
    %c0_i32 = arith.constant 0 : i32
    %c0_i32_0 = arith.constant 0 : i32
    %c0_i32_1 = arith.constant 0 : i32
    return %arg0, %c0_i32, %c0_i32_0 : i32, i32, i32
  }
  func.func @transform_3(%arg0: i32, %arg1: i32) -> (i32, i32, i32, i32, i32, i32) {
    %c0_i32 = arith.constant 0 : i32
    %c0_i32_0 = arith.constant 0 : i32
    %c0_i32_1 = arith.constant 0 : i32
    %c0_i32_2 = arith.constant 0 : i32
    %c0_i32_3 = arith.constant 0 : i32
    return %arg1, %arg0, %c0_i32, %c0_i32_0, %c0_i32_1, %c0_i32_2 : i32, i32, i32, i32, i32, i32
  }
}

</mosaic_0001>

<llo_original>
// kernel: tpu_custom_call.1
$region0: #{tpu_custom_call.1}
  #allocation0 [shape = 'u32[]', space=smem, size = 0x4, offset = 0x4, fixed_abs, tag = 'smem constant byte address 0x4 - core index']
  #allocation1 [shape = 'u32[144,128]{1,0:T(1,128)}', space=vmem, size = 0x12000, scoped, tag = 'internal scratch']
  %s0 = inlined_call_operand.vmem [shape: bf16[128,32], index: 0, kind: input, shape index: {}]
  %s1 = inlined_call_operand.hbm [shape: bf16[1,32,2048], index: 1, kind: input, shape index: {}]
  %s2 = inlined_call_operand.vmem [shape: f32[1,1,2048], index: 2, kind: input, shape index: {}]
  %s3 = inlined_call_operand.hbm [shape: bf16[8,4,4,4,4,128], index: 3, kind: output, shape index: {}]
  %s4 = sld [smem:[#allocation0]]
  $region49: #{tpu_custom_call.1} parent=0
    _
  %s6 = ssub.s32 1, %s4
  %s7 = scalar_select 0, %s6, %s4
  $region1: #{tpu_custom_call.1} parent=0
    #allocation2 [shape = 'u8[131072]{0}', space=vmem, size = 0x20000, scoped, tag = 'input window, operand 1, single buffered']
    #allocation3 [shape = 's32[2]{0}', space=sflag, size = 0x8, scoped, tag = 'scoped memory for tpu_custom_call.1']
    #allocation4 [shape = 's32[2]{0}', space=sflag, size = 0x8, scoped, tag = 'scoped memory for tpu_custom_call.1']
    #allocation5 [shape = 'u8[262144]{0}', space=vmem, size = 0x40000, scoped, tag = 'output window, operand 0']
    %8 = vsyncpa [#allocation3], 0
    %9 = vsyncpa [#allocation4], 0
    %s10 = scalar_lea.sflag [#allocation4], 1
    %11 = vsyncpa %s10, 0
    loop: start=0, step=1, limit=6
    $region2: #{tpu_custom_call.1} parent=1 // loop_pre_header
      _
    $region3: #{tpu_custom_call.1} parent=1 // loop_header
      %s13 = sphi 0, %s17
      %p14 = scmp.ge.s32.totalorder %s13, 6
      %s20 = sphi 0, %s32
      %s21 = sphi 0, %s28
      %s22 = sphi 0, %s20
      %s23 = sphi 0, %s21
      %s24 = sphi 0, %s22
      %s25 = sphi 0, %s23
      %s35 = sphi 0, %s37
      %s38 = sphi 0, %s35
      %s39 = sphi 0, %s38
      %s55 = sphi 0, %s39
      %s61 = sphi 0, %s63
      %s64 = sphi 0, %s61
      %s65 = sphi 0, %s64
      %s81 = sphi 0, %s65
      %s87 = sphi 0, %s89
      %s90 = sphi 0, %s87
      %s91 = sphi 0, %s90
      %s107 = sphi 0, %s91
      %s115 = sphi 0, %s117
      %s118 = sphi 0, %s115
      %s119 = sphi 0, %s118
      %s135 = sphi 0, %s119
    $region4: #{tpu_custom_call.1} parent=1 // loop_header_branch
      %16 = sbr.rel (%p14) target = $region8
    $region5: #{tpu_custom_call.1} parent=1 // loop_body
      %s18 = ssub.s32 %s13, 1
      %s19 = ssub.s32 %s13, 2
      %s26 = sadd.s32 1, %s21
      %p27 = scmp.ge.s32.totalorder %s26, 4
      %s28 = scalar_select %p27, 0, %s26
      %s29 = sadd.s32 1, %s20
      %s30 = scalar_select %p27, %s29, %s20
      %p31 = scmp.ge.s32.totalorder %s30, 1
      %s32 = scalar_select %p31, 0, %s30
      %s33 = ssub.s32 %s21, %s28
      %p34 = scmp.eq.s32.totalorder %s33, 0
      %s36 = sadd.s32 %s35, 1
      %s37 = scalar_select %p34, %s35, %s36
      %p40 = pneg %p34
      %p41 = scmp.eq.s32.totalorder %s13, 3
      %p42 = por %p40, %p41
      %p43 = scmp.ne.s32.totalorder %s35, %s38
      %p44 = scmp.eq.s32.totalorder %s13, 0
      %p45 = por %p43, %p44
      %p46 = scmp.ne.s32.totalorder %s35, %s38
      %p47 = scmp.eq.s32.totalorder %s18, 3
      %p48 = por %p46, %p47
      %p49 = scmp.ne.s32.totalorder %s38, %s39
      %p50 = scmp.eq.s32.totalorder %s18, 0
      %p51 = por %p49, %p50
      %p52 = scmp.ne.s32.totalorder %s38, %s39
      %p53 = scmp.eq.s32.totalorder %s19, 3
      %p54 = por %p52, %p53
      %p56 = scmp.ne.s32.totalorder %s39, %s55
      %p57 = scmp.eq.s32.totalorder %s19, 0
      %p58 = por %p56, %p57
      %s59 = ssub.s32 %s20, %s32
      %p60 = scmp.eq.s32.totalorder %s59, 0
      %s62 = sadd.s32 %s61, 1
      %s63 = scalar_select %p60, %s61, %s62
      %p66 = pneg %p60
      %p67 = scmp.eq.s32.totalorder %s13, 3
      %p68 = por %p66, %p67
      %p69 = scmp.ne.s32.totalorder %s61, %s64
      %p70 = scmp.eq.s32.totalorder %s13, 0
      %p71 = por %p69, %p70
      %p72 = scmp.ne.s32.totalorder %s61, %s64
      %p73 = scmp.eq.s32.totalorder %s18, 3
      %p74 = por %p72, %p73
      %p75 = scmp.ne.s32.totalorder %s64, %s65
      %p76 = scmp.eq.s32.totalorder %s18, 0
      %p77 = por %p75, %p76
      %p78 = scmp.ne.s32.totalorder %s64, %s65
      %p79 = scmp.eq.s32.totalorder %s19, 3
      %p80 = por %p78, %p79
      %p82 = scmp.ne.s32.totalorder %s65, %s81
      %p83 = scmp.eq.s32.totalorder %s19, 0
      %p84 = por %p82, %p83
      %s85 = ssub.s32 %s20, %s32
      %p86 = scmp.eq.s32.totalorder %s85, 0
      %s88 = sadd.s32 %s87, 1
      %s89 = scalar_select %p86, %s87, %s88
      %p92 = pneg %p86
      %p93 = scmp.eq.s32.totalorder %s13, 3
      %p94 = por %p92, %p93
      %p95 = scmp.ne.s32.totalorder %s87, %s90
      %p96 = scmp.eq.s32.totalorder %s13, 0
      %p97 = por %p95, %p96
      %p98 = scmp.ne.s32.totalorder %s87, %s90
      %p99 = scmp.eq.s32.totalorder %s18, 3
      %p100 = por %p98, %p99
      %p101 = scmp.ne.s32.totalorder %s90, %s91
      %p102 = scmp.eq.s32.totalorder %s18, 0
      %p103 = por %p101, %p102
      %p104 = scmp.ne.s32.totalorder %s90, %s91
      %p105 = scmp.eq.s32.totalorder %s19, 3
      %p106 = por %p104, %p105
      %p108 = scmp.ne.s32.totalorder %s91, %s107
      %p109 = scmp.eq.s32.totalorder %s19, 0
      %p110 = por %p108, %p109
      %s111 = ssub.s32 %s21, %s28
      %s112 = ssub.s32 %s20, %s32
      %s113 = sor.u32 %s111, %s112
      %p114 = scmp.eq.s32.totalorder %s113, 0
      %s116 = sadd.s32 %s115, 1
      %s117 = scalar_select %p114, %s115, %s116
      %p120 = pneg %p114
      %p121 = scmp.eq.s32.totalorder %s13, 3
      %p122 = por %p120, %p121
      %p123 = scmp.ne.s32.totalorder %s115, %s118
      %p124 = scmp.eq.s32.totalorder %s13, 0
      %p125 = por %p123, %p124
      %p126 = scmp.ne.s32.totalorder %s115, %s118
      %p127 = scmp.eq.s32.totalorder %s18, 3
      %p128 = por %p126, %p127
      %p129 = scmp.ne.s32.totalorder %s118, %s119
      %p130 = scmp.eq.s32.totalorder %s18, 0
      %p131 = por %p129, %p130
      %p132 = scmp.ne.s32.totalorder %s118, %s119
      %p133 = scmp.eq.s32.totalorder %s19, 3
      %p134 = por %p132, %p133
      %p136 = scmp.ne.s32.totalorder %s119, %s135
      %p137 = scmp.eq.s32.totalorder %s19, 0
      %p138 = por %p136, %p137
      %p139 = scmp.le.s32.totalorder 1, %s13
      %p140 = scmp.lt.s32.totalorder %s13, 5
      %p141 = pnand %p139, %p140
      %p142 = pneg %p141
      // Predicated region
      $region9: #{tpu_custom_call.1} parent=5 // pred_check
        _
      $region10: #{tpu_custom_call.1} parent=5 // pred_check_branch
        %144 = sbr.rel (%p141) target = $region12
      $region11: #{tpu_custom_call.1} parent=5 // pred_region
        %s145 = ssub.s32 %s13, 1
        // Predicated region
        $region13: #{tpu_custom_call.1} parent=11 // pred_check
          %p146 = pneg %p77
        $region14: #{tpu_custom_call.1} parent=11 // pred_check_branch
          %148 = sbr.rel (%p146) target = $region16
        $region15: #{tpu_custom_call.1} parent=11 // pred_region
          %s150 = ssub.s32 4096, 4096
          %151 = vsyncadd [#allocation3], %s150
          %s152 = smul.addr %s22, 64
          %s153 = smul.addr %s152, 64
          %s154 = scalar_lea.hbm %s1, %s153
          %s155 = sshll.u32 [#allocation2], 4
          %s156 = int_to_ptr.vmem [resolvable:$true] %s155
          %161 = dma.hbm_to_vmem [thread:$0]  %s154, 4096, %s156, [#allocation3], 1024, 1024, 64
        $region16: #{tpu_custom_call.1} parent=11 // pred_fallthru
          _
        // Predicated region
        $region17: #{tpu_custom_call.1} parent=11 // pred_check
          %p162 = pneg %p103
        $region18: #{tpu_custom_call.1} parent=11 // pred_check_branch
          %164 = sbr.rel (%p162) target = $region20
        $region19: #{tpu_custom_call.1} parent=11 // pred_region
          %p165 = scmp.lt.s32.totalorder %s22, 0
          %s166 = scalar_select %p165, %s22, 0
          %s167 = smul.addr %s166, 16
          %s168 = scalar_lea.vmem %s2, %s167
        $region20: #{tpu_custom_call.1} parent=11 // pred_fallthru
          _
      $region12: #{tpu_custom_call.1} parent=5 // pred_fallthru
        _
      %p169 = scmp.lt.s32.totalorder %s13, 4
      // Predicated region
      $region21: #{tpu_custom_call.1} parent=5 // pred_check
        %p170 = pneg %p169
      $region22: #{tpu_custom_call.1} parent=5 // pred_check_branch
        %172 = sbr.rel (%p170) target = $region24
      $region23: #{tpu_custom_call.1} parent=5 // pred_region
        // Predicated region
        $region25: #{tpu_custom_call.1} parent=23 // pred_check
          %p173 = pneg %p45
        $region26: #{tpu_custom_call.1} parent=23 // pred_check_branch
          %175 = sbr.rel (%p173) target = $region28
        $region27: #{tpu_custom_call.1} parent=23 // pred_region
          %s176 = smul.u32 4, %s21
          %p177 = scmp.lt.s32.totalorder %s176, 15
          %s178 = scalar_select %p177, %s176, 15
          %s179 = smul.addr %s178, 4
          %s180 = scalar_lea.vmem %s0, %s179
          %s181 = smul.u32 4, %s21
        $region28: #{tpu_custom_call.1} parent=23 // pred_fallthru
          _
      $region24: #{tpu_custom_call.1} parent=5 // pred_fallthru
        _
      %p182 = scmp.le.s32.totalorder 1, %s13
      %p183 = scmp.lt.s32.totalorder %s13, 5
      %p184 = pnand %p182, %p183
      %p185 = pneg %p184
      // Predicated region
      $region29: #{tpu_custom_call.1} parent=5 // pred_check
        _
      $region30: #{tpu_custom_call.1} parent=5 // pred_check_branch
        %187 = sbr.rel (%p184) target = $region32
      $region31: #{tpu_custom_call.1} parent=5 // pred_region
        %s188 = ssub.s32 %s13, 1
        // Predicated region
        $region33: #{tpu_custom_call.1} parent=31 // pred_check
          %p189 = pneg %p77
        $region34: #{tpu_custom_call.1} parent=31 // pred_check_branch
          %191 = sbr.rel (%p189) target = $region36
        $region35: #{tpu_custom_call.1} parent=31 // pred_region
          %192 = dma.done [#allocation3], 4096
        $region36: #{tpu_custom_call.1} parent=31 // pred_fallthru
          _
        %s193 = smul.u32 4, %s23
        %p194 = scmp.lt.s32.totalorder %s193, 15
        %s195 = scalar_select %p194, %s193, 15
        %s196 = smul.addr %s195, 4
        %s197 = scalar_lea.vmem %s0, %s196
        %p198 = pneg %p51
        %p199 = pneg %p48
        %p200 = pneg %p77
        %p201 = pneg %p74
        %p202 = scmp.lt.s32.totalorder %s22, 0
        %s203 = scalar_select %p202, %s22, 0
        %s204 = smul.addr %s203, 16
        %s205 = scalar_lea.vmem %s2, %s204
        %p206 = pneg %p103
        %p207 = pneg %p100
        %p208 = pneg %p131
        %p209 = pneg %p128
        %s210 = sand.u32 %s118, 1
        %s211 = scalar_lea.sflag [#allocation4], %s210
        %s212 = sand.u32 %s118, 1
        %s213 = smul.addr %s212, 256
        %s214 = scalar_lea.vmem [#allocation5], %s213
        %s215 = smul.u32 4, %s23
        %p216 = scmp.lt.s32.totalorder %s215, 15
        %s217 = scalar_select %p216, %s215, 15
        %s218 = smul.addr %s217, 4
        %s219 = scalar_lea.vmem %s0, %s218
        %s220 = smul.u32 4, %s23
        %p221 = scmp.lt.s32.totalorder %s22, 0
        %s222 = scalar_select %p221, %s22, 0
        %s223 = smul.addr %s222, 16
        %s224 = scalar_lea.vmem %s2, %s223
        %s225 = smul.u32 2, %s23
        %s226 = smul.u32 4, %s22
        %v228 = vld [vmem:[%s219] sm:$0xf]
        %v229 = vld [vmem:[%s219 + $0x4] sm:$0xf]
        %v230 = vld [vmem:[%s219 + $0x8] sm:$0xf]
        %v231 = vld [vmem:[%s219 + $0xc] sm:$0xf]
        %v232 = vld [vmem:[#allocation2] sm:$0xff]
        %v233 = vld [vmem:[#allocation2 + $0x8] sm:$0xff]
        %v234 = vld [vmem:[#allocation2 + $0x10] sm:$0xff]
        %v235 = vld [vmem:[#allocation2 + $0x18] sm:$0xff]
        %v236 = vld [vmem:[#allocation2 + $0x20] sm:$0xff]
        %v237 = vld [vmem:[#allocation2 + $0x28] sm:$0xff]
        %v238 = vld [vmem:[#allocation2 + $0x30] sm:$0xff]
        %v239 = vld [vmem:[#allocation2 + $0x38] sm:$0xff]
        %v240 = vld [vmem:[#allocation2 + $0x40] sm:$0xff]
        %v241 = vld [vmem:[#allocation2 + $0x48] sm:$0xff]
        %v242 = vld [vmem:[#allocation2 + $0x50] sm:$0xff]
        %v243 = vld [vmem:[#allocation2 + $0x58] sm:$0xff]
        %v244 = vld [vmem:[#allocation2 + $0x60] sm:$0xff]
        %v245 = vld [vmem:[#allocation2 + $0x68] sm:$0xff]
        %v246 = vld [vmem:[#allocation2 + $0x70] sm:$0xff]
        %v247 = vld [vmem:[#allocation2 + $0x78] sm:$0xff]
        %v248 = vld [vmem:[#allocation2 + $0x80] sm:$0xff]
        %v249 = vld [vmem:[#allocation2 + $0x88] sm:$0xff]
        %v250 = vld [vmem:[#allocation2 + $0x90] sm:$0xff]
        %v251 = vld [vmem:[#allocation2 + $0x98] sm:$0xff]
        %v252 = vld [vmem:[#allocation2 + $0xa0] sm:$0xff]
        %v253 = vld [vmem:[#allocation2 + $0xa8] sm:$0xff]
        %v254 = vld [vmem:[#allocation2 + $0xb0] sm:$0xff]
        %v255 = vld [vmem:[#allocation2 + $0xb8] sm:$0xff]
        %v256 = vld [vmem:[#allocation2 + $0xc0] sm:$0xff]
        %v257 = vld [vmem:[#allocation2 + $0xc8] sm:$0xff]
        %v258 = vld [vmem:[#allocation2 + $0xd0] sm:$0xff]
        %v259 = vld [vmem:[#allocation2 + $0xd8] sm:$0xff]
        %v260 = vld [vmem:[#allocation2 + $0xe0] sm:$0xff]
        %v261 = vld [vmem:[#allocation2 + $0xe8] sm:$0xff]
        %v262 = vld [vmem:[#allocation2 + $0xf0] sm:$0xff]
        %v263 = vld [vmem:[#allocation2 + $0xf8] sm:$0xff]
        %v264 = vld [vmem:[%s224] sm:$0xff]
        %v265 = vld [vmem:[%s224 + $0x8] sm:$0xff]
        %v268 = vlaneseq
        %v269 = vshrl.u32 %v268, 7
        %v270 = vsub.s32 0, %v269
        %v271 = vrot.slane %v264, %v270
        %v272 = vlaneseq
        %v273 = vshrl.u32 %v272, 7
        %v274 = vsub.s32 1, %v273
        %v275 = vrot.slane %v264, %v274
        %v276 = vlaneseq
        %v277 = vshrl.u32 %v276, 7
        %v278 = vsub.s32 2, %v277
        %v279 = vrot.slane %v264, %v278
        %v280 = vlaneseq
        %v281 = vshrl.u32 %v280, 7
        %v282 = vsub.s32 3, %v281
        %v283 = vrot.slane %v264, %v282
        %v284 = vlaneseq
        %v285 = vshrl.u32 %v284, 7
        %v286 = vsub.s32 4, %v285
        %v287 = vrot.slane %v264, %v286
        %v288 = vlaneseq
        %v289 = vshrl.u32 %v288, 7
        %v290 = vsub.s32 5, %v289
        %v291 = vrot.slane %v264, %v290
        %v292 = vlaneseq
        %v293 = vshrl.u32 %v292, 7
        %v294 = vsub.s32 6, %v293
        %v295 = vrot.slane %v264, %v294
        %v296 = vlaneseq
        %v297 = vshrl.u32 %v296, 7
        %v298 = vsub.s32 7, %v297
        %v299 = vrot.slane %v264, %v298
        %v300 = vlaneseq
        %v301 = vshrl.u32 %v300, 7
        %v302 = vsub.s32 0, %v301
        %v303 = vrot.slane %v265, %v302
        %v304 = vlaneseq
        %v305 = vshrl.u32 %v304, 7
        %v306 = vsub.s32 1, %v305
        %v307 = vrot.slane %v265, %v306
        %v308 = vlaneseq
        %v309 = vshrl.u32 %v308, 7
        %v310 = vsub.s32 2, %v309
        %v311 = vrot.slane %v265, %v310
        %v312 = vlaneseq
        %v313 = vshrl.u32 %v312, 7
        %v314 = vsub.s32 3, %v313
        %v315 = vrot.slane %v265, %v314
        %v316 = vlaneseq
        %v317 = vshrl.u32 %v316, 7
        %v318 = vsub.s32 4, %v317
        %v319 = vrot.slane %v265, %v318
        %v320 = vlaneseq
        %v321 = vshrl.u32 %v320, 7
        %v322 = vsub.s32 5, %v321
        %v323 = vrot.slane %v265, %v322
        %v324 = vlaneseq
        %v325 = vshrl.u32 %v324, 7
        %v326 = vsub.s32 6, %v325
        %v327 = vrot.slane %v265, %v326
        %v328 = vlaneseq
        %v329 = vshrl.u32 %v328, 7
        %v330 = vsub.s32 7, %v329
        %v331 = vrot.slane %v265, %v330
        %v352 = vunpack.c.l.b16 %v228
        %v353 = vunpack.c.l.b16 %v229
        %v354 = vunpack.c.l.b16 %v230
        %v355 = vunpack.c.l.b16 %v231
        %v356 = vpack.c.b16 %v353, %v352
        %v357 = vpack.c.b16 %v355, %v354
        %v390 = vunpack.c.l.b16 %v232
        %v391 = vunpack.c.h.b16 %v232
        %v392 = vunpack.c.l.b16 %v233
        %v393 = vunpack.c.h.b16 %v233
        %v394 = vunpack.c.l.b16 %v234
        %v395 = vunpack.c.h.b16 %v234
        %v396 = vunpack.c.l.b16 %v235
        %v397 = vunpack.c.h.b16 %v235
        %v398 = vunpack.c.l.b16 %v236
        %v399 = vunpack.c.h.b16 %v236
        %v400 = vunpack.c.l.b16 %v237
        %v401 = vunpack.c.h.b16 %v237
        %v402 = vunpack.c.l.b16 %v238
        %v403 = vunpack.c.h.b16 %v238
        %v404 = vunpack.c.l.b16 %v239
        %v405 = vunpack.c.h.b16 %v239
        %v406 = vunpack.c.l.b16 %v240
        %v407 = vunpack.c.h.b16 %v240
        %v408 = vunpack.c.l.b16 %v241
        %v409 = vunpack.c.h.b16 %v241
        %v410 = vunpack.c.l.b16 %v242
        %v411 = vunpack.c.h.b16 %v242
        %v412 = vunpack.c.l.b16 %v243
        %v413 = vunpack.c.h.b16 %v243
        %v414 = vunpack.c.l.b16 %v244
        %v415 = vunpack.c.h.b16 %v244
        %v416 = vunpack.c.l.b16 %v245
        %v417 = vunpack.c.h.b16 %v245
        %v418 = vunpack.c.l.b16 %v246
        %v419 = vunpack.c.h.b16 %v246
        %v420 = vunpack.c.l.b16 %v247
        %v421 = vunpack.c.h.b16 %v247
        %v422 = vunpack.c.l.b16 %v248
        %v423 = vunpack.c.h.b16 %v248
        %v424 = vunpack.c.l.b16 %v249
        %v425 = vunpack.c.h.b16 %v249
        %v426 = vunpack.c.l.b16 %v250
        %v427 = vunpack.c.h.b16 %v250
        %v428 = vunpack.c.l.b16 %v251
        %v429 = vunpack.c.h.b16 %v251
        %v430 = vunpack.c.l.b16 %v252
        %v431 = vunpack.c.h.b16 %v252
        %v432 = vunpack.c.l.b16 %v253
        %v433 = vunpack.c.h.b16 %v253
        %v434 = vunpack.c.l.b16 %v254
        %v435 = vunpack.c.h.b16 %v254
        %v436 = vunpack.c.l.b16 %v255
        %v437 = vunpack.c.h.b16 %v255
        %v438 = vunpack.c.l.b16 %v256
        %v439 = vunpack.c.h.b16 %v256
        %v440 = vunpack.c.l.b16 %v257
        %v441 = vunpack.c.h.b16 %v257
        %v442 = vunpack.c.l.b16 %v258
        %v443 = vunpack.c.h.b16 %v258
        %v444 = vunpack.c.l.b16 %v259
        %v445 = vunpack.c.h.b16 %v259
        %v446 = vunpack.c.l.b16 %v260
        %v447 = vunpack.c.h.b16 %v260
        %v448 = vunpack.c.l.b16 %v261
        %v449 = vunpack.c.h.b16 %v261
        %v450 = vunpack.c.l.b16 %v262
        %v451 = vunpack.c.h.b16 %v262
        %v452 = vunpack.c.l.b16 %v263
        %v453 = vunpack.c.h.b16 %v263
        %v454 = vpack.c.b16 %v406, %v390
        %v455 = vpack.c.b16 %v407, %v391
        %v456 = vpack.c.b16 %v408, %v392
        %v457 = vpack.c.b16 %v409, %v393
        %v458 = vpack.c.b16 %v410, %v394
        %v459 = vpack.c.b16 %v411, %v395
        %v460 = vpack.c.b16 %v412, %v396
        %v461 = vpack.c.b16 %v413, %v397
        %v462 = vpack.c.b16 %v414, %v398
        %v463 = vpack.c.b16 %v415, %v399
        %v464 = vpack.c.b16 %v416, %v400
        %v465 = vpack.c.b16 %v417, %v401
        %v466 = vpack.c.b16 %v418, %v402
        %v467 = vpack.c.b16 %v419, %v403
        %v468 = vpack.c.b16 %v420, %v404
        %v469 = vpack.c.b16 %v421, %v405
        %v470 = vpack.c.b16 %v438, %v422
        %v471 = vpack.c.b16 %v439, %v423
        %v472 = vpack.c.b16 %v440, %v424
        %v473 = vpack.c.b16 %v441, %v425
        %v474 = vpack.c.b16 %v442, %v426
        %v475 = vpack.c.b16 %v443, %v427
        %v476 = vpack.c.b16 %v444, %v428
        %v477 = vpack.c.b16 %v445, %v429
        %v478 = vpack.c.b16 %v446, %v430
        %v479 = vpack.c.b16 %v447, %v431
        %v480 = vpack.c.b16 %v448, %v432
        %v481 = vpack.c.b16 %v449, %v433
        %v482 = vpack.c.b16 %v450, %v434
        %v483 = vpack.c.b16 %v451, %v435
        %v484 = vpack.c.b16 %v452, %v436
        %v485 = vpack.c.b16 %v453, %v437
        %vm518 = vcmask 261120
        %v520 = vsel %vm518, %v356, 0
        %v523 = vsel %vm518, %v357, 0
        %525 = vmatprep.subr.bf16.mxu0 0
        %526 = vmatpush1.bf16.msra.mxu0 0
        %527 = vmatprep.subr.bf16.mxu0 0
        %528 = vmatpush1.bf16.msra.mxu0 0
        %529 = vmatprep.subr.bf16.mxu0 0
        %530 = vmatpush1.bf16.msra.mxu0 0
        %531 = vmatprep.subr.bf16.mxu0 0
        %532 = vmatpush1.bf16.msra.mxu0 0
        %533 = vmatprep.subr.bf16.mxu0 0
        %534 = vmatpush1.bf16.msra.mxu0 0
        %535 = vmatprep.subr.bf16.mxu0 0
        %536 = vmatpush1.bf16.msra.mxu0 0
        %537 = vmatprep.subr.bf16.mxu0 %v471
        %538 = vmatpush1.bf16.msra.mxu0 %v470
        %539 = vmatprep.subr.bf16.mxu0 %v455
        %540 = vmatpush1.bf16.msra.mxu0 %v454
        %541 = vmatprep.subr.bf16.mxu0 0
        %542 = vmatpush2.bf16.msra.mxu0 0
        %543 = vmatprep.subr.bf16.mxu0 0
        %544 = vmatpush2.bf16.msra.mxu0 0
        %545 = vmatprep.subr.bf16.mxu0 0
        %546 = vmatpush2.bf16.msra.mxu0 0
        %547 = vmatprep.subr.bf16.mxu0 0
        %548 = vmatpush2.bf16.msra.mxu0 0
        %549 = vmatprep.subr.bf16.mxu0 0
        %550 = vmatpush2.bf16.msra.mxu0 0
        %551 = vmatprep.subr.bf16.mxu0 0
        %552 = vmatpush2.bf16.msra.mxu0 0
        %553 = vmatprep.subr.bf16.mxu0 0
        %554 = vmatpush2.bf16.msra.mxu0 0
        %555 = vmatprep.subr.bf16.mxu0 0
        %556 = vmatpush2.bf16.msra.mxu0 0
        %557 = vmatprep.mubr.bf16.mxu0 0
        %558 = vmatmul.mubr.bf16.gmra.mxu0 %v520
        %v559 = vpop.f32.mrf.mxu0
        %v560 = vadd.f32 %v271, %v559
        %v561 = vpop.f32.mrf.mxu0
        %v562 = vadd.f32 %v275, %v561
        %v563 = vpop.f32.mrf.mxu0
        %v564 = vadd.f32 %v271, %v563
        %v565 = vpop.f32.mrf.mxu0
        %v566 = vadd.f32 %v275, %v565
        %567 = vmatprep.mubr.bf16.mxu0 0
        %568 = vmatmul.mubr.bf16.gmra.mxu0 %v523
        %v569 = vpop.f32.mrf.mxu0
        %v570 = vadd.f32 %v271, %v569
        %v571 = vpop.f32.mrf.mxu0
        %v572 = vadd.f32 %v275, %v571
        %v573 = vpop.f32.mrf.mxu0
        %v574 = vadd.f32 %v271, %v573
        %v575 = vpop.f32.mrf.mxu0
        %v576 = vadd.f32 %v275, %v575
        %577 = vdwg.mxu0
        %578 = vmatprep.subr.bf16.mxu0 0
        %579 = vmatpush1.bf16.msra.mxu0 0
        %580 = vmatprep.subr.bf16.mxu0 0
        %581 = vmatpush1.bf16.msra.mxu0 0
        %582 = vmatprep.subr.bf16.mxu0 0
        %583 = vmatpush1.bf16.msra.mxu0 0
        %584 = vmatprep.subr.bf16.mxu0 0
        %585 = vmatpush1.bf16.msra.mxu0 0
        %586 = vmatprep.subr.bf16.mxu0 0
        %587 = vmatpush1.bf16.msra.mxu0 0
        %588 = vmatprep.subr.bf16.mxu0 0
        %589 = vmatpush1.bf16.msra.mxu0 0
        %590 = vmatprep.subr.bf16.mxu0 %v473
        %591 = vmatpush1.bf16.msra.mxu0 %v472
        %592 = vmatprep.subr.bf16.mxu0 %v457
        %593 = vmatpush1.bf16.msra.mxu0 %v456
        %594 = vmatprep.subr.bf16.mxu0 0
        %595 = vmatpush2.bf16.msra.mxu0 0
        %596 = vmatprep.subr.bf16.mxu0 0
        %597 = vmatpush2.bf16.msra.mxu0 0
        %598 = vmatprep.subr.bf16.mxu0 0
        %599 = vmatpush2.bf16.msra.mxu0 0
        %600 = vmatprep.subr.bf16.mxu0 0
        %601 = vmatpush2.bf16.msra.mxu0 0
        %602 = vmatprep.subr.bf16.mxu0 0
        %603 = vmatpush2.bf16.msra.mxu0 0
        %604 = vmatprep.subr.bf16.mxu0 0
        %605 = vmatpush2.bf16.msra.mxu0 0
        %606 = vmatprep.subr.bf16.mxu0 0
        %607 = vmatpush2.bf16.msra.mxu0 0
        %608 = vmatprep.subr.bf16.mxu0 0
        %609 = vmatpush2.bf16.msra.mxu0 0
        %610 = vmatprep.mubr.bf16.mxu0 0
        %611 = vmatmul.mubr.bf16.gmra.mxu0 %v520
        %v612 = vpop.f32.mrf.mxu0
        %v613 = vadd.f32 %v279, %v612
        %v614 = vpop.f32.mrf.mxu0
        %v615 = vadd.f32 %v283, %v614
        %v616 = vpop.f32.mrf.mxu0
        %v617 = vadd.f32 %v279, %v616
        %v618 = vpop.f32.mrf.mxu0
        %v619 = vadd.f32 %v283, %v618
        %620 = vmatprep.mubr.bf16.mxu0 0
        %621 = vmatmul.mubr.bf16.gmra.mxu0 %v523
        %v622 = vpop.f32.mrf.mxu0
        %v623 = vadd.f32 %v279, %v622
        %v624 = vpop.f32.mrf.mxu0
        %v625 = vadd.f32 %v283, %v624
        %v626 = vpop.f32.mrf.mxu0
        %v627 = vadd.f32 %v279, %v626
        %v628 = vpop.f32.mrf.mxu0
        %v629 = vadd.f32 %v283, %v628
        %630 = vdwg.mxu0
        %631 = vmatprep.subr.bf16.mxu0 0
        %632 = vmatpush1.bf16.msra.mxu0 0
        %633 = vmatprep.subr.bf16.mxu0 0
        %634 = vmatpush1.bf16.msra.mxu0 0
        %635 = vmatprep.subr.bf16.mxu0 0
        %636 = vmatpush1.bf16.msra.mxu0 0
        %637 = vmatprep.subr.bf16.mxu0 0
        %638 = vmatpush1.bf16.msra.mxu0 0
        %639 = vmatprep.subr.bf16.mxu0 0
        %640 = vmatpush1.bf16.msra.mxu0 0
        %641 = vmatprep.subr.bf16.mxu0 0
        %642 = vmatpush1.bf16.msra.mxu0 0
        %643 = vmatprep.subr.bf16.mxu0 %v475
        %644 = vmatpush1.bf16.msra.mxu0 %v474
        %645 = vmatprep.subr.bf16.mxu0 %v459
        %646 = vmatpush1.bf16.msra.mxu0 %v458
        %647 = vmatprep.subr.bf16.mxu0 0
        %648 = vmatpush2.bf16.msra.mxu0 0
        %649 = vmatprep.subr.bf16.mxu0 0
        %650 = vmatpush2.bf16.msra.mxu0 0
        %651 = vmatprep.subr.bf16.mxu0 0
        %652 = vmatpush2.bf16.msra.mxu0 0
        %653 = vmatprep.subr.bf16.mxu0 0
        %654 = vmatpush2.bf16.msra.mxu0 0
        %655 = vmatprep.subr.bf16.mxu0 0
        %656 = vmatpush2.bf16.msra.mxu0 0
        %657 = vmatprep.subr.bf16.mxu0 0
        %658 = vmatpush2.bf16.msra.mxu0 0
        %659 = vmatprep.subr.bf16.mxu0 0
        %660 = vmatpush2.bf16.msra.mxu0 0
        %661 = vmatprep.subr.bf16.mxu0 0
        %662 = vmatpush2.bf16.msra.mxu0 0
        %663 = vmatprep.mubr.bf16.mxu0 0
        %664 = vmatmul.mubr.bf16.gmra.mxu0 %v520
        %v665 = vpop.f32.mrf.mxu0
        %v666 = vadd.f32 %v287, %v665
        %v667 = vpop.f32.mrf.mxu0
        %v668 = vadd.f32 %v291, %v667
        %v669 = vpop.f32.mrf.mxu0
        %v670 = vadd.f32 %v287, %v669
        %v671 = vpop.f32.mrf.mxu0
        %v672 = vadd.f32 %v291, %v671
        %673 = vmatprep.mubr.bf16.mxu0 0
        %674 = vmatmul.mubr.bf16.gmra.mxu0 %v523
        %v675 = vpop.f32.mrf.mxu0
        %v676 = vadd.f32 %v287, %v675
        %v677 = vpop.f32.mrf.mxu0
        %v678 = vadd.f32 %v291, %v677
        %v679 = vpop.f32.mrf.mxu0
        %v680 = vadd.f32 %v287, %v679
        %v681 = vpop.f32.mrf.mxu0
        %v682 = vadd.f32 %v291, %v681
        %683 = vdwg.mxu0
        %684 = vmatprep.subr.bf16.mxu0 0
        %685 = vmatpush1.bf16.msra.mxu0 0
        %686 = vmatprep.subr.bf16.mxu0 0
        %687 = vmatpush1.bf16.msra.mxu0 0
        %688 = vmatprep.subr.bf16.mxu0 0
        %689 = vmatpush1.bf16.msra.mxu0 0
        %690 = vmatprep.subr.bf16.mxu0 0
        %691 = vmatpush1.bf16.msra.mxu0 0
        %692 = vmatprep.subr.bf16.mxu0 0
        %693 = vmatpush1.bf16.msra.mxu0 0
        %694 = vmatprep.subr.bf16.mxu0 0
        %695 = vmatpush1.bf16.msra.mxu0 0
        %696 = vmatprep.subr.bf16.mxu0 %v477
        %697 = vmatpush1.bf16.msra.mxu0 %v476
        %698 = vmatprep.subr.bf16.mxu0 %v461
        %699 = vmatpush1.bf16.msra.mxu0 %v460
        %700 = vmatprep.subr.bf16.mxu0 0
        %701 = vmatpush2.bf16.msra.mxu0 0
        %702 = vmatprep.subr.bf16.mxu0 0
        %703 = vmatpush2.bf16.msra.mxu0 0
        %704 = vmatprep.subr.bf16.mxu0 0
        %705 = vmatpush2.bf16.msra.mxu0 0
        %706 = vmatprep.subr.bf16.mxu0 0
        %707 = vmatpush2.bf16.msra.mxu0 0
        %708 = vmatprep.subr.bf16.mxu0 0
        %709 = vmatpush2.bf16.msra.mxu0 0
        %710 = vmatprep.subr.bf16.mxu0 0
        %711 = vmatpush2.bf16.msra.mxu0 0
        %712 = vmatprep.subr.bf16.mxu0 0
        %713 = vmatpush2.bf16.msra.mxu0 0
        %714 = vmatprep.subr.bf16.mxu0 0
        %715 = vmatpush2.bf16.msra.mxu0 0
        %716 = vmatprep.mubr.bf16.mxu0 0
        %717 = vmatmul.mubr.bf16.gmra.mxu0 %v520
        %v718 = vpop.f32.mrf.mxu0
        %v719 = vadd.f32 %v295, %v718
        %v720 = vpop.f32.mrf.mxu0
        %v721 = vadd.f32 %v299, %v720
        %v722 = vpop.f32.mrf.mxu0
        %v723 = vadd.f32 %v295, %v722
        %v724 = vpop.f32.mrf.mxu0
        %v725 = vadd.f32 %v299, %v724
        %726 = vmatprep.mubr.bf16.mxu0 0
        %727 = vmatmul.mubr.bf16.gmra.mxu0 %v523
        %v728 = vpop.f32.mrf.mxu0
        %v729 = vadd.f32 %v295, %v728
        %v730 = vpop.f32.mrf.mxu0
        %v731 = vadd.f32 %v299, %v730
        %v732 = vpop.f32.mrf.mxu0
        %v733 = vadd.f32 %v295, %v732
        %v734 = vpop.f32.mrf.mxu0
        %v735 = vadd.f32 %v299, %v734
        %736 = vdwg.mxu0
        %737 = vmatprep.subr.bf16.mxu0 0
        %738 = vmatpush1.bf16.msra.mxu0 0
        %739 = vmatprep.subr.bf16.mxu0 0
        %740 = vmatpush1.bf16.msra.mxu0 0
        %741 = vmatprep.subr.bf16.mxu0 0
        %742 = vmatpush1.bf16.msra.mxu0 0
        %743 = vmatprep.subr.bf16.mxu0 0
        %744 = vmatpush1.bf16.msra.mxu0 0
        %745 = vmatprep.subr.bf16.mxu0 0
        %746 = vmatpush1.bf16.msra.mxu0 0
        %747 = vmatprep.subr.bf16.mxu0 0
        %748 = vmatpush1.bf16.msra.mxu0 0
        %749 = vmatprep.subr.bf16.mxu0 %v479
        %750 = vmatpush1.bf16.msra.mxu0 %v478
        %751 = vmatprep.subr.bf16.mxu0 %v463
        %752 = vmatpush1.bf16.msra.mxu0 %v462
        %753 = vmatprep.subr.bf16.mxu0 0
        %754 = vmatpush2.bf16.msra.mxu0 0
        %755 = vmatprep.subr.bf16.mxu0 0
        %756 = vmatpush2.bf16.msra.mxu0 0
        %757 = vmatprep.subr.bf16.mxu0 0
        %758 = vmatpush2.bf16.msra.mxu0 0
        %759 = vmatprep.subr.bf16.mxu0 0
        %760 = vmatpush2.bf16.msra.mxu0 0
        %761 = vmatprep.subr.bf16.mxu0 0
        %762 = vmatpush2.bf16.msra.mxu0 0
        %763 = vmatprep.subr.bf16.mxu0 0
        %764 = vmatpush2.bf16.msra.mxu0 0
        %765 = vmatprep.subr.bf16.mxu0 0
        %766 = vmatpush2.bf16.msra.mxu0 0
        %767 = vmatprep.subr.bf16.mxu0 0
        %768 = vmatpush2.bf16.msra.mxu0 0
        %769 = vmatprep.mubr.bf16.mxu0 0
        %770 = vmatmul.mubr.bf16.gmra.mxu0 %v520
        %v771 = vpop.f32.mrf.mxu0
        %v772 = vadd.f32 %v303, %v771
        %v773 = vpop.f32.mrf.mxu0
        %v774 = vadd.f32 %v307, %v773
        %v775 = vpop.f32.mrf.mxu0
        %v776 = vadd.f32 %v303, %v775
        %v777 = vpop.f32.mrf.mxu0
        %v778 = vadd.f32 %v307, %v777
        %779 = vmatprep.mubr.bf16.mxu0 0
        %780 = vmatmul.mubr.bf16.gmra.mxu0 %v523
        %v781 = vpop.f32.mrf.mxu0
        %v782 = vadd.f32 %v303, %v781
        %v783 = vpop.f32.mrf.mxu0
        %v784 = vadd.f32 %v307, %v783
        %v785 = vpop.f32.mrf.mxu0
        %v786 = vadd.f32 %v303, %v785
        %v787 = vpop.f32.mrf.mxu0
        %v788 = vadd.f32 %v307, %v787
        %789 = vdwg.mxu0
        %790 = vmatprep.subr.bf16.mxu0 0
        %791 = vmatpush1.bf16.msra.mxu0 0
        %792 = vmatprep.subr.bf16.mxu0 0
        %793 = vmatpush1.bf16.msra.mxu0 0
        %794 = vmatprep.subr.bf16.mxu0 0
        %795 = vmatpush1.bf16.msra.mxu0 0
        %796 = vmatprep.subr.bf16.mxu0 0
        %797 = vmatpush1.bf16.msra.mxu0 0
        %798 = vmatprep.subr.bf16.mxu0 0
        %799 = vmatpush1.bf16.msra.mxu0 0
        %800 = vmatprep.subr.bf16.mxu0 0
        %801 = vmatpush1.bf16.msra.mxu0 0
        %802 = vmatprep.subr.bf16.mxu0 %v481
        %803 = vmatpush1.bf16.msra.mxu0 %v480
        %804 = vmatprep.subr.bf16.mxu0 %v465
        %805 = vmatpush1.bf16.msra.mxu0 %v464
        %806 = vmatprep.subr.bf16.mxu0 0
        %807 = vmatpush2.bf16.msra.mxu0 0
        %808 = vmatprep.subr.bf16.mxu0 0
        %809 = vmatpush2.bf16.msra.mxu0 0
        %810 = vmatprep.subr.bf16.mxu0 0
        %811 = vmatpush2.bf16.msra.mxu0 0
        %812 = vmatprep.subr.bf16.mxu0 0
        %813 = vmatpush2.bf16.msra.mxu0 0
        %814 = vmatprep.subr.bf16.mxu0 0
        %815 = vmatpush2.bf16.msra.mxu0 0
        %816 = vmatprep.subr.bf16.mxu0 0
        %817 = vmatpush2.bf16.msra.mxu0 0
        %818 = vmatprep.subr.bf16.mxu0 0
        %819 = vmatpush2.bf16.msra.mxu0 0
        %820 = vmatprep.subr.bf16.mxu0 0
        %821 = vmatpush2.bf16.msra.mxu0 0
        %822 = vmatprep.mubr.bf16.mxu0 0
        %823 = vmatmul.mubr.bf16.gmra.mxu0 %v520
        %v824 = vpop.f32.mrf.mxu0
        %v825 = vadd.f32 %v311, %v824
        %v826 = vpop.f32.mrf.mxu0
        %v827 = vadd.f32 %v315, %v826
        %v828 = vpop.f32.mrf.mxu0
        %v829 = vadd.f32 %v311, %v828
        %v830 = vpop.f32.mrf.mxu0
        %v831 = vadd.f32 %v315, %v830
        %832 = vmatprep.mubr.bf16.mxu0 0
        %833 = vmatmul.mubr.bf16.gmra.mxu0 %v523
        %v834 = vpop.f32.mrf.mxu0
        %v835 = vadd.f32 %v311, %v834
        %v836 = vpop.f32.mrf.mxu0
        %v837 = vadd.f32 %v315, %v836
        %v838 = vpop.f32.mrf.mxu0
        %v839 = vadd.f32 %v311, %v838
        %v840 = vpop.f32.mrf.mxu0
        %v841 = vadd.f32 %v315, %v840
        %842 = vdwg.mxu0
        %843 = vmatprep.subr.bf16.mxu0 0
        %844 = vmatpush1.bf16.msra.mxu0 0
        %845 = vmatprep.subr.bf16.mxu0 0
        %846 = vmatpush1.bf16.msra.mxu0 0
        %847 = vmatprep.subr.bf16.mxu0 0
        %848 = vmatpush1.bf16.msra.mxu0 0
        %849 = vmatprep.subr.bf16.mxu0 0
        %850 = vmatpush1.bf16.msra.mxu0 0
        %851 = vmatprep.subr.bf16.mxu0 0
        %852 = vmatpush1.bf16.msra.mxu0 0
        %853 = vmatprep.subr.bf16.mxu0 0
        %854 = vmatpush1.bf16.msra.mxu0 0
        %855 = vmatprep.subr.bf16.mxu0 %v483
        %856 = vmatpush1.bf16.msra.mxu0 %v482
        %857 = vmatprep.subr.bf16.mxu0 %v467
        %858 = vmatpush1.bf16.msra.mxu0 %v466
        %859 = vmatprep.subr.bf16.mxu0 0
        %860 = vmatpush2.bf16.msra.mxu0 0
        %861 = vmatprep.subr.bf16.mxu0 0
        %862 = vmatpush2.bf16.msra.mxu0 0
        %863 = vmatprep.subr.bf16.mxu0 0
        %864 = vmatpush2.bf16.msra.mxu0 0
        %865 = vmatprep.subr.bf16.mxu0 0
        %866 = vmatpush2.bf16.msra.mxu0 0
        %867 = vmatprep.subr.bf16.mxu0 0
        %868 = vmatpush2.bf16.msra.mxu0 0
        %869 = vmatprep.subr.bf16.mxu0 0
        %870 = vmatpush2.bf16.msra.mxu0 0
        %871 = vmatprep.subr.bf16.mxu0 0
        %872 = vmatpush2.bf16.msra.mxu0 0
        %873 = vmatprep.subr.bf16.mxu0 0
        %874 = vmatpush2.bf16.msra.mxu0 0
        %875 = vmatprep.mubr.bf16.mxu0 0
        %876 = vmatmul.mubr.bf16.gmra.mxu0 %v520
        %v877 = vpop.f32.mrf.mxu0
        %v878 = vadd.f32 %v319, %v877
        %v879 = vpop.f32.mrf.mxu0
        %v880 = vadd.f32 %v323, %v879
        %v881 = vpop.f32.mrf.mxu0
        %v882 = vadd.f32 %v319, %v881
        %v883 = vpop.f32.mrf.mxu0
        %v884 = vadd.f32 %v323, %v883
        %885 = vmatprep.mubr.bf16.mxu0 0
        %886 = vmatmul.mubr.bf16.gmra.mxu0 %v523
        %v887 = vpop.f32.mrf.mxu0
        %v888 = vadd.f32 %v319, %v887
        %v889 = vpop.f32.mrf.mxu0
        %v890 = vadd.f32 %v323, %v889
        %v891 = vpop.f32.mrf.mxu0
        %v892 = vadd.f32 %v319, %v891
        %v893 = vpop.f32.mrf.mxu0
        %v894 = vadd.f32 %v323, %v893
        %895 = vdwg.mxu0
        %896 = vmatprep.subr.bf16.mxu0 0
        %897 = vmatpush1.bf16.msra.mxu0 0
        %898 = vmatprep.subr.bf16.mxu0 0
        %899 = vmatpush1.bf16.msra.mxu0 0
        %900 = vmatprep.subr.bf16.mxu0 0
        %901 = vmatpush1.bf16.msra.mxu0 0
        %902 = vmatprep.subr.bf16.mxu0 0
        %903 = vmatpush1.bf16.msra.mxu0 0
        %904 = vmatprep.subr.bf16.mxu0 0
        %905 = vmatpush1.bf16.msra.mxu0 0
        %906 = vmatprep.subr.bf16.mxu0 0
        %907 = vmatpush1.bf16.msra.mxu0 0
        %908 = vmatprep.subr.bf16.mxu0 %v485
        %909 = vmatpush1.bf16.msra.mxu0 %v484
        %910 = vmatprep.subr.bf16.mxu0 %v469
        %911 = vmatpush1.bf16.msra.mxu0 %v468
        %912 = vmatprep.subr.bf16.mxu0 0
        %913 = vmatpush2.bf16.msra.mxu0 0
        %914 = vmatprep.subr.bf16.mxu0 0
        %915 = vmatpush2.bf16.msra.mxu0 0
        %916 = vmatprep.subr.bf16.mxu0 0
        %917 = vmatpush2.bf16.msra.mxu0 0
        %918 = vmatprep.subr.bf16.mxu0 0
        %919 = vmatpush2.bf16.msra.mxu0 0
        %920 = vmatprep.subr.bf16.mxu0 0
        %921 = vmatpush2.bf16.msra.mxu0 0
        %922 = vmatprep.subr.bf16.mxu0 0
        %923 = vmatpush2.bf16.msra.mxu0 0
        %924 = vmatprep.subr.bf16.mxu0 0
        %925 = vmatpush2.bf16.msra.mxu0 0
        %926 = vmatprep.subr.bf16.mxu0 0
        %927 = vmatpush2.bf16.msra.mxu0 0
        %928 = vmatprep.mubr.bf16.mxu0 0
        %929 = vmatmul.mubr.bf16.gmra.mxu0 %v520
        %v930 = vpop.f32.mrf.mxu0
        %v931 = vadd.f32 %v327, %v930
        %v932 = vpop.f32.mrf.mxu0
        %v933 = vadd.f32 %v331, %v932
        %v934 = vpop.f32.mrf.mxu0
        %v935 = vadd.f32 %v327, %v934
        %v936 = vpop.f32.mrf.mxu0
        %v937 = vadd.f32 %v331, %v936
        %938 = vmatprep.mubr.bf16.mxu0 0
        %939 = vmatmul.mubr.bf16.gmra.mxu0 %v523
        %v940 = vpop.f32.mrf.mxu0
        %v941 = vadd.f32 %v327, %v940
        %v942 = vpop.f32.mrf.mxu0
        %v943 = vadd.f32 %v331, %v942
        %v944 = vpop.f32.mrf.mxu0
        %v945 = vadd.f32 %v327, %v944
        %v946 = vpop.f32.mrf.mxu0
        %v947 = vadd.f32 %v331, %v946
        %948 = vdwg.mxu0
        %v949 = vmax.f32 %v560, 0.0
        %v950 = vmax.f32 %v562, 0.0
        %v951 = vmax.f32 %v613, 0.0
        %v952 = vmax.f32 %v615, 0.0
        %v953 = vmax.f32 %v666, 0.0
        %v954 = vmax.f32 %v668, 0.0
        %v955 = vmax.f32 %v719, 0.0
        %v956 = vmax.f32 %v721, 0.0
        %v957 = vmax.f32 %v772, 0.0
        %v958 = vmax.f32 %v774, 0.0
        %v959 = vmax.f32 %v825, 0.0
        %v960 = vmax.f32 %v827, 0.0
        %v961 = vmax.f32 %v878, 0.0
        %v962 = vmax.f32 %v880, 0.0
        %v963 = vmax.f32 %v931, 0.0
        %v964 = vmax.f32 %v933, 0.0
        %v965 = vmax.f32 %v564, 0.0
        %v966 = vmax.f32 %v566, 0.0
        %v967 = vmax.f32 %v617, 0.0
        %v968 = vmax.f32 %v619, 0.0
        %v969 = vmax.f32 %v670, 0.0
        %v970 = vmax.f32 %v672, 0.0
        %v971 = vmax.f32 %v723, 0.0
        %v972 = vmax.f32 %v725, 0.0
        %v973 = vmax.f32 %v776, 0.0
        %v974 = vmax.f32 %v778, 0.0
        %v975 = vmax.f32 %v829, 0.0
        %v976 = vmax.f32 %v831, 0.0
        %v977 = vmax.f32 %v882, 0.0
        %v978 = vmax.f32 %v884, 0.0
        %v979 = vmax.f32 %v935, 0.0
        %v980 = vmax.f32 %v937, 0.0
        %v981 = vmax.f32 %v570, 0.0
        %v982 = vmax.f32 %v572, 0.0
        %v983 = vmax.f32 %v623, 0.0
        %v984 = vmax.f32 %v625, 0.0
        %v985 = vmax.f32 %v676, 0.0
        %v986 = vmax.f32 %v678, 0.0
        %v987 = vmax.f32 %v729, 0.0
        %v988 = vmax.f32 %v731, 0.0
        %v989 = vmax.f32 %v782, 0.0
        %v990 = vmax.f32 %v784, 0.0
        %v991 = vmax.f32 %v835, 0.0
        %v992 = vmax.f32 %v837, 0.0
        %v993 = vmax.f32 %v888, 0.0
        %v994 = vmax.f32 %v890, 0.0
        %v995 = vmax.f32 %v941, 0.0
        %v996 = vmax.f32 %v943, 0.0
        %v997 = vmax.f32 %v574, 0.0
        %v998 = vmax.f32 %v576, 0.0
        %v999 = vmax.f32 %v627, 0.0
        %v1000 = vmax.f32 %v629, 0.0
        %v1001 = vmax.f32 %v680, 0.0
        %v1002 = vmax.f32 %v682, 0.0
        %v1003 = vmax.f32 %v733, 0.0
        %v1004 = vmax.f32 %v735, 0.0
        %v1005 = vmax.f32 %v786, 0.0
        %v1006 = vmax.f32 %v788, 0.0
        %v1007 = vmax.f32 %v839, 0.0
        %v1008 = vmax.f32 %v841, 0.0
        %v1009 = vmax.f32 %v892, 0.0
        %v1010 = vmax.f32 %v894, 0.0
        %v1011 = vmax.f32 %v945, 0.0
        %v1012 = vmax.f32 %v947, 0.0
        %v1013 = vpack.c.bf16 %v949, %v949
        %1014 = vst [vmem:[%s214] sm:$0x3] %v1013
        %v1017 = vunpack.c.l.s4 1983009808
        %v1018 = vunpack.c.0.s8 %v1017
        %v1019 = vlaneseq
        %v1020 = vshrl.u32 %v1019, 7
        %v1021 = vsub.s32 %v1018, %v1020
        %v1022 = vrot.slane %v1013, %v1021
        %v1023 = vcombine.high %v1022, %v1022
        %s1025 = scalar_lea.vmem %s214, 8 [#allocation5]
        %1026 = vst [vmem:[%s1025] sm:$0x3] %v1023
        %v1027 = vpack.c.bf16 %v965, %v965
        %s1028 = scalar_lea.vmem %s214, 16 [#allocation5]
        %1029 = vst [vmem:[%s1028] sm:$0x3] %v1027
        %v1032 = vunpack.c.l.s4 1983009808
        %v1033 = vunpack.c.0.s8 %v1032
        %v1034 = vlaneseq
        %v1035 = vshrl.u32 %v1034, 7
        %v1036 = vsub.s32 %v1033, %v1035
        %v1037 = vrot.slane %v1027, %v1036
        %v1038 = vcombine.high %v1037, %v1037
        %s1040 = scalar_lea.vmem %s214, 24 [#allocation5]
        %1041 = vst [vmem:[%s1040] sm:$0x3] %v1038
        %v1042 = vpack.c.bf16 %v950, %v950
        %s1043 = scalar_lea.vmem %s214, 2 [#allocation5]
        %1044 = vst [vmem:[%s1043] sm:$0x3] %v1042
        %v1047 = vunpack.c.l.s4 1983009808
        %v1048 = vunpack.c.0.s8 %v1047
        %v1049 = vlaneseq
        %v1050 = vshrl.u32 %v1049, 7
        %v1051 = vsub.s32 %v1048, %v1050
        %v1052 = vrot.slane %v1042, %v1051
        %v1053 = vcombine.high %v1052, %v1052
        %s1055 = scalar_lea.vmem %s214, 10 [#allocation5]
        %1056 = vst [vmem:[%s1055] sm:$0x3] %v1053
        %v1057 = vpack.c.bf16 %v966, %v966
        %s1058 = scalar_lea.vmem %s214, 18 [#allocation5]
        %1059 = vst [vmem:[%s1058] sm:$0x3] %v1057
        %v1062 = vunpack.c.l.s4 1983009808
        %v1063 = vunpack.c.0.s8 %v1062
        %v1064 = vlaneseq
        %v1065 = vshrl.u32 %v1064, 7
        %v1066 = vsub.s32 %v1063, %v1065
        %v1067 = vrot.slane %v1057, %v1066
        %v1068 = vcombine.high %v1067, %v1067
        %s1070 = scalar_lea.vmem %s214, 26 [#allocation5]
        %1071 = vst [vmem:[%s1070] sm:$0x3] %v1068
        %v1072 = vpack.c.bf16 %v951, %v951
        %s1073 = scalar_lea.vmem %s214, 4 [#allocation5]
        %1074 = vst [vmem:[%s1073] sm:$0x3] %v1072
        %v1077 = vunpack.c.l.s4 1983009808
        %v1078 = vunpack.c.0.s8 %v1077
        %v1079 = vlaneseq
        %v1080 = vshrl.u32 %v1079, 7
        %v1081 = vsub.s32 %v1078, %v1080
        %v1082 = vrot.slane %v1072, %v1081
        %v1083 = vcombine.high %v1082, %v1082
        %s1085 = scalar_lea.vmem %s214, 12 [#allocation5]
        %1086 = vst [vmem:[%s1085] sm:$0x3] %v1083
        %v1087 = vpack.c.bf16 %v967, %v967
        %s1088 = scalar_lea.vmem %s214, 20 [#allocation5]
        %1089 = vst [vmem:[%s1088] sm:$0x3] %v1087
        %v1092 = vunpack.c.l.s4 1983009808
        %v1093 = vunpack.c.0.s8 %v1092
        %v1094 = vlaneseq
        %v1095 = vshrl.u32 %v1094, 7
        %v1096 = vsub.s32 %v1093, %v1095
        %v1097 = vrot.slane %v1087, %v1096
        %v1098 = vcombine.high %v1097, %v1097
        %s1100 = scalar_lea.vmem %s214, 28 [#allocation5]
        %1101 = vst [vmem:[%s1100] sm:$0x3] %v1098
        %v1102 = vpack.c.bf16 %v952, %v952
        %s1103 = scalar_lea.vmem %s214, 6 [#allocation5]
        %1104 = vst [vmem:[%s1103] sm:$0x3] %v1102
        %v1107 = vunpack.c.l.s4 1983009808
        %v1108 = vunpack.c.0.s8 %v1107
        %v1109 = vlaneseq
        %v1110 = vshrl.u32 %v1109, 7
        %v1111 = vsub.s32 %v1108, %v1110
        %v1112 = vrot.slane %v1102, %v1111
        %v1113 = vcombine.high %v1112, %v1112
        %s1115 = scalar_lea.vmem %s214, 14 [#allocation5]
        %1116 = vst [vmem:[%s1115] sm:$0x3] %v1113
        %v1117 = vpack.c.bf16 %v968, %v968
        %s1118 = scalar_lea.vmem %s214, 22 [#allocation5]
        %1119 = vst [vmem:[%s1118] sm:$0x3] %v1117
        %v1122 = vunpack.c.l.s4 1983009808
        %v1123 = vunpack.c.0.s8 %v1122
        %v1124 = vlaneseq
        %v1125 = vshrl.u32 %v1124, 7
        %v1126 = vsub.s32 %v1123, %v1125
        %v1127 = vrot.slane %v1117, %v1126
        %v1128 = vcombine.high %v1127, %v1127
        %s1130 = scalar_lea.vmem %s214, 30 [#allocation5]
        %1131 = vst [vmem:[%s1130] sm:$0x3] %v1128
        %v1132 = vpack.c.bf16 %v953, %v953
        %s1133 = scalar_lea.vmem %s214, 32 [#allocation5]
        %1134 = vst [vmem:[%s1133] sm:$0x3] %v1132
        %v1137 = vunpack.c.l.s4 1983009808
        %v1138 = vunpack.c.0.s8 %v1137
        %v1139 = vlaneseq
        %v1140 = vshrl.u32 %v1139, 7
        %v1141 = vsub.s32 %v1138, %v1140
        %v1142 = vrot.slane %v1132, %v1141
        %v1143 = vcombine.high %v1142, %v1142
        %s1145 = scalar_lea.vmem %s214, 40 [#allocation5]
        %1146 = vst [vmem:[%s1145] sm:$0x3] %v1143
        %v1147 = vpack.c.bf16 %v969, %v969
        %s1148 = scalar_lea.vmem %s214, 48 [#allocation5]
        %1149 = vst [vmem:[%s1148] sm:$0x3] %v1147
        %v1152 = vunpack.c.l.s4 1983009808
        %v1153 = vunpack.c.0.s8 %v1152
        %v1154 = vlaneseq
        %v1155 = vshrl.u32 %v1154, 7
        %v1156 = vsub.s32 %v1153, %v1155
        %v1157 = vrot.slane %v1147, %v1156
        %v1158 = vcombine.high %v1157, %v1157
        %s1160 = scalar_lea.vmem %s214, 56 [#allocation5]
        %1161 = vst [vmem:[%s1160] sm:$0x3] %v1158
        %v1162 = vpack.c.bf16 %v954, %v954
        %s1163 = scalar_lea.vmem %s214, 34 [#allocation5]
        %1164 = vst [vmem:[%s1163] sm:$0x3] %v1162
        %v1167 = vunpack.c.l.s4 1983009808
        %v1168 = vunpack.c.0.s8 %v1167
        %v1169 = vlaneseq
        %v1170 = vshrl.u32 %v1169, 7
        %v1171 = vsub.s32 %v1168, %v1170
        %v1172 = vrot.slane %v1162, %v1171
        %v1173 = vcombine.high %v1172, %v1172
        %s1175 = scalar_lea.vmem %s214, 42 [#allocation5]
        %1176 = vst [vmem:[%s1175] sm:$0x3] %v1173
        %v1177 = vpack.c.bf16 %v970, %v970
        %s1178 = scalar_lea.vmem %s214, 50 [#allocation5]
        %1179 = vst [vmem:[%s1178] sm:$0x3] %v1177
        %v1182 = vunpack.c.l.s4 1983009808
        %v1183 = vunpack.c.0.s8 %v1182
        %v1184 = vlaneseq
        %v1185 = vshrl.u32 %v1184, 7
        %v1186 = vsub.s32 %v1183, %v1185
        %v1187 = vrot.slane %v1177, %v1186
        %v1188 = vcombine.high %v1187, %v1187
        %s1190 = scalar_lea.vmem %s214, 58 [#allocation5]
        %1191 = vst [vmem:[%s1190] sm:$0x3] %v1188
        %v1192 = vpack.c.bf16 %v955, %v955
        %s1193 = scalar_lea.vmem %s214, 36 [#allocation5]
        %1194 = vst [vmem:[%s1193] sm:$0x3] %v1192
        %v1197 = vunpack.c.l.s4 1983009808
        %v1198 = vunpack.c.0.s8 %v1197
        %v1199 = vlaneseq
        %v1200 = vshrl.u32 %v1199, 7
        %v1201 = vsub.s32 %v1198, %v1200
        %v1202 = vrot.slane %v1192, %v1201
        %v1203 = vcombine.high %v1202, %v1202
        %s1205 = scalar_lea.vmem %s214, 44 [#allocation5]
        %1206 = vst [vmem:[%s1205] sm:$0x3] %v1203
        %v1207 = vpack.c.bf16 %v971, %v971
        %s1208 = scalar_lea.vmem %s214, 52 [#allocation5]
        %1209 = vst [vmem:[%s1208] sm:$0x3] %v1207
        %v1212 = vunpack.c.l.s4 1983009808
        %v1213 = vunpack.c.0.s8 %v1212
        %v1214 = vlaneseq
        %v1215 = vshrl.u32 %v1214, 7
        %v1216 = vsub.s32 %v1213, %v1215
        %v1217 = vrot.slane %v1207, %v1216
        %v1218 = vcombine.high %v1217, %v1217
        %s1220 = scalar_lea.vmem %s214, 60 [#allocation5]
        %1221 = vst [vmem:[%s1220] sm:$0x3] %v1218
        %v1222 = vpack.c.bf16 %v956, %v956
        %s1223 = scalar_lea.vmem %s214, 38 [#allocation5]
        %1224 = vst [vmem:[%s1223] sm:$0x3] %v1222
        %v1227 = vunpack.c.l.s4 1983009808
        %v1228 = vunpack.c.0.s8 %v1227
        %v1229 = vlaneseq
        %v1230 = vshrl.u32 %v1229, 7
        %v1231 = vsub.s32 %v1228, %v1230
        %v1232 = vrot.slane %v1222, %v1231
        %v1233 = vcombine.high %v1232, %v1232
        %s1235 = scalar_lea.vmem %s214, 46 [#allocation5]
        %1236 = vst [vmem:[%s1235] sm:$0x3] %v1233
        %v1237 = vpack.c.bf16 %v972, %v972
        %s1238 = scalar_lea.vmem %s214, 54 [#allocation5]
        %1239 = vst [vmem:[%s1238] sm:$0x3] %v1237
        %v1242 = vunpack.c.l.s4 1983009808
        %v1243 = vunpack.c.0.s8 %v1242
        %v1244 = vlaneseq
        %v1245 = vshrl.u32 %v1244, 7
        %v1246 = vsub.s32 %v1243, %v1245
        %v1247 = vrot.slane %v1237, %v1246
        %v1248 = vcombine.high %v1247, %v1247
        %s1250 = scalar_lea.vmem %s214, 62 [#allocation5]
        %1251 = vst [vmem:[%s1250] sm:$0x3] %v1248
        %v1252 = vpack.c.bf16 %v957, %v957
        %s1253 = scalar_lea.vmem %s214, 64 [#allocation5]
        %1254 = vst [vmem:[%s1253] sm:$0x3] %v1252
        %v1257 = vunpack.c.l.s4 1983009808
        %v1258 = vunpack.c.0.s8 %v1257
        %v1259 = vlaneseq
        %v1260 = vshrl.u32 %v1259, 7
        %v1261 = vsub.s32 %v1258, %v1260
        %v1262 = vrot.slane %v1252, %v1261
        %v1263 = vcombine.high %v1262, %v1262
        %s1265 = scalar_lea.vmem %s214, 72 [#allocation5]
        %1266 = vst [vmem:[%s1265] sm:$0x3] %v1263
        %v1267 = vpack.c.bf16 %v973, %v973
        %s1268 = scalar_lea.vmem %s214, 80 [#allocation5]
        %1269 = vst [vmem:[%s1268] sm:$0x3] %v1267
        %v1272 = vunpack.c.l.s4 1983009808
        %v1273 = vunpack.c.0.s8 %v1272
        %v1274 = vlaneseq
        %v1275 = vshrl.u32 %v1274, 7
        %v1276 = vsub.s32 %v1273, %v1275
        %v1277 = vrot.slane %v1267, %v1276
        %v1278 = vcombine.high %v1277, %v1277
        %s1280 = scalar_lea.vmem %s214, 88 [#allocation5]
        %1281 = vst [vmem:[%s1280] sm:$0x3] %v1278
        %v1282 = vpack.c.bf16 %v958, %v958
        %s1283 = scalar_lea.vmem %s214, 66 [#allocation5]
        %1284 = vst [vmem:[%s1283] sm:$0x3] %v1282
        %v1287 = vunpack.c.l.s4 1983009808
        %v1288 = vunpack.c.0.s8 %v1287
        %v1289 = vlaneseq
        %v1290 = vshrl.u32 %v1289, 7
        %v1291 = vsub.s32 %v1288, %v1290
        %v1292 = vrot.slane %v1282, %v1291
        %v1293 = vcombine.high %v1292, %v1292
        %s1295 = scalar_lea.vmem %s214, 74 [#allocation5]
        %1296 = vst [vmem:[%s1295] sm:$0x3] %v1293
        %v1297 = vpack.c.bf16 %v974, %v974
        %s1298 = scalar_lea.vmem %s214, 82 [#allocation5]
        %1299 = vst [vmem:[%s1298] sm:$0x3] %v1297
        %v1302 = vunpack.c.l.s4 1983009808
        %v1303 = vunpack.c.0.s8 %v1302
        %v1304 = vlaneseq
        %v1305 = vshrl.u32 %v1304, 7
        %v1306 = vsub.s32 %v1303, %v1305
        %v1307 = vrot.slane %v1297, %v1306
        %v1308 = vcombine.high %v1307, %v1307
        %s1310 = scalar_lea.vmem %s214, 90 [#allocation5]
        %1311 = vst [vmem:[%s1310] sm:$0x3] %v1308
        %v1312 = vpack.c.bf16 %v959, %v959
        %s1313 = scalar_lea.vmem %s214, 68 [#allocation5]
        %1314 = vst [vmem:[%s1313] sm:$0x3] %v1312
        %v1317 = vunpack.c.l.s4 1983009808
        %v1318 = vunpack.c.0.s8 %v1317
        %v1319 = vlaneseq
        %v1320 = vshrl.u32 %v1319, 7
        %v1321 = vsub.s32 %v1318, %v1320
        %v1322 = vrot.slane %v1312, %v1321
        %v1323 = vcombine.high %v1322, %v1322
        %s1325 = scalar_lea.vmem %s214, 76 [#allocation5]
        %1326 = vst [vmem:[%s1325] sm:$0x3] %v1323
        %v1327 = vpack.c.bf16 %v975, %v975
        %s1328 = scalar_lea.vmem %s214, 84 [#allocation5]
        %1329 = vst [vmem:[%s1328] sm:$0x3] %v1327
        %v1332 = vunpack.c.l.s4 1983009808
        %v1333 = vunpack.c.0.s8 %v1332
        %v1334 = vlaneseq
        %v1335 = vshrl.u32 %v1334, 7
        %v1336 = vsub.s32 %v1333, %v1335
        %v1337 = vrot.slane %v1327, %v1336
        %v1338 = vcombine.high %v1337, %v1337
        %s1340 = scalar_lea.vmem %s214, 92 [#allocation5]
        %1341 = vst [vmem:[%s1340] sm:$0x3] %v1338
        %v1342 = vpack.c.bf16 %v960, %v960
        %s1343 = scalar_lea.vmem %s214, 70 [#allocation5]
        %1344 = vst [vmem:[%s1343] sm:$0x3] %v1342
        %v1347 = vunpack.c.l.s4 1983009808
        %v1348 = vunpack.c.0.s8 %v1347
        %v1349 = vlaneseq
        %v1350 = vshrl.u32 %v1349, 7
        %v1351 = vsub.s32 %v1348, %v1350
        %v1352 = vrot.slane %v1342, %v1351
        %v1353 = vcombine.high %v1352, %v1352
        %s1355 = scalar_lea.vmem %s214, 78 [#allocation5]
        %1356 = vst [vmem:[%s1355] sm:$0x3] %v1353
        %v1357 = vpack.c.bf16 %v976, %v976
        %s1358 = scalar_lea.vmem %s214, 86 [#allocation5]
        %1359 = vst [vmem:[%s1358] sm:$0x3] %v1357
        %v1362 = vunpack.c.l.s4 1983009808
        %v1363 = vunpack.c.0.s8 %v1362
        %v1364 = vlaneseq
        %v1365 = vshrl.u32 %v1364, 7
        %v1366 = vsub.s32 %v1363, %v1365
        %v1367 = vrot.slane %v1357, %v1366
        %v1368 = vcombine.high %v1367, %v1367
        %s1370 = scalar_lea.vmem %s214, 94 [#allocation5]
        %1371 = vst [vmem:[%s1370] sm:$0x3] %v1368
        %v1372 = vpack.c.bf16 %v961, %v961
        %s1373 = scalar_lea.vmem %s214, 96 [#allocation5]
        %1374 = vst [vmem:[%s1373] sm:$0x3] %v1372
        %v1377 = vunpack.c.l.s4 1983009808
        %v1378 = vunpack.c.0.s8 %v1377
        %v1379 = vlaneseq
        %v1380 = vshrl.u32 %v1379, 7
        %v1381 = vsub.s32 %v1378, %v1380
        %v1382 = vrot.slane %v1372, %v1381
        %v1383 = vcombine.high %v1382, %v1382
        %s1385 = scalar_lea.vmem %s214, 104 [#allocation5]
        %1386 = vst [vmem:[%s1385] sm:$0x3] %v1383
        %v1387 = vpack.c.bf16 %v977, %v977
        %s1388 = scalar_lea.vmem %s214, 112 [#allocation5]
        %1389 = vst [vmem:[%s1388] sm:$0x3] %v1387
        %v1392 = vunpack.c.l.s4 1983009808
        %v1393 = vunpack.c.0.s8 %v1392
        %v1394 = vlaneseq
        %v1395 = vshrl.u32 %v1394, 7
        %v1396 = vsub.s32 %v1393, %v1395
        %v1397 = vrot.slane %v1387, %v1396
        %v1398 = vcombine.high %v1397, %v1397
        %s1400 = scalar_lea.vmem %s214, 120 [#allocation5]
        %1401 = vst [vmem:[%s1400] sm:$0x3] %v1398
        %v1402 = vpack.c.bf16 %v962, %v962
        %s1403 = scalar_lea.vmem %s214, 98 [#allocation5]
        %1404 = vst [vmem:[%s1403] sm:$0x3] %v1402
        %v1407 = vunpack.c.l.s4 1983009808
        %v1408 = vunpack.c.0.s8 %v1407
        %v1409 = vlaneseq
        %v1410 = vshrl.u32 %v1409, 7
        %v1411 = vsub.s32 %v1408, %v1410
        %v1412 = vrot.slane %v1402, %v1411
        %v1413 = vcombine.high %v1412, %v1412
        %s1415 = scalar_lea.vmem %s214, 106 [#allocation5]
        %1416 = vst [vmem:[%s1415] sm:$0x3] %v1413
        %v1417 = vpack.c.bf16 %v978, %v978
        %s1418 = scalar_lea.vmem %s214, 114 [#allocation5]
        %1419 = vst [vmem:[%s1418] sm:$0x3] %v1417
        %v1422 = vunpack.c.l.s4 1983009808
        %v1423 = vunpack.c.0.s8 %v1422
        %v1424 = vlaneseq
        %v1425 = vshrl.u32 %v1424, 7
        %v1426 = vsub.s32 %v1423, %v1425
        %v1427 = vrot.slane %v1417, %v1426
        %v1428 = vcombine.high %v1427, %v1427
        %s1430 = scalar_lea.vmem %s214, 122 [#allocation5]
        %1431 = vst [vmem:[%s1430] sm:$0x3] %v1428
        %v1432 = vpack.c.bf16 %v963, %v963
        %s1433 = scalar_lea.vmem %s214, 100 [#allocation5]
        %1434 = vst [vmem:[%s1433] sm:$0x3] %v1432
        %v1437 = vunpack.c.l.s4 1983009808
        %v1438 = vunpack.c.0.s8 %v1437
        %v1439 = vlaneseq
        %v1440 = vshrl.u32 %v1439, 7
        %v1441 = vsub.s32 %v1438, %v1440
        %v1442 = vrot.slane %v1432, %v1441
        %v1443 = vcombine.high %v1442, %v1442
        %s1445 = scalar_lea.vmem %s214, 108 [#allocation5]
        %1446 = vst [vmem:[%s1445] sm:$0x3] %v1443
        %v1447 = vpack.c.bf16 %v979, %v979
        %s1448 = scalar_lea.vmem %s214, 116 [#allocation5]
        %1449 = vst [vmem:[%s1448] sm:$0x3] %v1447
        %v1452 = vunpack.c.l.s4 1983009808
        %v1453 = vunpack.c.0.s8 %v1452
        %v1454 = vlaneseq
        %v1455 = vshrl.u32 %v1454, 7
        %v1456 = vsub.s32 %v1453, %v1455
        %v1457 = vrot.slane %v1447, %v1456
        %v1458 = vcombine.high %v1457, %v1457
        %s1460 = scalar_lea.vmem %s214, 124 [#allocation5]
        %1461 = vst [vmem:[%s1460] sm:$0x3] %v1458
        %v1462 = vpack.c.bf16 %v964, %v964
        %s1463 = scalar_lea.vmem %s214, 102 [#allocation5]
        %1464 = vst [vmem:[%s1463] sm:$0x3] %v1462
        %v1467 = vunpack.c.l.s4 1983009808
        %v1468 = vunpack.c.0.s8 %v1467
        %v1469 = vlaneseq
        %v1470 = vshrl.u32 %v1469, 7
        %v1471 = vsub.s32 %v1468, %v1470
        %v1472 = vrot.slane %v1462, %v1471
        %v1473 = vcombine.high %v1472, %v1472
        %s1475 = scalar_lea.vmem %s214, 110 [#allocation5]
        %1476 = vst [vmem:[%s1475] sm:$0x3] %v1473
        %v1477 = vpack.c.bf16 %v980, %v980
        %s1478 = scalar_lea.vmem %s214, 118 [#allocation5]
        %1479 = vst [vmem:[%s1478] sm:$0x3] %v1477
        %v1482 = vunpack.c.l.s4 1983009808
        %v1483 = vunpack.c.0.s8 %v1482
        %v1484 = vlaneseq
        %v1485 = vshrl.u32 %v1484, 7
        %v1486 = vsub.s32 %v1483, %v1485
        %v1487 = vrot.slane %v1477, %v1486
        %v1488 = vcombine.high %v1487, %v1487
        %s1490 = scalar_lea.vmem %s214, 126 [#allocation5]
        %1491 = vst [vmem:[%s1490] sm:$0x3] %v1488
        %v1492 = vpack.c.bf16 %v981, %v981
        %s1493 = scalar_lea.vmem %s214, 128 [#allocation5]
        %1494 = vst [vmem:[%s1493] sm:$0x3] %v1492
        %v1497 = vunpack.c.l.s4 1983009808
        %v1498 = vunpack.c.0.s8 %v1497
        %v1499 = vlaneseq
        %v1500 = vshrl.u32 %v1499, 7
        %v1501 = vsub.s32 %v1498, %v1500
        %v1502 = vrot.slane %v1492, %v1501
        %v1503 = vcombine.high %v1502, %v1502
        %s1505 = scalar_lea.vmem %s214, 136 [#allocation5]
        %1506 = vst [vmem:[%s1505] sm:$0x3] %v1503
        %v1507 = vpack.c.bf16 %v997, %v997
        %s1508 = scalar_lea.vmem %s214, 144 [#allocation5]
        %1509 = vst [vmem:[%s1508] sm:$0x3] %v1507
        %v1512 = vunpack.c.l.s4 1983009808
        %v1513 = vunpack.c.0.s8 %v1512
        %v1514 = vlaneseq
        %v1515 = vshrl.u32 %v1514, 7
        %v1516 = vsub.s32 %v1513, %v1515
        %v1517 = vrot.slane %v1507, %v1516
        %v1518 = vcombine.high %v1517, %v1517
        %s1520 = scalar_lea.vmem %s214, 152 [#allocation5]
        %1521 = vst [vmem:[%s1520] sm:$0x3] %v1518
        %v1522 = vpack.c.bf16 %v982, %v982
        %s1523 = scalar_lea.vmem %s214, 130 [#allocation5]
        %1524 = vst [vmem:[%s1523] sm:$0x3] %v1522
        %v1527 = vunpack.c.l.s4 1983009808
        %v1528 = vunpack.c.0.s8 %v1527
        %v1529 = vlaneseq
        %v1530 = vshrl.u32 %v1529, 7
        %v1531 = vsub.s32 %v1528, %v1530
        %v1532 = vrot.slane %v1522, %v1531
        %v1533 = vcombine.high %v1532, %v1532
        %s1535 = scalar_lea.vmem %s214, 138 [#allocation5]
        %1536 = vst [vmem:[%s1535] sm:$0x3] %v1533
        %v1537 = vpack.c.bf16 %v998, %v998
        %s1538 = scalar_lea.vmem %s214, 146 [#allocation5]
        %1539 = vst [vmem:[%s1538] sm:$0x3] %v1537
        %v1542 = vunpack.c.l.s4 1983009808
        %v1543 = vunpack.c.0.s8 %v1542
        %v1544 = vlaneseq
        %v1545 = vshrl.u32 %v1544, 7
        %v1546 = vsub.s32 %v1543, %v1545
        %v1547 = vrot.slane %v1537, %v1546
        %v1548 = vcombine.high %v1547, %v1547
        %s1550 = scalar_lea.vmem %s214, 154 [#allocation5]
        %1551 = vst [vmem:[%s1550] sm:$0x3] %v1548
        %v1552 = vpack.c.bf16 %v983, %v983
        %s1553 = scalar_lea.vmem %s214, 132 [#allocation5]
        %1554 = vst [vmem:[%s1553] sm:$0x3] %v1552
        %v1557 = vunpack.c.l.s4 1983009808
        %v1558 = vunpack.c.0.s8 %v1557
        %v1559 = vlaneseq
        %v1560 = vshrl.u32 %v1559, 7
        %v1561 = vsub.s32 %v1558, %v1560
        %v1562 = vrot.slane %v1552, %v1561
        %v1563 = vcombine.high %v1562, %v1562
        %s1565 = scalar_lea.vmem %s214, 140 [#allocation5]
        %1566 = vst [vmem:[%s1565] sm:$0x3] %v1563
        %v1567 = vpack.c.bf16 %v999, %v999
        %s1568 = scalar_lea.vmem %s214, 148 [#allocation5]
        %1569 = vst [vmem:[%s1568] sm:$0x3] %v1567
        %v1572 = vunpack.c.l.s4 1983009808
        %v1573 = vunpack.c.0.s8 %v1572
        %v1574 = vlaneseq
        %v1575 = vshrl.u32 %v1574, 7
        %v1576 = vsub.s32 %v1573, %v1575
        %v1577 = vrot.slane %v1567, %v1576
        %v1578 = vcombine.high %v1577, %v1577
        %s1580 = scalar_lea.vmem %s214, 156 [#allocation5]
        %1581 = vst [vmem:[%s1580] sm:$0x3] %v1578
        %v1582 = vpack.c.bf16 %v984, %v984
        %s1583 = scalar_lea.vmem %s214, 134 [#allocation5]
        %1584 = vst [vmem:[%s1583] sm:$0x3] %v1582
        %v1587 = vunpack.c.l.s4 1983009808
        %v1588 = vunpack.c.0.s8 %v1587
        %v1589 = vlaneseq
        %v1590 = vshrl.u32 %v1589, 7
        %v1591 = vsub.s32 %v1588, %v1590
        %v1592 = vrot.slane %v1582, %v1591
        %v1593 = vcombine.high %v1592, %v1592
        %s1595 = scalar_lea.vmem %s214, 142 [#allocation5]
        %1596 = vst [vmem:[%s1595] sm:$0x3] %v1593
        %v1597 = vpack.c.bf16 %v1000, %v1000
        %s1598 = scalar_lea.vmem %s214, 150 [#allocation5]
        %1599 = vst [vmem:[%s1598] sm:$0x3] %v1597
        %v1602 = vunpack.c.l.s4 1983009808
        %v1603 = vunpack.c.0.s8 %v1602
        %v1604 = vlaneseq
        %v1605 = vshrl.u32 %v1604, 7
        %v1606 = vsub.s32 %v1603, %v1605
        %v1607 = vrot.slane %v1597, %v1606
        %v1608 = vcombine.high %v1607, %v1607
        %s1610 = scalar_lea.vmem %s214, 158 [#allocation5]
        %1611 = vst [vmem:[%s1610] sm:$0x3] %v1608
        %v1612 = vpack.c.bf16 %v985, %v985
        %s1613 = scalar_lea.vmem %s214, 160 [#allocation5]
        %1614 = vst [vmem:[%s1613] sm:$0x3] %v1612
        %v1617 = vunpack.c.l.s4 1983009808
        %v1618 = vunpack.c.0.s8 %v1617
        %v1619 = vlaneseq
        %v1620 = vshrl.u32 %v1619, 7
        %v1621 = vsub.s32 %v1618, %v1620
        %v1622 = vrot.slane %v1612, %v1621
        %v1623 = vcombine.high %v1622, %v1622
        %s1625 = scalar_lea.vmem %s214, 168 [#allocation5]
        %1626 = vst [vmem:[%s1625] sm:$0x3] %v1623
        %v1627 = vpack.c.bf16 %v1001, %v1001
        %s1628 = scalar_lea.vmem %s214, 176 [#allocation5]
        %1629 = vst [vmem:[%s1628] sm:$0x3] %v1627
        %v1632 = vunpack.c.l.s4 1983009808
        %v1633 = vunpack.c.0.s8 %v1632
        %v1634 = vlaneseq
        %v1635 = vshrl.u32 %v1634, 7
        %v1636 = vsub.s32 %v1633, %v1635
        %v1637 = vrot.slane %v1627, %v1636
        %v1638 = vcombine.high %v1637, %v1637
        %s1640 = scalar_lea.vmem %s214, 184 [#allocation5]
        %1641 = vst [vmem:[%s1640] sm:$0x3] %v1638
        %v1642 = vpack.c.bf16 %v986, %v986
        %s1643 = scalar_lea.vmem %s214, 162 [#allocation5]
        %1644 = vst [vmem:[%s1643] sm:$0x3] %v1642
        %v1647 = vunpack.c.l.s4 1983009808
        %v1648 = vunpack.c.0.s8 %v1647
        %v1649 = vlaneseq
        %v1650 = vshrl.u32 %v1649, 7
        %v1651 = vsub.s32 %v1648, %v1650
        %v1652 = vrot.slane %v1642, %v1651
        %v1653 = vcombine.high %v1652, %v1652
        %s1655 = scalar_lea.vmem %s214, 170 [#allocation5]
        %1656 = vst [vmem:[%s1655] sm:$0x3] %v1653
        %v1657 = vpack.c.bf16 %v1002, %v1002
        %s1658 = scalar_lea.vmem %s214, 178 [#allocation5]
        %1659 = vst [vmem:[%s1658] sm:$0x3] %v1657
        %v1662 = vunpack.c.l.s4 1983009808
        %v1663 = vunpack.c.0.s8 %v1662
        %v1664 = vlaneseq
        %v1665 = vshrl.u32 %v1664, 7
        %v1666 = vsub.s32 %v1663, %v1665
        %v1667 = vrot.slane %v1657, %v1666
        %v1668 = vcombine.high %v1667, %v1667
        %s1670 = scalar_lea.vmem %s214, 186 [#allocation5]
        %1671 = vst [vmem:[%s1670] sm:$0x3] %v1668
        %v1672 = vpack.c.bf16 %v987, %v987
        %s1673 = scalar_lea.vmem %s214, 164 [#allocation5]
        %1674 = vst [vmem:[%s1673] sm:$0x3] %v1672
        %v1677 = vunpack.c.l.s4 1983009808
        %v1678 = vunpack.c.0.s8 %v1677
        %v1679 = vlaneseq
        %v1680 = vshrl.u32 %v1679, 7
        %v1681 = vsub.s32 %v1678, %v1680
        %v1682 = vrot.slane %v1672, %v1681
        %v1683 = vcombine.high %v1682, %v1682
        %s1685 = scalar_lea.vmem %s214, 172 [#allocation5]
        %1686 = vst [vmem:[%s1685] sm:$0x3] %v1683
        %v1687 = vpack.c.bf16 %v1003, %v1003
        %s1688 = scalar_lea.vmem %s214, 180 [#allocation5]
        %1689 = vst [vmem:[%s1688] sm:$0x3] %v1687
        %v1692 = vunpack.c.l.s4 1983009808
        %v1693 = vunpack.c.0.s8 %v1692
        %v1694 = vlaneseq
        %v1695 = vshrl.u32 %v1694, 7
        %v1696 = vsub.s32 %v1693, %v1695
        %v1697 = vrot.slane %v1687, %v1696
        %v1698 = vcombine.high %v1697, %v1697
        %s1700 = scalar_lea.vmem %s214, 188 [#allocation5]
        %1701 = vst [vmem:[%s1700] sm:$0x3] %v1698
        %v1702 = vpack.c.bf16 %v988, %v988
        %s1703 = scalar_lea.vmem %s214, 166 [#allocation5]
        %1704 = vst [vmem:[%s1703] sm:$0x3] %v1702
        %v1707 = vunpack.c.l.s4 1983009808
        %v1708 = vunpack.c.0.s8 %v1707
        %v1709 = vlaneseq
        %v1710 = vshrl.u32 %v1709, 7
        %v1711 = vsub.s32 %v1708, %v1710
        %v1712 = vrot.slane %v1702, %v1711
        %v1713 = vcombine.high %v1712, %v1712
        %s1715 = scalar_lea.vmem %s214, 174 [#allocation5]
        %1716 = vst [vmem:[%s1715] sm:$0x3] %v1713
        %v1717 = vpack.c.bf16 %v1004, %v1004
        %s1718 = scalar_lea.vmem %s214, 182 [#allocation5]
        %1719 = vst [vmem:[%s1718] sm:$0x3] %v1717
        %v1722 = vunpack.c.l.s4 1983009808
        %v1723 = vunpack.c.0.s8 %v1722
        %v1724 = vlaneseq
        %v1725 = vshrl.u32 %v1724, 7
        %v1726 = vsub.s32 %v1723, %v1725
        %v1727 = vrot.slane %v1717, %v1726
        %v1728 = vcombine.high %v1727, %v1727
        %s1730 = scalar_lea.vmem %s214, 190 [#allocation5]
        %1731 = vst [vmem:[%s1730] sm:$0x3] %v1728
        %v1732 = vpack.c.bf16 %v989, %v989
        %s1733 = scalar_lea.vmem %s214, 192 [#allocation5]
        %1734 = vst [vmem:[%s1733] sm:$0x3] %v1732
        %v1737 = vunpack.c.l.s4 1983009808
        %v1738 = vunpack.c.0.s8 %v1737
        %v1739 = vlaneseq
        %v1740 = vshrl.u32 %v1739, 7
        %v1741 = vsub.s32 %v1738, %v1740
        %v1742 = vrot.slane %v1732, %v1741
        %v1743 = vcombine.high %v1742, %v1742
        %s1745 = scalar_lea.vmem %s214, 200 [#allocation5]
        %1746 = vst [vmem:[%s1745] sm:$0x3] %v1743
        %v1747 = vpack.c.bf16 %v1005, %v1005
        %s1748 = scalar_lea.vmem %s214, 208 [#allocation5]
        %1749 = vst [vmem:[%s1748] sm:$0x3] %v1747
        %v1752 = vunpack.c.l.s4 1983009808
        %v1753 = vunpack.c.0.s8 %v1752
        %v1754 = vlaneseq
        %v1755 = vshrl.u32 %v1754, 7
        %v1756 = vsub.s32 %v1753, %v1755
        %v1757 = vrot.slane %v1747, %v1756
        %v1758 = vcombine.high %v1757, %v1757
        %s1760 = scalar_lea.vmem %s214, 216 [#allocation5]
        %1761 = vst [vmem:[%s1760] sm:$0x3] %v1758
        %v1762 = vpack.c.bf16 %v990, %v990
        %s1763 = scalar_lea.vmem %s214, 194 [#allocation5]
        %1764 = vst [vmem:[%s1763] sm:$0x3] %v1762
        %v1767 = vunpack.c.l.s4 1983009808
        %v1768 = vunpack.c.0.s8 %v1767
        %v1769 = vlaneseq
        %v1770 = vshrl.u32 %v1769, 7
        %v1771 = vsub.s32 %v1768, %v1770
        %v1772 = vrot.slane %v1762, %v1771
        %v1773 = vcombine.high %v1772, %v1772
        %s1775 = scalar_lea.vmem %s214, 202 [#allocation5]
        %1776 = vst [vmem:[%s1775] sm:$0x3] %v1773
        %v1777 = vpack.c.bf16 %v1006, %v1006
        %s1778 = scalar_lea.vmem %s214, 210 [#allocation5]
        %1779 = vst [vmem:[%s1778] sm:$0x3] %v1777
        %v1782 = vunpack.c.l.s4 1983009808
        %v1783 = vunpack.c.0.s8 %v1782
        %v1784 = vlaneseq
        %v1785 = vshrl.u32 %v1784, 7
        %v1786 = vsub.s32 %v1783, %v1785
        %v1787 = vrot.slane %v1777, %v1786
        %v1788 = vcombine.high %v1787, %v1787
        %s1790 = scalar_lea.vmem %s214, 218 [#allocation5]
        %1791 = vst [vmem:[%s1790] sm:$0x3] %v1788
        %v1792 = vpack.c.bf16 %v991, %v991
        %s1793 = scalar_lea.vmem %s214, 196 [#allocation5]
        %1794 = vst [vmem:[%s1793] sm:$0x3] %v1792
        %v1797 = vunpack.c.l.s4 1983009808
        %v1798 = vunpack.c.0.s8 %v1797
        %v1799 = vlaneseq
        %v1800 = vshrl.u32 %v1799, 7
        %v1801 = vsub.s32 %v1798, %v1800
        %v1802 = vrot.slane %v1792, %v1801
        %v1803 = vcombine.high %v1802, %v1802
        %s1805 = scalar_lea.vmem %s214, 204 [#allocation5]
        %1806 = vst [vmem:[%s1805] sm:$0x3] %v1803
        %v1807 = vpack.c.bf16 %v1007, %v1007
        %s1808 = scalar_lea.vmem %s214, 212 [#allocation5]
        %1809 = vst [vmem:[%s1808] sm:$0x3] %v1807
        %v1812 = vunpack.c.l.s4 1983009808
        %v1813 = vunpack.c.0.s8 %v1812
        %v1814 = vlaneseq
        %v1815 = vshrl.u32 %v1814, 7
        %v1816 = vsub.s32 %v1813, %v1815
        %v1817 = vrot.slane %v1807, %v1816
        %v1818 = vcombine.high %v1817, %v1817
        %s1820 = scalar_lea.vmem %s214, 220 [#allocation5]
        %1821 = vst [vmem:[%s1820] sm:$0x3] %v1818
        %v1822 = vpack.c.bf16 %v992, %v992
        %s1823 = scalar_lea.vmem %s214, 198 [#allocation5]
        %1824 = vst [vmem:[%s1823] sm:$0x3] %v1822
        %v1827 = vunpack.c.l.s4 1983009808
        %v1828 = vunpack.c.0.s8 %v1827
        %v1829 = vlaneseq
        %v1830 = vshrl.u32 %v1829, 7
        %v1831 = vsub.s32 %v1828, %v1830
        %v1832 = vrot.slane %v1822, %v1831
        %v1833 = vcombine.high %v1832, %v1832
        %s1835 = scalar_lea.vmem %s214, 206 [#allocation5]
        %1836 = vst [vmem:[%s1835] sm:$0x3] %v1833
        %v1837 = vpack.c.bf16 %v1008, %v1008
        %s1838 = scalar_lea.vmem %s214, 214 [#allocation5]
        %1839 = vst [vmem:[%s1838] sm:$0x3] %v1837
        %v1842 = vunpack.c.l.s4 1983009808
        %v1843 = vunpack.c.0.s8 %v1842
        %v1844 = vlaneseq
        %v1845 = vshrl.u32 %v1844, 7
        %v1846 = vsub.s32 %v1843, %v1845
        %v1847 = vrot.slane %v1837, %v1846
        %v1848 = vcombine.high %v1847, %v1847
        %s1850 = scalar_lea.vmem %s214, 222 [#allocation5]
        %1851 = vst [vmem:[%s1850] sm:$0x3] %v1848
        %v1852 = vpack.c.bf16 %v993, %v993
        %s1853 = scalar_lea.vmem %s214, 224 [#allocation5]
        %1854 = vst [vmem:[%s1853] sm:$0x3] %v1852
        %v1857 = vunpack.c.l.s4 1983009808
        %v1858 = vunpack.c.0.s8 %v1857
        %v1859 = vlaneseq
        %v1860 = vshrl.u32 %v1859, 7
        %v1861 = vsub.s32 %v1858, %v1860
        %v1862 = vrot.slane %v1852, %v1861
        %v1863 = vcombine.high %v1862, %v1862
        %s1865 = scalar_lea.vmem %s214, 232 [#allocation5]
        %1866 = vst [vmem:[%s1865] sm:$0x3] %v1863
        %v1867 = vpack.c.bf16 %v1009, %v1009
        %s1868 = scalar_lea.vmem %s214, 240 [#allocation5]
        %1869 = vst [vmem:[%s1868] sm:$0x3] %v1867
        %v1872 = vunpack.c.l.s4 1983009808
        %v1873 = vunpack.c.0.s8 %v1872
        %v1874 = vlaneseq
        %v1875 = vshrl.u32 %v1874, 7
        %v1876 = vsub.s32 %v1873, %v1875
        %v1877 = vrot.slane %v1867, %v1876
        %v1878 = vcombine.high %v1877, %v1877
        %s1880 = scalar_lea.vmem %s214, 248 [#allocation5]
        %1881 = vst [vmem:[%s1880] sm:$0x3] %v1878
        %v1882 = vpack.c.bf16 %v994, %v994
        %s1883 = scalar_lea.vmem %s214, 226 [#allocation5]
        %1884 = vst [vmem:[%s1883] sm:$0x3] %v1882
        %v1887 = vunpack.c.l.s4 1983009808
        %v1888 = vunpack.c.0.s8 %v1887
        %v1889 = vlaneseq
        %v1890 = vshrl.u32 %v1889, 7
        %v1891 = vsub.s32 %v1888, %v1890
        %v1892 = vrot.slane %v1882, %v1891
        %v1893 = vcombine.high %v1892, %v1892
        %s1895 = scalar_lea.vmem %s214, 234 [#allocation5]
        %1896 = vst [vmem:[%s1895] sm:$0x3] %v1893
        %v1897 = vpack.c.bf16 %v1010, %v1010
        %s1898 = scalar_lea.vmem %s214, 242 [#allocation5]
        %1899 = vst [vmem:[%s1898] sm:$0x3] %v1897
        %v1902 = vunpack.c.l.s4 1983009808
        %v1903 = vunpack.c.0.s8 %v1902
        %v1904 = vlaneseq
        %v1905 = vshrl.u32 %v1904, 7
        %v1906 = vsub.s32 %v1903, %v1905
        %v1907 = vrot.slane %v1897, %v1906
        %v1908 = vcombine.high %v1907, %v1907
        %s1910 = scalar_lea.vmem %s214, 250 [#allocation5]
        %1911 = vst [vmem:[%s1910] sm:$0x3] %v1908
        %v1912 = vpack.c.bf16 %v995, %v995
        %s1913 = scalar_lea.vmem %s214, 228 [#allocation5]
        %1914 = vst [vmem:[%s1913] sm:$0x3] %v1912
        %v1917 = vunpack.c.l.s4 1983009808
        %v1918 = vunpack.c.0.s8 %v1917
        %v1919 = vlaneseq
        %v1920 = vshrl.u32 %v1919, 7
        %v1921 = vsub.s32 %v1918, %v1920
        %v1922 = vrot.slane %v1912, %v1921
        %v1923 = vcombine.high %v1922, %v1922
        %s1925 = scalar_lea.vmem %s214, 236 [#allocation5]
        %1926 = vst [vmem:[%s1925] sm:$0x3] %v1923
        %v1927 = vpack.c.bf16 %v1011, %v1011
        %s1928 = scalar_lea.vmem %s214, 244 [#allocation5]
        %1929 = vst [vmem:[%s1928] sm:$0x3] %v1927
        %v1932 = vunpack.c.l.s4 1983009808
        %v1933 = vunpack.c.0.s8 %v1932
        %v1934 = vlaneseq
        %v1935 = vshrl.u32 %v1934, 7
        %v1936 = vsub.s32 %v1933, %v1935
        %v1937 = vrot.slane %v1927, %v1936
        %v1938 = vcombine.high %v1937, %v1937
        %s1940 = scalar_lea.vmem %s214, 252 [#allocation5]
        %1941 = vst [vmem:[%s1940] sm:$0x3] %v1938
        %v1942 = vpack.c.bf16 %v996, %v996
        %s1943 = scalar_lea.vmem %s214, 230 [#allocation5]
        %1944 = vst [vmem:[%s1943] sm:$0x3] %v1942
        %v1947 = vunpack.c.l.s4 1983009808
        %v1948 = vunpack.c.0.s8 %v1947
        %v1949 = vlaneseq
        %v1950 = vshrl.u32 %v1949, 7
        %v1951 = vsub.s32 %v1948, %v1950
        %v1952 = vrot.slane %v1942, %v1951
        %v1953 = vcombine.high %v1952, %v1952
        %s1955 = scalar_lea.vmem %s214, 238 [#allocation5]
        %1956 = vst [vmem:[%s1955] sm:$0x3] %v1953
        %v1957 = vpack.c.bf16 %v1012, %v1012
        %s1958 = scalar_lea.vmem %s214, 246 [#allocation5]
        %1959 = vst [vmem:[%s1958] sm:$0x3] %v1957
        %v1962 = vunpack.c.l.s4 1983009808
        %v1963 = vunpack.c.0.s8 %v1962
        %v1964 = vlaneseq
        %v1965 = vshrl.u32 %v1964, 7
        %v1966 = vsub.s32 %v1963, %v1965
        %v1967 = vrot.slane %v1957, %v1966
        %v1968 = vcombine.high %v1967, %v1967
        %s1970 = scalar_lea.vmem %s214, 254 [#allocation5]
        %1971 = vst [vmem:[%s1970] sm:$0x3] %v1968
        %s1972 = sand.u32 %s118, 1
        %s1973 = scalar_lea.sflag [#allocation4], %s1972
        %s1974 = sand.u32 %s118, 1
        %s1975 = smul.addr %s1974, 256
        %s1976 = scalar_lea.vmem [#allocation5], %s1975
        // Predicated region
        $region37: #{tpu_custom_call.1} parent=31 // pred_check
          %p1977 = pneg %p128
        $region38: #{tpu_custom_call.1} parent=31 // pred_check_branch
          %1979 = sbr.rel (%p1977) target = $region40
        $region39: #{tpu_custom_call.1} parent=31 // pred_region
          %s1980 = smul.u32 2, %s23
          %s1981 = smul.u32 4, %s22
          %s1983 = ssub.s32 4096, 4096
          %1984 = vsyncadd %s1973, %s1983
          %s1985 = smul.addr %s1981, 16
          %s1986 = smul.addr %s1980, 64
          %s1987 = sadd.s32 %s1985, %s1986
          %s1988 = smul.addr %s1987, 32
          %s1989 = scalar_lea.hbm %s3, %s1988
          %s1990 = sshll.u32 %s1976, 4
          %s1991 = int_to_ptr.vmem [resolvable:$true] %s1990
          %1996 = dma.vmem_to_hbm [thread:$0]  %s1991, 4096, %s1989, %s1973, 32, 32, 2
        $region40: #{tpu_custom_call.1} parent=31 // pred_fallthru
          _
      $region32: #{tpu_custom_call.1} parent=5 // pred_fallthru
        _
      %p1997 = scmp.le.s32.totalorder 2, %s13
      // Predicated region
      $region41: #{tpu_custom_call.1} parent=5 // pred_check
        %p1998 = pneg %p1997
      $region42: #{tpu_custom_call.1} parent=5 // pred_check_branch
        %2000 = sbr.rel (%p1998) target = $region44
      $region43: #{tpu_custom_call.1} parent=5 // pred_region
        %s2001 = ssub.s32 %s13, 2
        // Predicated region
        $region45: #{tpu_custom_call.1} parent=43 // pred_check
          %p2002 = pneg %p134
        $region46: #{tpu_custom_call.1} parent=43 // pred_check_branch
          %2004 = sbr.rel (%p2002) target = $region48
        $region47: #{tpu_custom_call.1} parent=43 // pred_region
          %s2005 = sand.u32 %s119, 1
          %s2006 = scalar_lea.sflag [#allocation4], %s2005
          %s2007 = sand.u32 %s119, 1
          %s2008 = smul.addr %s2007, 256
          %s2009 = scalar_lea.vmem [#allocation5], %s2008
          %2010 = dma.done %s2006, 4096
        $region48: #{tpu_custom_call.1} parent=43 // pred_fallthru
          _
      $region44: #{tpu_custom_call.1} parent=5 // pred_fallthru
        _
    $region6: #{tpu_custom_call.1} parent=1 // loop_footer
      %s17 = sadd.s32 1, %s13
    $region7: #{tpu_custom_call.1} parent=1 // loop_footer_branch
      %12 = sbr.rel target = $region3
    $region8: #{tpu_custom_call.1} parent=1 // loop_exit
      _
    %2011 = vsyncpa [#allocation3], 1
    %s2012 = scalar_lea.sflag [#allocation3], 1
    %2013 = vsyncpa %s2012, 1
    %2014 = vsyncpa [#allocation4], 1
    %s2015 = scalar_lea.sflag [#allocation4], 1
    %2016 = vsyncpa %s2015, 1

</llo_original>
